<compile_context>
chip_gen: v7x
topology: tpu7x:2x2x1
jax: 0.10.0
libtpu: 0.0.40
codegen_flags: <defaults>
</compile_context>

<pallas_src>
import functools

import jax
import jax.numpy as jnp
from jax import lax
from jax.experimental import pallas as pl
from jax.experimental.pallas import tpu as pltpu

F32 = jnp.float32
BF16 = jnp.bfloat16

_VMEM_OUT = pl.BlockSpec(memory_space=pltpu.MemorySpace.VMEM)


def _vmem_specs(n):
    return [pl.BlockSpec(memory_space=pltpu.MemorySpace.VMEM) for _ in range(n)]


# --------------------------------------------------------------------------
# In-kernel helpers
# --------------------------------------------------------------------------
def _elu(y):
    # F.elu(alpha=1); exp(min(y,0)) keeps the EUP input bounded.
    return jnp.where(y > 0.0, y, jnp.exp(jnp.minimum(y, 0.0)) - 1.0)


def _semantic_attention(embeds, w_ref, b_ref, v_ref):
    """HeCo semantic (inter metapath / type) attention over a list of (N, D)."""
    n = embeds[0].shape[0]
    k = len(embeds)
    # Batch the tanh-linear of every view into one (k*N, D) matmul (bf16 MXU).
    stacked = jnp.concatenate(embeds, axis=0).astype(BF16)  # sublane concat
    sp = jnp.tanh(jnp.dot(stacked, w_ref[...], preferred_element_type=F32)
                  + b_ref[...])
    att = v_ref[...]                                              # (1, D) f32
    scores = []
    for i in range(k):
        sp_mean = jnp.sum(sp[i * n:(i + 1) * n, :], axis=0, keepdims=True) * (1.0 / n)
        scores.append(jnp.sum(sp_mean * att, axis=1, keepdims=True))  # (1, 1)
    m = scores[0]
    for s in scores[1:]:
        m = jnp.maximum(m, s)
    exps = [jnp.exp(s - m) for s in scores]
    den = exps[0]
    for e in exps[1:]:
        den = den + e
    # Exact softmax (k is tiny); avoids approx-reciprocal bias.
    z = (exps[0] / den) * embeds[0]
    for i in range(1, k):
        z = z + (exps[i] / den) * embeds[i]
    return z


# --------------------------------------------------------------------------
# Kernel 1: fc projections + Mp encoder + Sc encoder  ->  (N, 2D) slab
# --------------------------------------------------------------------------
def _encoder_kernel(nt, *args):
    idx = 0
    feat_refs = args[idx:idx + nt]; idx += nt        # bf16
    fcw_refs = args[idx:idx + nt]; idx += nt         # bf16
    fcb_ref = args[idx]; idx += 1                    # (nt, D) f32
    mps_ref = args[idx]; idx += 1                    # (P, N0, N0) bf16
    gcnw_ref = args[idx]; idx += 1                   # (P, D, D) bf16
    gcnb_ref = args[idx]; idx += 1                   # (P, D) f32
    mp_w_ref, mp_b_ref, mp_v_ref = args[idx:idx + 3]; idx += 3
    agg_refs = args[idx:idx + nt - 1]; idx += nt - 1  # (N0, N_r) bf16 mean-agg
    sc_w_ref, sc_b_ref, sc_v_ref = args[idx:idx + 3]; idx += 3
    o_ref = args[idx]                                # (N0, 2D) f32

    P = mps_ref.shape[0]

    # fc_list projection + ELU (feat_drop == 0 -> identity).  bf16 MXU inputs,
    # f32 accumulation / elementwise math.
    h = []
    for t in range(nt):
        y = jnp.dot(feat_refs[t][...], fcw_refs[t][...],
                    preferred_element_type=F32) + fcb_ref[t:t + 1, :]
        h.append(_elu(y))
    h0_bf = h[0].astype(BF16)

    # --- metapath (mp) branch: P GCNs, per-metapath weights (no lane slices) --
    mp_embeds = []
    for p in range(P):
        hw = jnp.dot(h0_bf, gcnw_ref[p], preferred_element_type=F32)      # (N0, D)
        yp = (jnp.dot(mps_ref[p], hw.astype(BF16), preferred_element_type=F32)
              + gcnb_ref[p:p + 1, :])
        mp_embeds.append(jnp.where(yp > 0.0, yp, 0.25 * yp))              # PReLU(0.25)

    # --- structure (sc) branch ----------------------------------------------
    # TODO(synk): Sc_encoder intra-type GAT attention source not provided;
    # sampled-neighbour mean aggregation (dense bf16 matmul) is used instead.
    sc_embeds = [jnp.dot(agg_refs[r][...], h[r + 1].astype(BF16),
                         preferred_element_type=F32)
                 for r in range(nt - 1)]

    z_mp = _semantic_attention(mp_embeds, mp_w_ref, mp_b_ref, mp_v_ref)
    z_sc = _semantic_attention(sc_embeds, sc_w_ref, sc_b_ref, sc_v_ref)

    # Lane-dense (N0, 2*D) output slab: [ z_mp | z_sc ].
    o_ref[...] = jnp.concatenate([z_mp, z_sc], axis=1)


# --------------------------------------------------------------------------
# Kernel 2: projection MLP (block-diag on the slab) + HeCo contrastive loss
# --------------------------------------------------------------------------
def _proj_contrast_kernel(tau, lam, z_ref, w1_ref, b1_ref, w2_ref, b2_ref,
                          pos_ref, post_ref, o_ref):
    twoD = w1_ref.shape[0]
    D = twoD // 2
    n = z_ref.shape[0]
    inv_n = 1.0 / n
    inv_tau = 1.0 / tau

    # Shared projection MLP applied to BOTH halves of the lane-dense slab at
    # once via block-diagonal (2D, 2D) weights -> one 128-wide MXU op per layer,
    # no 64-lane slices, no axis-0 concatenate.
    z_bf = z_ref[...].astype(BF16)                                   # (N, 2D)
    h1 = _elu(jnp.dot(z_bf, w1_ref[...], preferred_element_type=F32) + b1_ref[...])
    zp = jnp.dot(h1.astype(BF16), w2_ref[...], preferred_element_type=F32) + b2_ref[...]

    # Split only at the final normalised dot.
    zp_mp = zp[:, 0:D]
    zp_sc = zp[:, D:twoD]

    # Cosine similarity exp(<z1,z2>/(|z1||z2| tau)) via row pre-normalisation
    # (rsqrt on the EUP, with epsilon); bf16 MXU inputs for the (N, N) matmul.
    inv_mp = lax.rsqrt(jnp.sum(zp_mp * zp_mp, axis=1, keepdims=True) + 1e-12)
    inv_sc = lax.rsqrt(jnp.sum(zp_sc * zp_sc, axis=1, keepdims=True) + 1e-12)
    a = (zp_mp * inv_mp).astype(BF16)
    b = (zp_sc * inv_sc).astype(BF16)
    dot = lax.dot_general(a, b, (((1,), (1,)), ((), ())),
                          preferred_element_type=F32)                # (N, N)
    sim = jnp.exp(dot * inv_tau)                                     # f32, EUP

    pos_f = pos_ref[...].astype(F32)                                 # 0/1 mask

    # mp -> sc : row reductions (lane reduce on the XLU), exact log-diff loss.
    num_mp = jnp.sum(sim * pos_f, axis=1, keepdims=True)             # (N, 1)
    den_mp = jnp.sum(sim, axis=1, keepdims=True)
    lori_mp = -(jnp.sum(jnp.log(num_mp + 1e-8))
                - jnp.sum(jnp.log(den_mp + 1e-8))) * inv_n

    # sc -> mp : column reductions of sim (== normalising sim.T), offloaded to
    # the MXU as ones(1,N) @ sim so the XLU is not the bottleneck at scale.
    sim_bf = sim.astype(BF16)
    ones_row = jnp.ones((1, n), dtype=BF16)
    num_sc = jnp.dot(ones_row, sim_bf * post_ref[...],
                     preferred_element_type=F32)                     # (1, N)
    den_sc = jnp.dot(ones_row, sim_bf, preferred_element_type=F32)   # (1, N)
    lori_sc = -(jnp.sum(jnp.log(num_sc + 1e-8))
                - jnp.sum(jnp.log(den_sc + 1e-8))) * inv_n

    o_ref[...] = (lam * lori_mp + (1.0 - lam) * lori_sc).reshape(1, 1)


# --------------------------------------------------------------------------
# HeCo forward (2 pallas_call launches, thin glue only)
# --------------------------------------------------------------------------
def heco_forward(params, feats, pos, mps, nei_index, *, tau, lam):
    nt = len(feats)
    n0 = feats[0].shape[0]
    D = params["mp_att_w"].shape[0]

    mps_s = jnp.stack(mps, axis=0).astype(BF16)          # (P, N0, N0) bf16
    pos_bf = pos.astype(BF16)                            # 0/1 masks in bf16
    post_bf = jnp.transpose(pos).astype(BF16)
    feats_bf = [f.astype(BF16) for f in feats]

    # Dense sampled-neighbour mean aggregation matrices (bf16).
    # TODO(synk): replace by a scalar-prefetch-driven gather at real scale.
    aggs = [jnp.mean(jax.nn.one_hot(idx, feats[r + 1].shape[0], dtype=F32),
                     axis=1).astype(BF16)
            for r, idx in enumerate(nei_index)]

    enc_inputs = (feats_bf + list(params["fc_w"]) +
                  [params["fc_b"], mps_s, params["mp_gcn_w"], params["mp_gcn_b"],
                   params["mp_att_w"], params["mp_att_b"], params["mp_att_vec"]] +
                  aggs +
                  [params["sc_att_w"], params["sc_att_b"], params["sc_att_vec"]])

    # Raise the scoped-VMEM cap (v5e default is 16 MiB); 48 MiB still fits
    # under v7x's 64 MiB physical VMEM.
    cparams = pltpu.CompilerParams(vmem_limit_bytes=48 * 1024 * 1024)

    z_slab = pl.pallas_call(
        functools.partial(_encoder_kernel, nt),
        out_shape=jax.ShapeDtypeStruct((n0, 2 * D), F32),
        in_specs=_vmem_specs(len(enc_inputs)),
        out_specs=_VMEM_OUT,
        compiler_params=cparams,
    )(*enc_inputs)

    loss = pl.pallas_call(
        functools.partial(_proj_contrast_kernel, float(tau), float(lam)),
        out_shape=jax.ShapeDtypeStruct((1, 1), F32),
        in_specs=_vmem_specs(7),
        out_specs=_VMEM_OUT,
        compiler_params=cparams,
    )(z_slab, params["proj_w1_bd"], params["proj_b1_bd"],
      params["proj_w2_bd"], params["proj_b2_bd"], pos_bf, post_bf)
    return loss[0, 0]


# --------------------------------------------------------------------------
# Deterministic parameter / input construction (kernel-ready layouts & dtypes)
# --------------------------------------------------------------------------
def xavier_normal(key, shape, gain=1.414):
    fan_in, fan_out = shape[0], shape[1]
    std = gain * (2.0 / (fan_in + fan_out)) ** 0.5
    return (std * jax.random.normal(key, shape)).astype(F32)


def make_params(key, hidden_dim, feats_dim_list, P):
    keys = iter(jax.random.split(key, 16))
    D = hidden_dim
    fc_w = [xavier_normal(next(keys), (d, D)) for d in feats_dim_list]
    gcn_w = jnp.stack([xavier_normal(next(keys), (D, D)) for _ in range(P)], axis=0)
    proj_w1 = xavier_normal(next(keys), (D, D))
    proj_w2 = xavier_normal(next(keys), (D, D))
    zero_dd = jnp.zeros((D, D), F32)
    return {
        # bf16 matmul weights (MXU inputs), f32 biases (accumulation adds).
        "fc_w": [w.astype(BF16) for w in fc_w],
        "fc_b": jnp.zeros((len(feats_dim_list), D), F32),
        "mp_gcn_w": gcn_w.astype(BF16),                 # (P, D, D), per-metapath
        "mp_gcn_b": jnp.zeros((P, D), F32),
        "mp_att_w": xavier_normal(next(keys), (D, D)).astype(BF16),
        "mp_att_b": jnp.zeros((1, D), F32),
        "mp_att_vec": xavier_normal(next(keys), (1, D)),
        "sc_att_w": xavier_normal(next(keys), (D, D)).astype(BF16),
        "sc_att_b": jnp.zeros((1, D), F32),
        "sc_att_vec": xavier_normal(next(keys), (1, D)),
        # Shared projection MLP stored block-diagonally so kernel 2 operates on
        # the lane-dense (N, 2D) slab without 64-lane slices.
        "proj_w1_bd": jnp.block([[proj_w1, zero_dd],
                                 [zero_dd, proj_w1]]).astype(BF16),
        "proj_b1_bd": jnp.zeros((1, 2 * D), F32),
        "proj_w2_bd": jnp.block([[proj_w2, zero_dd],
                                 [zero_dd, proj_w2]]).astype(BF16),
        "proj_b2_bd": jnp.zeros((1, 2 * D), F32),
    }


def make_adj(key, n, density=0.1):
    a = (jax.random.uniform(key, (n, n)) < density).astype(F32)
    a = jnp.minimum(a + jnp.eye(n, dtype=F32), 1.0)
    return a / jnp.sum(a, axis=1, keepdims=True)        # row-normalized


if __name__ == "__main__":
    hidden_dim = 64                     # 2*hidden_dim == 128 -> lane-dense slab
    feats_dim_list = [48, 40, 24]       # 3 node types
    P = 2                               # number of metapaths
    sample_rate = [3, 2]
    tau, lam = 0.8, 0.5
    N0, N1, N2 = 64, 32, 16             # nodes per type (target type = N0)

    root = jax.random.PRNGKey(0)
    (k_param, k_f0, k_f1, k_f2, k_m0, k_m1,
     k_pos, k_n0, k_n1) = jax.random.split(root, 9)

    params = make_params(k_param, hidden_dim, feats_dim_list, P)
    feats = [
        jax.random.normal(k_f0, (N0, feats_dim_list[0]), dtype=F32),
        jax.random.normal(k_f1, (N1, feats_dim_list[1]), dtype=F32),
        jax.random.normal(k_f2, (N2, feats_dim_list[2]), dtype=F32),
    ]
    mps = [make_adj(k_m0, N0, 0.10), make_adj(k_m1, N0, 0.15)]
    pos = jnp.minimum(
        (jax.random.uniform(k_pos, (N0, N0)) < 0.05).astype(F32)
        + jnp.eye(N0, dtype=F32), 1.0)
    nei_index = [
        jax.random.randint(k_n0, (N0, sample_rate[0]), 0, N1, dtype=jnp.int32),
        jax.random.randint(k_n1, (N0, sample_rate[1]), 0, N2, dtype=jnp.int32),
    ]

    fwd = jax.jit(heco_forward, static_argnames=("tau", "lam"))
    loss = fwd(params, feats, pos, mps, nei_index, tau=tau, lam=lam)
    jax.block_until_ready(loss)
    assert bool(jnp.isfinite(loss))
    print("KERNEL_OK")
</pallas_src>

<mosaic_0001>
module attributes {stable_mosaic.version = 11 : i64} {
  func.func @_encoder_kernel(%arg0: memref<64x48xbf16, #tpu.memory_space<vmem>>, %arg1: memref<32x40xbf16, #tpu.memory_space<vmem>>, %arg2: memref<16x24xbf16, #tpu.memory_space<vmem>>, %arg3: memref<48x64xbf16, #tpu.memory_space<vmem>>, %arg4: memref<40x64xbf16, #tpu.memory_space<vmem>>, %arg5: memref<24x64xbf16, #tpu.memory_space<vmem>>, %arg6: memref<3x64xf32, #tpu.memory_space<vmem>>, %arg7: memref<2x64x64xbf16, #tpu.memory_space<vmem>>, %arg8: memref<2x64x64xbf16, #tpu.memory_space<vmem>>, %arg9: memref<2x64xf32, #tpu.memory_space<vmem>>, %arg10: memref<64x64xbf16, #tpu.memory_space<vmem>>, %arg11: memref<1x64xf32, #tpu.memory_space<vmem>>, %arg12: memref<1x64xf32, #tpu.memory_space<vmem>>, %arg13: memref<64x32xbf16, #tpu.memory_space<vmem>>, %arg14: memref<64x16xbf16, #tpu.memory_space<vmem>>, %arg15: memref<64x64xbf16, #tpu.memory_space<vmem>>, %arg16: memref<1x64xf32, #tpu.memory_space<vmem>>, %arg17: memref<1x64xf32, #tpu.memory_space<vmem>>, %arg18: memref<64x128xf32, #tpu.memory_space<vmem>>) attributes {dimension_semantics = [], scalar_prefetch = 0 : i64, scratch_operands = 0 : i64, tpu.core_type = #tpu.core_type<tc>} {
    %c0 = arith.constant 0 : index
    %c0_0 = arith.constant 0 : index
    %0 = vector.load %arg0[%c0, %c0_0] : memref<64x48xbf16, #tpu.memory_space<vmem>>, vector<64x48xbf16>
    %c0_1 = arith.constant 0 : index
    %c0_2 = arith.constant 0 : index
    %1 = vector.load %arg3[%c0_1, %c0_2] : memref<48x64xbf16, #tpu.memory_space<vmem>>, vector<48x64xbf16>
    %cst = arith.constant dense<0.000000e+00> : vector<64x64xf32>
    %2 = tpu.matmul %0, %1, %cst {dimension_numbers = #tpu.dot_dimension_numbers<[1], [0], [0], [1], [0, 0, 1, 1], [], []>} : vector<64x48xbf16>, vector<48x64xbf16>, vector<64x64xf32> -> vector<64x64xf32>
    %c0_3 = arith.constant 0 : index
    %c0_4 = arith.constant 0 : index
    %3 = vector.load %arg6[%c0_3, %c0_4] : memref<3x64xf32, #tpu.memory_space<vmem>>, vector<1x64xf32>
    %4 = vector.broadcast %3 : vector<1x64xf32> to vector<64x64xf32>
    %5 = arith.addf %2, %4 : vector<64x64xf32>
    %cst_5 = arith.constant 0.000000e+00 : f32
    %6 = vector.broadcast %cst_5 : f32 to vector<64x64xf32>
    %7 = arith.cmpf ogt, %5, %6 : vector<64x64xf32>
    %cst_6 = arith.constant 0.000000e+00 : f32
    %8 = vector.broadcast %cst_6 : f32 to vector<64x64xf32>
    %9 = arith.minimumf %5, %8 : vector<64x64xf32>
    %10 = math.exp %9 : vector<64x64xf32>
    %cst_7 = arith.constant 1.000000e+00 : f32
    %11 = vector.broadcast %cst_7 : f32 to vector<64x64xf32>
    %12 = arith.subf %10, %11 : vector<64x64xf32>
    %13 = arith.select %7, %5, %12 : vector<64x64xi1>, vector<64x64xf32>
    %c0_8 = arith.constant 0 : index
    %c0_9 = arith.constant 0 : index
    %14 = vector.load %arg1[%c0_8, %c0_9] : memref<32x40xbf16, #tpu.memory_space<vmem>>, vector<32x40xbf16>
    %c0_10 = arith.constant 0 : index
    %c0_11 = arith.constant 0 : index
    %15 = vector.load %arg4[%c0_10, %c0_11] : memref<40x64xbf16, #tpu.memory_space<vmem>>, vector<40x64xbf16>
    %cst_12 = arith.constant dense<0.000000e+00> : vector<32x64xf32>
    %16 = tpu.matmul %14, %15, %cst_12 {dimension_numbers = #tpu.dot_dimension_numbers<[1], [0], [0], [1], [0, 0, 1, 1], [], []>} : vector<32x40xbf16>, vector<40x64xbf16>, vector<32x64xf32> -> vector<32x64xf32>
    %c1 = arith.constant 1 : index
    %c0_13 = arith.constant 0 : index
    %17 = vector.load %arg6[%c1, %c0_13] : memref<3x64xf32, #tpu.memory_space<vmem>>, vector<1x64xf32>
    %18 = vector.broadcast %17 : vector<1x64xf32> to vector<32x64xf32>
    %19 = arith.addf %16, %18 : vector<32x64xf32>
    %cst_14 = arith.constant 0.000000e+00 : f32
    %20 = vector.broadcast %cst_14 : f32 to vector<32x64xf32>
    %21 = arith.cmpf ogt, %19, %20 : vector<32x64xf32>
    %cst_15 = arith.constant 0.000000e+00 : f32
    %22 = vector.broadcast %cst_15 : f32 to vector<32x64xf32>
    %23 = arith.minimumf %19, %22 : vector<32x64xf32>
    %24 = math.exp %23 : vector<32x64xf32>
    %cst_16 = arith.constant 1.000000e+00 : f32
    %25 = vector.broadcast %cst_16 : f32 to vector<32x64xf32>
    %26 = arith.subf %24, %25 : vector<32x64xf32>
    %27 = arith.select %21, %19, %26 : vector<32x64xi1>, vector<32x64xf32>
    %c0_17 = arith.constant 0 : index
    %c0_18 = arith.constant 0 : index
    %28 = vector.load %arg2[%c0_17, %c0_18] : memref<16x24xbf16, #tpu.memory_space<vmem>>, vector<16x24xbf16>
    %c0_19 = arith.constant 0 : index
    %c0_20 = arith.constant 0 : index
    %29 = vector.load %arg5[%c0_19, %c0_20] : memref<24x64xbf16, #tpu.memory_space<vmem>>, vector<24x64xbf16>
    %cst_21 = arith.constant dense<0.000000e+00> : vector<16x64xf32>
    %30 = tpu.matmul %28, %29, %cst_21 {dimension_numbers = #tpu.dot_dimension_numbers<[1], [0], [0], [1], [0, 0, 1, 1], [], []>} : vector<16x24xbf16>, vector<24x64xbf16>, vector<16x64xf32> -> vector<16x64xf32>
    %c2 = arith.constant 2 : index
    %c0_22 = arith.constant 0 : index
    %31 = vector.load %arg6[%c2, %c0_22] : memref<3x64xf32, #tpu.memory_space<vmem>>, vector<1x64xf32>
    %32 = vector.broadcast %31 : vector<1x64xf32> to vector<16x64xf32>
    %33 = arith.addf %30, %32 : vector<16x64xf32>
    %cst_23 = arith.constant 0.000000e+00 : f32
    %34 = vector.broadcast %cst_23 : f32 to vector<16x64xf32>
    %35 = arith.cmpf ogt, %33, %34 : vector<16x64xf32>
    %cst_24 = arith.constant 0.000000e+00 : f32
    %36 = vector.broadcast %cst_24 : f32 to vector<16x64xf32>
    %37 = arith.minimumf %33, %36 : vector<16x64xf32>
    %38 = math.exp %37 : vector<16x64xf32>
    %cst_25 = arith.constant 1.000000e+00 : f32
    %39 = vector.broadcast %cst_25 : f32 to vector<16x64xf32>
    %40 = arith.subf %38, %39 : vector<16x64xf32>
    %41 = arith.select %35, %33, %40 : vector<16x64xi1>, vector<16x64xf32>
    %42 = arith.truncf %13 : vector<64x64xf32> to vector<64x64xbf16>
    %c0_26 = arith.constant 0 : index
    %c0_27 = arith.constant 0 : index
    %c0_28 = arith.constant 0 : index
    %43 = vector.load %arg8[%c0_26, %c0_27, %c0_28] : memref<2x64x64xbf16, #tpu.memory_space<vmem>>, vector<1x64x64xbf16>
    %44 = vector.shape_cast %43 : vector<1x64x64xbf16> to vector<64x64xbf16>
    %cst_29 = arith.constant dense<0.000000e+00> : vector<64x64xf32>
    %45 = tpu.matmul %42, %44, %cst_29 {dimension_numbers = #tpu.dot_dimension_numbers<[1], [0], [0], [1], [0, 0, 1, 1], [], []>} : vector<64x64xbf16>, vector<64x64xbf16>, vector<64x64xf32> -> vector<64x64xf32>
    %c0_30 = arith.constant 0 : index
    %c0_31 = arith.constant 0 : index
    %c0_32 = arith.constant 0 : index
    %46 = vector.load %arg7[%c0_30, %c0_31, %c0_32] : memref<2x64x64xbf16, #tpu.memory_space<vmem>>, vector<1x64x64xbf16>
    %47 = vector.shape_cast %46 : vector<1x64x64xbf16> to vector<64x64xbf16>
    %48 = arith.truncf %45 : vector<64x64xf32> to vector<64x64xbf16>
    %cst_33 = arith.constant dense<0.000000e+00> : vector<64x64xf32>
    %49 = tpu.matmul %47, %48, %cst_33 {dimension_numbers = #tpu.dot_dimension_numbers<[1], [0], [0], [1], [0, 0, 1, 1], [], []>} : vector<64x64xbf16>, vector<64x64xbf16>, vector<64x64xf32> -> vector<64x64xf32>
    %c0_34 = arith.constant 0 : index
    %c0_35 = arith.constant 0 : index
    %50 = vector.load %arg9[%c0_34, %c0_35] : memref<2x64xf32, #tpu.memory_space<vmem>>, vector<1x64xf32>
    %51 = vector.broadcast %50 : vector<1x64xf32> to vector<64x64xf32>
    %52 = arith.addf %49, %51 : vector<64x64xf32>
    %cst_36 = arith.constant 0.000000e+00 : f32
    %53 = vector.broadcast %cst_36 : f32 to vector<64x64xf32>
    %54 = arith.cmpf ogt, %52, %53 : vector<64x64xf32>
    %cst_37 = arith.constant 2.500000e-01 : f32
    %55 = vector.broadcast %cst_37 : f32 to vector<64x64xf32>
    %56 = arith.mulf %55, %52 : vector<64x64xf32>
    %57 = arith.select %54, %52, %56 : vector<64x64xi1>, vector<64x64xf32>
    %c1_38 = arith.constant 1 : index
    %c0_39 = arith.constant 0 : index
    %c0_40 = arith.constant 0 : index
    %58 = vector.load %arg8[%c1_38, %c0_39, %c0_40] : memref<2x64x64xbf16, #tpu.memory_space<vmem>>, vector<1x64x64xbf16>
    %59 = vector.shape_cast %58 : vector<1x64x64xbf16> to vector<64x64xbf16>
    %cst_41 = arith.constant dense<0.000000e+00> : vector<64x64xf32>
    %60 = tpu.matmul %42, %59, %cst_41 {dimension_numbers = #tpu.dot_dimension_numbers<[1], [0], [0], [1], [0, 0, 1, 1], [], []>} : vector<64x64xbf16>, vector<64x64xbf16>, vector<64x64xf32> -> vector<64x64xf32>
    %c1_42 = arith.constant 1 : index
    %c0_43 = arith.constant 0 : index
    %c0_44 = arith.constant 0 : index
    %61 = vector.load %arg7[%c1_42, %c0_43, %c0_44] : memref<2x64x64xbf16, #tpu.memory_space<vmem>>, vector<1x64x64xbf16>
    %62 = vector.shape_cast %61 : vector<1x64x64xbf16> to vector<64x64xbf16>
    %63 = arith.truncf %60 : vector<64x64xf32> to vector<64x64xbf16>
    %cst_45 = arith.constant dense<0.000000e+00> : vector<64x64xf32>
    %64 = tpu.matmul %62, %63, %cst_45 {dimension_numbers = #tpu.dot_dimension_numbers<[1], [0], [0], [1], [0, 0, 1, 1], [], []>} : vector<64x64xbf16>, vector<64x64xbf16>, vector<64x64xf32> -> vector<64x64xf32>
    %c1_46 = arith.constant 1 : index
    %c0_47 = arith.constant 0 : index
    %65 = vector.load %arg9[%c1_46, %c0_47] : memref<2x64xf32, #tpu.memory_space<vmem>>, vector<1x64xf32>
    %66 = vector.broadcast %65 : vector<1x64xf32> to vector<64x64xf32>
    %67 = arith.addf %64, %66 : vector<64x64xf32>
    %cst_48 = arith.constant 0.000000e+00 : f32
    %68 = vector.broadcast %cst_48 : f32 to vector<64x64xf32>
    %69 = arith.cmpf ogt, %67, %68 : vector<64x64xf32>
    %cst_49 = arith.constant 2.500000e-01 : f32
    %70 = vector.broadcast %cst_49 : f32 to vector<64x64xf32>
    %71 = arith.mulf %70, %67 : vector<64x64xf32>
    %72 = arith.select %69, %67, %71 : vector<64x64xi1>, vector<64x64xf32>
    %c0_50 = arith.constant 0 : index
    %c0_51 = arith.constant 0 : index
    %73 = vector.load %arg13[%c0_50, %c0_51] : memref<64x32xbf16, #tpu.memory_space<vmem>>, vector<64x32xbf16>
    %74 = arith.truncf %27 : vector<32x64xf32> to vector<32x64xbf16>
    %cst_52 = arith.constant dense<0.000000e+00> : vector<64x64xf32>
    %75 = tpu.matmul %73, %74, %cst_52 {dimension_numbers = #tpu.dot_dimension_numbers<[1], [0], [0], [1], [0, 0, 1, 1], [], []>} : vector<64x32xbf16>, vector<32x64xbf16>, vector<64x64xf32> -> vector<64x64xf32>
    %c0_53 = arith.constant 0 : index
    %c0_54 = arith.constant 0 : index
    %76 = vector.load %arg14[%c0_53, %c0_54] : memref<64x16xbf16, #tpu.memory_space<vmem>>, vector<64x16xbf16>
    %77 = arith.truncf %41 : vector<16x64xf32> to vector<16x64xbf16>
    %cst_55 = arith.constant dense<0.000000e+00> : vector<64x64xf32>
    %78 = tpu.matmul %76, %77, %cst_55 {dimension_numbers = #tpu.dot_dimension_numbers<[1], [0], [0], [1], [0, 0, 1, 1], [], []>} : vector<64x16xbf16>, vector<16x64xbf16>, vector<64x64xf32> -> vector<64x64xf32>
    %79 = tpu.concatenate %57, %72 in 0 : vector<64x64xf32>, vector<64x64xf32> -> vector<128x64xf32>
    %80 = arith.truncf %79 : vector<128x64xf32> to vector<128x64xbf16>
    %c0_56 = arith.constant 0 : index
    %c0_57 = arith.constant 0 : index
    %81 = vector.load %arg10[%c0_56, %c0_57] : memref<64x64xbf16, #tpu.memory_space<vmem>>, vector<64x64xbf16>
    %cst_58 = arith.constant dense<0.000000e+00> : vector<128x64xf32>
    %82 = tpu.matmul %80, %81, %cst_58 {dimension_numbers = #tpu.dot_dimension_numbers<[1], [0], [0], [1], [0, 0, 1, 1], [], []>} : vector<128x64xbf16>, vector<64x64xbf16>, vector<128x64xf32> -> vector<128x64xf32>
    %c0_59 = arith.constant 0 : index
    %c0_60 = arith.constant 0 : index
    %83 = vector.load %arg11[%c0_59, %c0_60] : memref<1x64xf32, #tpu.memory_space<vmem>>, vector<1x64xf32>
    %84 = vector.broadcast %83 : vector<1x64xf32> to vector<128x64xf32>
    %85 = arith.addf %82, %84 : vector<128x64xf32>
    %86 = math.tanh %85 : vector<128x64xf32>
    %c0_61 = arith.constant 0 : index
    %c0_62 = arith.constant 0 : index
    %87 = vector.load %arg12[%c0_61, %c0_62] : memref<1x64xf32, #tpu.memory_space<vmem>>, vector<1x64xf32>
    %88 = vector.extract_strided_slice %86 {offsets = [0, 0], sizes = [64, 64], strides = [1, 1]} : vector<128x64xf32> to vector<64x64xf32>
    %cst_63 = arith.constant dense<0.000000e+00> : vector<64xf32>
    %89 = vector.multi_reduction <add>, %88, %cst_63 [0] : vector<64x64xf32> to vector<64xf32>
    %90 = vector.shape_cast %89 : vector<64xf32> to vector<1x64xf32>
    %cst_64 = arith.constant 1.562500e-02 : f32
    %91 = vector.broadcast %cst_64 : f32 to vector<1x64xf32>
    %92 = arith.mulf %90, %91 : vector<1x64xf32>
    %93 = arith.mulf %92, %87 : vector<1x64xf32>
    %cst_65 = arith.constant dense<0.000000e+00> : vector<1xf32>
    %94 = vector.multi_reduction <add>, %93, %cst_65 [1] : vector<1x64xf32> to vector<1xf32>
    %95 = vector.shape_cast %94 : vector<1xf32> to vector<1x1xf32>
    %96 = vector.extract_strided_slice %86 {offsets = [64, 0], sizes = [64, 64], strides = [1, 1]} : vector<128x64xf32> to vector<64x64xf32>
    %cst_66 = arith.constant dense<0.000000e+00> : vector<64xf32>
    %97 = vector.multi_reduction <add>, %96, %cst_66 [0] : vector<64x64xf32> to vector<64xf32>
    %98 = vector.shape_cast %97 : vector<64xf32> to vector<1x64xf32>
    %cst_67 = arith.constant 1.562500e-02 : f32
    %99 = vector.broadcast %cst_67 : f32 to vector<1x64xf32>
    %100 = arith.mulf %98, %99 : vector<1x64xf32>
    %101 = arith.mulf %100, %87 : vector<1x64xf32>
    %cst_68 = arith.constant dense<0.000000e+00> : vector<1xf32>
    %102 = vector.multi_reduction <add>, %101, %cst_68 [1] : vector<1x64xf32> to vector<1xf32>
    %103 = vector.shape_cast %102 : vector<1xf32> to vector<1x1xf32>
    %104 = arith.maximumf %95, %103 : vector<1x1xf32>
    %105 = arith.subf %95, %104 : vector<1x1xf32>
    %106 = math.exp %105 : vector<1x1xf32>
    %107 = arith.subf %103, %104 : vector<1x1xf32>
    %108 = math.exp %107 : vector<1x1xf32>
    %109 = arith.addf %106, %108 : vector<1x1xf32>
    %110 = arith.divf %106, %109 : vector<1x1xf32>
    %111 = vector.broadcast %110 : vector<1x1xf32> to vector<64x64xf32>
    %112 = arith.mulf %111, %57 : vector<64x64xf32>
    %113 = arith.divf %108, %109 : vector<1x1xf32>
    %114 = vector.broadcast %113 : vector<1x1xf32> to vector<64x64xf32>
    %115 = arith.mulf %114, %72 : vector<64x64xf32>
    %116 = arith.addf %112, %115 : vector<64x64xf32>
    %117 = tpu.concatenate %75, %78 in 0 : vector<64x64xf32>, vector<64x64xf32> -> vector<128x64xf32>
    %118 = arith.truncf %117 : vector<128x64xf32> to vector<128x64xbf16>
    %c0_69 = arith.constant 0 : index
    %c0_70 = arith.constant 0 : index
    %119 = vector.load %arg15[%c0_69, %c0_70] : memref<64x64xbf16, #tpu.memory_space<vmem>>, vector<64x64xbf16>
    %cst_71 = arith.constant dense<0.000000e+00> : vector<128x64xf32>
    %120 = tpu.matmul %118, %119, %cst_71 {dimension_numbers = #tpu.dot_dimension_numbers<[1], [0], [0], [1], [0, 0, 1, 1], [], []>} : vector<128x64xbf16>, vector<64x64xbf16>, vector<128x64xf32> -> vector<128x64xf32>
    %c0_72 = arith.constant 0 : index
    %c0_73 = arith.constant 0 : index
    %121 = vector.load %arg16[%c0_72, %c0_73] : memref<1x64xf32, #tpu.memory_space<vmem>>, vector<1x64xf32>
    %122 = vector.broadcast %121 : vector<1x64xf32> to vector<128x64xf32>
    %123 = arith.addf %120, %122 : vector<128x64xf32>
    %124 = math.tanh %123 : vector<128x64xf32>
    %c0_74 = arith.constant 0 : index
    %c0_75 = arith.constant 0 : index
    %125 = vector.load %arg17[%c0_74, %c0_75] : memref<1x64xf32, #tpu.memory_space<vmem>>, vector<1x64xf32>
    %126 = vector.extract_strided_slice %124 {offsets = [0, 0], sizes = [64, 64], strides = [1, 1]} : vector<128x64xf32> to vector<64x64xf32>
    %cst_76 = arith.constant dense<0.000000e+00> : vector<64xf32>
    %127 = vector.multi_reduction <add>, %126, %cst_76 [0] : vector<64x64xf32> to vector<64xf32>
    %128 = vector.shape_cast %127 : vector<64xf32> to vector<1x64xf32>
    %cst_77 = arith.constant 1.562500e-02 : f32
    %129 = vector.broadcast %cst_77 : f32 to vector<1x64xf32>
    %130 = arith.mulf %128, %129 : vector<1x64xf32>
    %131 = arith.mulf %130, %125 : vector<1x64xf32>
    %cst_78 = arith.constant dense<0.000000e+00> : vector<1xf32>
    %132 = vector.multi_reduction <add>, %131, %cst_78 [1] : vector<1x64xf32> to vector<1xf32>
    %133 = vector.shape_cast %132 : vector<1xf32> to vector<1x1xf32>
    %134 = vector.extract_strided_slice %124 {offsets = [64, 0], sizes = [64, 64], strides = [1, 1]} : vector<128x64xf32> to vector<64x64xf32>
    %cst_79 = arith.constant dense<0.000000e+00> : vector<64xf32>
    %135 = vector.multi_reduction <add>, %134, %cst_79 [0] : vector<64x64xf32> to vector<64xf32>
    %136 = vector.shape_cast %135 : vector<64xf32> to vector<1x64xf32>
    %cst_80 = arith.constant 1.562500e-02 : f32
    %137 = vector.broadcast %cst_80 : f32 to vector<1x64xf32>
    %138 = arith.mulf %136, %137 : vector<1x64xf32>
    %139 = arith.mulf %138, %125 : vector<1x64xf32>
    %cst_81 = arith.constant dense<0.000000e+00> : vector<1xf32>
    %140 = vector.multi_reduction <add>, %139, %cst_81 [1] : vector<1x64xf32> to vector<1xf32>
    %141 = vector.shape_cast %140 : vector<1xf32> to vector<1x1xf32>
    %142 = arith.maximumf %133, %141 : vector<1x1xf32>
    %143 = arith.subf %133, %142 : vector<1x1xf32>
    %144 = math.exp %143 : vector<1x1xf32>
    %145 = arith.subf %141, %142 : vector<1x1xf32>
    %146 = math.exp %145 : vector<1x1xf32>
    %147 = arith.addf %144, %146 : vector<1x1xf32>
    %148 = arith.divf %144, %147 : vector<1x1xf32>
    %149 = vector.broadcast %148 : vector<1x1xf32> to vector<64x64xf32>
    %150 = arith.mulf %149, %75 : vector<64x64xf32>
    %151 = arith.divf %146, %147 : vector<1x1xf32>
    %152 = vector.broadcast %151 : vector<1x1xf32> to vector<64x64xf32>
    %153 = arith.mulf %152, %78 : vector<64x64xf32>
    %154 = arith.addf %150, %153 : vector<64x64xf32>
    %155 = tpu.concatenate %116, %154 in 1 : vector<64x64xf32>, vector<64x64xf32> -> vector<64x128xf32>
    %c0_82 = arith.constant 0 : index
    %c0_83 = arith.constant 0 : index
    %156 = vector.load %arg18[%c0_82, %c0_83] : memref<64x128xf32, #tpu.memory_space<vmem>>, vector<64x128xf32>
    tpu.vector_store %arg18[%c0_82, %c0_83], %155 {strides = array<i32>} : memref<64x128xf32, #tpu.memory_space<vmem>>, vector<64x128xf32>,
    return
  }
}

module attributes {stable_mosaic.version = 11 : i64} {
  func.func @_proj_contrast_kernel(%arg0: memref<64x128xf32, #tpu.memory_space<vmem>>, %arg1: memref<128x128xbf16, #tpu.memory_space<vmem>>, %arg2: memref<1x128xf32, #tpu.memory_space<vmem>>, %arg3: memref<128x128xbf16, #tpu.memory_space<vmem>>, %arg4: memref<1x128xf32, #tpu.memory_space<vmem>>, %arg5: memref<64x64xbf16, #tpu.memory_space<vmem>>, %arg6: memref<64x64xbf16, #tpu.memory_space<vmem>>, %arg7: memref<1x1xf32, #tpu.memory_space<vmem>>) attributes {dimension_semantics = [], scalar_prefetch = 0 : i64, scratch_operands = 0 : i64, tpu.core_type = #tpu.core_type<tc>} {
    %c0 = arith.constant 0 : index
    %c0_0 = arith.constant 0 : index
    %0 = vector.load %arg0[%c0, %c0_0] : memref<64x128xf32, #tpu.memory_space<vmem>>, vector<64x128xf32>
    %1 = arith.truncf %0 : vector<64x128xf32> to vector<64x128xbf16>
    %c0_1 = arith.constant 0 : index
    %c0_2 = arith.constant 0 : index
    %2 = vector.load %arg1[%c0_1, %c0_2] : memref<128x128xbf16, #tpu.memory_space<vmem>>, vector<128x128xbf16>
    %cst = arith.constant dense<0.000000e+00> : vector<64x128xf32>
    %3 = tpu.matmul %1, %2, %cst {dimension_numbers = #tpu.dot_dimension_numbers<[1], [0], [0], [1], [0, 0, 1, 1], [], []>} : vector<64x128xbf16>, vector<128x128xbf16>, vector<64x128xf32> -> vector<64x128xf32>
    %c0_3 = arith.constant 0 : index
    %c0_4 = arith.constant 0 : index
    %4 = vector.load %arg2[%c0_3, %c0_4] : memref<1x128xf32, #tpu.memory_space<vmem>>, vector<1x128xf32>
    %5 = vector.broadcast %4 : vector<1x128xf32> to vector<64x128xf32>
    %6 = arith.addf %3, %5 : vector<64x128xf32>
    %cst_5 = arith.constant 0.000000e+00 : f32
    %7 = vector.broadcast %cst_5 : f32 to vector<64x128xf32>
    %8 = arith.cmpf ogt, %6, %7 : vector<64x128xf32>
    %cst_6 = arith.constant 0.000000e+00 : f32
    %9 = vector.broadcast %cst_6 : f32 to vector<64x128xf32>
    %10 = arith.minimumf %6, %9 : vector<64x128xf32>
    %11 = math.exp %10 : vector<64x128xf32>
    %cst_7 = arith.constant 1.000000e+00 : f32
    %12 = vector.broadcast %cst_7 : f32 to vector<64x128xf32>
    %13 = arith.subf %11, %12 : vector<64x128xf32>
    %14 = arith.select %8, %6, %13 : vector<64x128xi1>, vector<64x128xf32>
    %15 = arith.truncf %14 : vector<64x128xf32> to vector<64x128xbf16>
    %c0_8 = arith.constant 0 : index
    %c0_9 = arith.constant 0 : index
    %16 = vector.load %arg3[%c0_8, %c0_9] : memref<128x128xbf16, #tpu.memory_space<vmem>>, vector<128x128xbf16>
    %cst_10 = arith.constant dense<0.000000e+00> : vector<64x128xf32>
    %17 = tpu.matmul %15, %16, %cst_10 {dimension_numbers = #tpu.dot_dimension_numbers<[1], [0], [0], [1], [0, 0, 1, 1], [], []>} : vector<64x128xbf16>, vector<128x128xbf16>, vector<64x128xf32> -> vector<64x128xf32>
    %c0_11 = arith.constant 0 : index
    %c0_12 = arith.constant 0 : index
    %18 = vector.load %arg4[%c0_11, %c0_12] : memref<1x128xf32, #tpu.memory_space<vmem>>, vector<1x128xf32>
    %19 = vector.broadcast %18 : vector<1x128xf32> to vector<64x128xf32>
    %20 = arith.addf %17, %19 : vector<64x128xf32>
    %21 = vector.extract_strided_slice %20 {offsets = [0, 0], sizes = [64, 64], strides = [1, 1]} : vector<64x128xf32> to vector<64x64xf32>
    %22 = vector.extract_strided_slice %20 {offsets = [0, 64], sizes = [64, 64], strides = [1, 1]} : vector<64x128xf32> to vector<64x64xf32>
    %23 = arith.mulf %21, %21 : vector<64x64xf32>
    %cst_13 = arith.constant dense<0.000000e+00> : vector<64xf32>
    %24 = vector.multi_reduction <add>, %23, %cst_13 [1] : vector<64x64xf32> to vector<64xf32>
    %25 = vector.shape_cast %24 : vector<64xf32> to vector<64x1xf32>
    %cst_14 = arith.constant 9.99999996E-13 : f32
    %26 = vector.broadcast %cst_14 : f32 to vector<64x1xf32>
    %27 = arith.addf %25, %26 : vector<64x1xf32>
    %28 = math.rsqrt %27 : vector<64x1xf32>
    %29 = arith.mulf %22, %22 : vector<64x64xf32>
    %cst_15 = arith.constant dense<0.000000e+00> : vector<64xf32>
    %30 = vector.multi_reduction <add>, %29, %cst_15 [1] : vector<64x64xf32> to vector<64xf32>
    %31 = vector.shape_cast %30 : vector<64xf32> to vector<64x1xf32>
    %cst_16 = arith.constant 9.99999996E-13 : f32
    %32 = vector.broadcast %cst_16 : f32 to vector<64x1xf32>
    %33 = arith.addf %31, %32 : vector<64x1xf32>
    %34 = math.rsqrt %33 : vector<64x1xf32>
    %35 = vector.broadcast %28 : vector<64x1xf32> to vector<64x64xf32>
    %36 = arith.mulf %21, %35 : vector<64x64xf32>
    %37 = arith.truncf %36 : vector<64x64xf32> to vector<64x64xbf16>
    %38 = vector.broadcast %34 : vector<64x1xf32> to vector<64x64xf32>
    %39 = arith.mulf %22, %38 : vector<64x64xf32>
    %40 = arith.truncf %39 : vector<64x64xf32> to vector<64x64xbf16>
    %cst_17 = arith.constant dense<0.000000e+00> : vector<64x64xf32>
    %41 = tpu.matmul %37, %40, %cst_17 {dimension_numbers = #tpu.dot_dimension_numbers<[1], [1], [0], [0], [0, 0, 1, 0], [], []>} : vector<64x64xbf16>, vector<64x64xbf16>, vector<64x64xf32> -> vector<64x64xf32>
    %cst_18 = arith.constant 1.250000e+00 : f32
    %42 = vector.broadcast %cst_18 : f32 to vector<64x64xf32>
    %43 = arith.mulf %41, %42 : vector<64x64xf32>
    %44 = math.exp %43 : vector<64x64xf32>
    %c0_19 = arith.constant 0 : index
    %c0_20 = arith.constant 0 : index
    %45 = vector.load %arg5[%c0_19, %c0_20] : memref<64x64xbf16, #tpu.memory_space<vmem>>, vector<64x64xbf16>
    %46 = arith.extf %45 : vector<64x64xbf16> to vector<64x64xf32>
    %47 = arith.mulf %44, %46 : vector<64x64xf32>
    %cst_21 = arith.constant dense<0.000000e+00> : vector<64xf32>
    %48 = vector.multi_reduction <add>, %47, %cst_21 [1] : vector<64x64xf32> to vector<64xf32>
    %49 = vector.shape_cast %48 : vector<64xf32> to vector<64x1xf32>
    %cst_22 = arith.constant dense<0.000000e+00> : vector<64xf32>
    %50 = vector.multi_reduction <add>, %44, %cst_22 [1] : vector<64x64xf32> to vector<64xf32>
    %51 = vector.shape_cast %50 : vector<64xf32> to vector<64x1xf32>
    %cst_23 = arith.constant 9.99999993E-9 : f32
    %52 = vector.broadcast %cst_23 : f32 to vector<64x1xf32>
    %53 = arith.addf %49, %52 : vector<64x1xf32>
    %54 = math.log %53 : vector<64x1xf32>
    %55 = vector.shape_cast %54 : vector<64x1xf32> to vector<1x64x1xf32>
    %cst_24 = arith.constant dense<0.000000e+00> : vector<1xf32>
    %56 = vector.multi_reduction <add>, %55, %cst_24 [1, 2] : vector<1x64x1xf32> to vector<1xf32>
    %57 = vector.shape_cast %56 : vector<1xf32> to vector<1x1x1xf32>
    %58 = vector.extract %57[0, 0, 0] : f32 from vector<1x1x1xf32>
    %cst_25 = arith.constant 9.99999993E-9 : f32
    %59 = vector.broadcast %cst_25 : f32 to vector<64x1xf32>
    %60 = arith.addf %51, %59 : vector<64x1xf32>
    %61 = math.log %60 : vector<64x1xf32>
    %62 = vector.shape_cast %61 : vector<64x1xf32> to vector<1x64x1xf32>
    %cst_26 = arith.constant dense<0.000000e+00> : vector<1xf32>
    %63 = vector.multi_reduction <add>, %62, %cst_26 [1, 2] : vector<1x64x1xf32> to vector<1xf32>
    %64 = vector.shape_cast %63 : vector<1xf32> to vector<1x1x1xf32>
    %65 = vector.extract %64[0, 0, 0] : f32 from vector<1x1x1xf32>
    %66 = arith.subf %58, %65 : f32
    %cst_27 = arith.constant 0.000000e+00 : f32
    %67 = arith.subf %cst_27, %66 : f32
    %cst_28 = arith.constant 1.562500e-02 : f32
    %68 = arith.mulf %67, %cst_28 : f32
    %69 = arith.truncf %44 : vector<64x64xf32> to vector<64x64xbf16>
    %cst_29 = arith.constant 1.000000e+00 : bf16
    %70 = vector.broadcast %cst_29 : bf16 to vector<1x64xbf16>
    %c0_30 = arith.constant 0 : index
    %c0_31 = arith.constant 0 : index
    %71 = vector.load %arg6[%c0_30, %c0_31] : memref<64x64xbf16, #tpu.memory_space<vmem>>, vector<64x64xbf16>
    %72 = arith.mulf %69, %71 : vector<64x64xbf16>
    %cst_32 = arith.constant dense<0.000000e+00> : vector<1x64xf32>
    %73 = tpu.matmul %70, %72, %cst_32 {dimension_numbers = #tpu.dot_dimension_numbers<[1], [0], [0], [1], [0, 0, 1, 1], [], []>} : vector<1x64xbf16>, vector<64x64xbf16>, vector<1x64xf32> -> vector<1x64xf32>
    %cst_33 = arith.constant dense<0.000000e+00> : vector<1x64xf32>
    %74 = tpu.matmul %70, %69, %cst_33 {dimension_numbers = #tpu.dot_dimension_numbers<[1], [0], [0], [1], [0, 0, 1, 1], [], []>} : vector<1x64xbf16>, vector<64x64xbf16>, vector<1x64xf32> -> vector<1x64xf32>
    %cst_34 = arith.constant 9.99999993E-9 : f32
    %75 = vector.broadcast %cst_34 : f32 to vector<1x64xf32>
    %76 = arith.addf %73, %75 : vector<1x64xf32>
    %77 = math.log %76 : vector<1x64xf32>
    %78 = vector.shape_cast %77 : vector<1x64xf32> to vector<1x1x64xf32>
    %cst_35 = arith.constant dense<0.000000e+00> : vector<1xf32>
    %79 = vector.multi_reduction <add>, %78, %cst_35 [1, 2] : vector<1x1x64xf32> to vector<1xf32>
    %80 = vector.shape_cast %79 : vector<1xf32> to vector<1x1x1xf32>
    %81 = vector.extract %80[0, 0, 0] : f32 from vector<1x1x1xf32>
    %cst_36 = arith.constant 9.99999993E-9 : f32
    %82 = vector.broadcast %cst_36 : f32 to vector<1x64xf32>
    %83 = arith.addf %74, %82 : vector<1x64xf32>
    %84 = math.log %83 : vector<1x64xf32>
    %85 = vector.shape_cast %84 : vector<1x64xf32> to vector<1x1x64xf32>
    %cst_37 = arith.constant dense<0.000000e+00> : vector<1xf32>
    %86 = vector.multi_reduction <add>, %85, %cst_37 [1, 2] : vector<1x1x64xf32> to vector<1xf32>
    %87 = vector.shape_cast %86 : vector<1xf32> to vector<1x1x1xf32>
    %88 = vector.extract %87[0, 0, 0] : f32 from vector<1x1x1xf32>
    %89 = arith.subf %81, %88 : f32
    %cst_38 = arith.constant 0.000000e+00 : f32
    %90 = arith.subf %cst_38, %89 : f32
    %cst_39 = arith.constant 1.562500e-02 : f32
    %91 = arith.mulf %90, %cst_39 : f32
    %cst_40 = arith.constant 5.000000e-01 : f32
    %92 = arith.mulf %cst_40, %68 : f32
    %cst_41 = arith.constant 5.000000e-01 : f32
    %93 = arith.mulf %cst_41, %91 : f32
    %94 = arith.addf %92, %93 : f32
    %95 = vector.broadcast %94 : f32 to vector<1x1xf32>
    %c0_42 = arith.constant 0 : index
    %c0_43 = arith.constant 0 : index
    %96 = vector.load %arg7[%c0_42, %c0_43] : memref<1x1xf32, #tpu.memory_space<vmem>>, vector<1x1xf32>
    tpu.vector_store %arg7[%c0_42, %c0_43], %95 {strides = array<i32>} : memref<1x1xf32, #tpu.memory_space<vmem>>, vector<1x1xf32>,
    return
  }
}

</mosaic_0001>

<llo_original>
// kernel: heco_forward.3
$region0: #{heco_forward.3}
  #allocation0 [shape = 'u32[]', space=smem, size = 0x4, offset = 0x4, fixed_abs, tag = 'smem constant byte address 0x4 - core index']
  #allocation1 [shape = 'u32[144,128]{1,0:T(1,128)}', space=vmem, size = 0x12000, scoped, tag = 'internal scratch']
  %s0 = inlined_call_operand.vmem [shape: f32[64,128], index: 0, kind: input, shape index: {}]
  %s1 = inlined_call_operand.vmem [shape: bf16[128,128], index: 1, kind: input, shape index: {}]
  %s2 = inlined_call_operand.vmem [shape: f32[1,128], index: 2, kind: input, shape index: {}]
  %s3 = inlined_call_operand.vmem [shape: bf16[128,128], index: 3, kind: input, shape index: {}]
  %s4 = inlined_call_operand.vmem [shape: f32[1,128], index: 4, kind: input, shape index: {}]
  %s5 = inlined_call_operand.vmem [shape: bf16[64,64], index: 5, kind: input, shape index: {}]
  %s6 = inlined_call_operand.vmem [shape: bf16[64,64], index: 6, kind: input, shape index: {}]
  %s7 = inlined_call_operand.hbm [shape: f32[1,1], index: 7, kind: output, shape index: {}]
  %s8 = sld [smem:[#allocation0]]
  $region38: #{heco_forward.3} parent=0
    _
  %s10 = ssub.s32 1, %s8
  %s11 = scalar_select 0, %s10, %s8
  $region1: #{heco_forward.3} parent=0
    #allocation2 [shape = 'u8[512]{0}', space=vmem, size = 0x400, scoped, tag = 'output window, operand 0, single buffered']
    #allocation3 [shape = 's32[1]{0}', space=sflag, size = 0x4, scoped, tag = 'scoped memory for heco_forward.3']
    %12 = vsyncpa [#allocation3], 0
    // Predicated region
    $region2: #{heco_forward.3} parent=1 // pred_check
      _
    $region3: #{heco_forward.3} parent=1 // pred_check_branch
      %14 = sbr.rel (0) target = $region5
    $region4: #{heco_forward.3} parent=1 // pred_region
      _
    $region5: #{heco_forward.3} parent=1 // pred_fallthru
      _
    // Predicated region
    $region6: #{heco_forward.3} parent=1 // pred_check
      _
    $region7: #{heco_forward.3} parent=1 // pred_check_branch
      %16 = sbr.rel (0) target = $region9
    $region8: #{heco_forward.3} parent=1 // pred_region
      _
    $region9: #{heco_forward.3} parent=1 // pred_fallthru
      _
    // Predicated region
    $region10: #{heco_forward.3} parent=1 // pred_check
      _
    $region11: #{heco_forward.3} parent=1 // pred_check_branch
      %18 = sbr.rel (0) target = $region13
    $region12: #{heco_forward.3} parent=1 // pred_region
      _
    $region13: #{heco_forward.3} parent=1 // pred_fallthru
      _
    // Predicated region
    $region14: #{heco_forward.3} parent=1 // pred_check
      _
    $region15: #{heco_forward.3} parent=1 // pred_check_branch
      %20 = sbr.rel (0) target = $region17
    $region16: #{heco_forward.3} parent=1 // pred_region
      _
    $region17: #{heco_forward.3} parent=1 // pred_fallthru
      _
    // Predicated region
    $region18: #{heco_forward.3} parent=1 // pred_check
      _
    $region19: #{heco_forward.3} parent=1 // pred_check_branch
      %22 = sbr.rel (0) target = $region21
    $region20: #{heco_forward.3} parent=1 // pred_region
      _
    $region21: #{heco_forward.3} parent=1 // pred_fallthru
      _
    // Predicated region
    $region22: #{heco_forward.3} parent=1 // pred_check
      _
    $region23: #{heco_forward.3} parent=1 // pred_check_branch
      %24 = sbr.rel (0) target = $region25
    $region24: #{heco_forward.3} parent=1 // pred_region
      _
    $region25: #{heco_forward.3} parent=1 // pred_fallthru
      _
    // Predicated region
    $region26: #{heco_forward.3} parent=1 // pred_check
      _
    $region27: #{heco_forward.3} parent=1 // pred_check_branch
      %26 = sbr.rel (0) target = $region29
    $region28: #{heco_forward.3} parent=1 // pred_region
      _
    $region29: #{heco_forward.3} parent=1 // pred_fallthru
      _
    %v29 = vld [vmem:[%s0] sm:$0xff]
    %v30 = vld [vmem:[%s0 + $0x8] sm:$0xff]
    %v31 = vld [vmem:[%s0 + $0x10] sm:$0xff]
    %v32 = vld [vmem:[%s0 + $0x18] sm:$0xff]
    %v33 = vld [vmem:[%s0 + $0x20] sm:$0xff]
    %v34 = vld [vmem:[%s0 + $0x28] sm:$0xff]
    %v35 = vld [vmem:[%s0 + $0x30] sm:$0xff]
    %v36 = vld [vmem:[%s0 + $0x38] sm:$0xff]
    %v37 = vpack.c.bf16 %v30, %v29
    %v38 = vpack.c.bf16 %v32, %v31
    %v39 = vpack.c.bf16 %v34, %v33
    %v40 = vpack.c.bf16 %v36, %v35
    %v41 = vld [vmem:[%s1] sm:$0xf]
    %v42 = vld [vmem:[%s1 + $0x4] sm:$0xf]
    %v43 = vld [vmem:[%s1 + $0x8] sm:$0xf]
    %v44 = vld [vmem:[%s1 + $0xc] sm:$0xf]
    %v45 = vld [vmem:[%s1 + $0x10] sm:$0xf]
    %v46 = vld [vmem:[%s1 + $0x14] sm:$0xf]
    %v47 = vld [vmem:[%s1 + $0x18] sm:$0xf]
    %v48 = vld [vmem:[%s1 + $0x1c] sm:$0xf]
    %v49 = vld [vmem:[%s1 + $0x20] sm:$0xf]
    %v50 = vld [vmem:[%s1 + $0x24] sm:$0xf]
    %v51 = vld [vmem:[%s1 + $0x28] sm:$0xf]
    %v52 = vld [vmem:[%s1 + $0x2c] sm:$0xf]
    %v53 = vld [vmem:[%s1 + $0x30] sm:$0xf]
    %v54 = vld [vmem:[%s1 + $0x34] sm:$0xf]
    %v55 = vld [vmem:[%s1 + $0x38] sm:$0xf]
    %v56 = vld [vmem:[%s1 + $0x3c] sm:$0xf]
    %v57 = vld [vmem:[%s2] sm:$0x1]
    %v59 = vlaneseq
    %v60 = vshrl.u32 %v59, 7
    %v61 = vsub.s32 0, %v60
    %v62 = vrot.slane %v57, %v61
    %v80 = vunpack.c.l.b16 %v41
    %v81 = vunpack.c.l.b16 %v42
    %v82 = vunpack.c.l.b16 %v43
    %v83 = vunpack.c.l.b16 %v44
    %v84 = vunpack.c.l.b16 %v45
    %v85 = vunpack.c.l.b16 %v46
    %v86 = vunpack.c.l.b16 %v47
    %v87 = vunpack.c.l.b16 %v48
    %v88 = vunpack.c.l.b16 %v49
    %v89 = vunpack.c.l.b16 %v50
    %v90 = vunpack.c.l.b16 %v51
    %v91 = vunpack.c.l.b16 %v52
    %v92 = vunpack.c.l.b16 %v53
    %v93 = vunpack.c.l.b16 %v54
    %v94 = vunpack.c.l.b16 %v55
    %v95 = vunpack.c.l.b16 %v56
    %v96 = vpack.c.b16 %v81, %v80
    %v97 = vpack.c.b16 %v83, %v82
    %v98 = vpack.c.b16 %v85, %v84
    %v99 = vpack.c.b16 %v87, %v86
    %v100 = vpack.c.b16 %v89, %v88
    %v101 = vpack.c.b16 %v91, %v90
    %v102 = vpack.c.b16 %v93, %v92
    %v103 = vpack.c.b16 %v95, %v94
    %112 = vmatprep.subr.bf16.mxu0 0
    %113 = vmatpush1.bf16.msra.mxu0 %v96
    %114 = vmatprep.subr.bf16.mxu0 0
    %115 = vmatpush1.bf16.msra.mxu0 %v97
    %116 = vmatprep.subr.bf16.mxu0 0
    %117 = vmatpush1.bf16.msra.mxu0 %v98
    %118 = vmatprep.subr.bf16.mxu0 0
    %119 = vmatpush1.bf16.msra.mxu0 %v99
    %120 = vmatprep.subr.bf16.mxu0 0
    %121 = vmatpush1.bf16.msra.mxu0 %v100
    %122 = vmatprep.subr.bf16.mxu0 0
    %123 = vmatpush1.bf16.msra.mxu0 %v101
    %124 = vmatprep.subr.bf16.mxu0 0
    %125 = vmatpush1.bf16.msra.mxu0 %v102
    %126 = vmatprep.subr.bf16.mxu0 0
    %127 = vmatpush1.bf16.msra.mxu0 %v103
    %128 = vmatprep.subr.bf16.mxu0 0
    %129 = vmatpush1.bf16.msra.mxu0 0
    %130 = vmatprep.subr.bf16.mxu0 0
    %131 = vmatpush1.bf16.msra.mxu0 0
    %132 = vmatprep.subr.bf16.mxu0 0
    %133 = vmatpush1.bf16.msra.mxu0 0
    %134 = vmatprep.subr.bf16.mxu0 0
    %135 = vmatpush1.bf16.msra.mxu0 0
    %136 = vmatprep.subr.bf16.mxu0 0
    %137 = vmatpush1.bf16.msra.mxu0 0
    %138 = vmatprep.subr.bf16.mxu0 0
    %139 = vmatpush1.bf16.msra.mxu0 0
    %140 = vmatprep.subr.bf16.mxu0 0
    %141 = vmatpush1.bf16.msra.mxu0 0
    %142 = vmatprep.subr.bf16.mxu0 0
    %143 = vmatpush1.bf16.msra.mxu0 0
    %144 = vmatprep.mubr.bf16.mxu0 0
    %145 = vmatmul.mubr.bf16.gmra.mrb[0].mxu0 %v37
    %v146 = vpop.f32.mrb[0].mxu0
    %v147 = vadd.f32 %v62, %v146
    %v148 = vpop.f32.mrb[0].mxu0
    %v149 = vpop.f32.mrb[0].mxu0
    %v150 = vadd.f32 %v62, %v149
    %v151 = vpop.f32.mrb[0].mxu0
    %152 = vmatprep.mubr.bf16.mxu0 0
    %153 = vmatmul.mubr.bf16.gmra.mrb[0].mxu0 %v38
    %v154 = vpop.f32.mrb[0].mxu0
    %v155 = vadd.f32 %v62, %v154
    %v156 = vpop.f32.mrb[0].mxu0
    %v157 = vpop.f32.mrb[0].mxu0
    %v158 = vadd.f32 %v62, %v157
    %v159 = vpop.f32.mrb[0].mxu0
    %160 = vmatprep.mubr.bf16.mxu0 0
    %161 = vmatmul.mubr.bf16.gmra.mrb[0].mxu0 %v39
    %v162 = vpop.f32.mrb[0].mxu0
    %v163 = vadd.f32 %v62, %v162
    %v164 = vpop.f32.mrb[0].mxu0
    %v165 = vpop.f32.mrb[0].mxu0
    %v166 = vadd.f32 %v62, %v165
    %v167 = vpop.f32.mrb[0].mxu0
    %168 = vmatprep.mubr.bf16.mxu0 0
    %169 = vmatmul.mubr.bf16.gmra.mrb[0].mxu0 %v40
    %v170 = vpop.f32.mrb[0].mxu0
    %v171 = vadd.f32 %v62, %v170
    %v172 = vpop.f32.mrb[0].mxu0
    %v173 = vpop.f32.mrb[0].mxu0
    %v174 = vadd.f32 %v62, %v173
    %v175 = vpop.f32.mrb[0].mxu0
    %176 = vdwg.mxu0
    %vm177 = vcmp.gt.f32.partialorder %v147, 0.0
    %vm178 = vcmp.gt.f32.partialorder %v150, 0.0
    %vm179 = vcmp.gt.f32.partialorder %v155, 0.0
    %vm180 = vcmp.gt.f32.partialorder %v158, 0.0
    %vm181 = vcmp.gt.f32.partialorder %v163, 0.0
    %vm182 = vcmp.gt.f32.partialorder %v166, 0.0
    %vm183 = vcmp.gt.f32.partialorder %v171, 0.0
    %vm184 = vcmp.gt.f32.partialorder %v174, 0.0
    %v185 = vmin.f32 %v147, 0.0
    %v186 = vmin.f32 %v150, 0.0
    %v187 = vmin.f32 %v155, 0.0
    %v188 = vmin.f32 %v158, 0.0
    %v189 = vmin.f32 %v163, 0.0
    %v190 = vmin.f32 %v166, 0.0
    %v191 = vmin.f32 %v171, 0.0
    %v192 = vmin.f32 %v174, 0.0
    %v193 = vmul.f32 %v185, 1.442695
    %v194 = vpow.pop %v193
    %v195 = vmul.f32 %v186, 1.442695
    %v196 = vpow.pop %v195
    %v197 = vmul.f32 %v187, 1.442695
    %v198 = vpow.pop %v197
    %v199 = vmul.f32 %v188, 1.442695
    %v200 = vpow.pop %v199
    %v201 = vmul.f32 %v189, 1.442695
    %v202 = vpow.pop %v201
    %v203 = vmul.f32 %v190, 1.442695
    %v204 = vpow.pop %v203
    %v205 = vmul.f32 %v191, 1.442695
    %v206 = vpow.pop %v205
    %v207 = vmul.f32 %v192, 1.442695
    %v208 = vpow.pop %v207
    %v209 = vsub.f32 %v194, 1.0
    %v210 = vsub.f32 %v196, 1.0
    %v211 = vsub.f32 %v198, 1.0
    %v212 = vsub.f32 %v200, 1.0
    %v213 = vsub.f32 %v202, 1.0
    %v214 = vsub.f32 %v204, 1.0
    %v215 = vsub.f32 %v206, 1.0
    %v216 = vsub.f32 %v208, 1.0
    %v217 = vsel %vm177, %v147, %v209
    %v218 = vsel %vm178, %v150, %v210
    %v219 = vsel %vm179, %v155, %v211
    %v220 = vsel %vm180, %v158, %v212
    %v221 = vsel %vm181, %v163, %v213
    %v222 = vsel %vm182, %v166, %v214
    %v223 = vsel %vm183, %v171, %v215
    %v224 = vsel %vm184, %v174, %v216
    %v225 = vpack.c.bf16 %v218, %v217
    %v226 = vpack.c.bf16 %v220, %v219
    %v227 = vpack.c.bf16 %v222, %v221
    %v228 = vpack.c.bf16 %v224, %v223
    %v229 = vld [vmem:[%s3] sm:$0xf]
    %v230 = vld [vmem:[%s3 + $0x4] sm:$0xf]
    %v231 = vld [vmem:[%s3 + $0x8] sm:$0xf]
    %v232 = vld [vmem:[%s3 + $0xc] sm:$0xf]
    %v233 = vld [vmem:[%s3 + $0x10] sm:$0xf]
    %v234 = vld [vmem:[%s3 + $0x14] sm:$0xf]
    %v235 = vld [vmem:[%s3 + $0x18] sm:$0xf]
    %v236 = vld [vmem:[%s3 + $0x1c] sm:$0xf]
    %v237 = vld [vmem:[%s3 + $0x20] sm:$0xf]
    %v238 = vld [vmem:[%s3 + $0x24] sm:$0xf]
    %v239 = vld [vmem:[%s3 + $0x28] sm:$0xf]
    %v240 = vld [vmem:[%s3 + $0x2c] sm:$0xf]
    %v241 = vld [vmem:[%s3 + $0x30] sm:$0xf]
    %v242 = vld [vmem:[%s3 + $0x34] sm:$0xf]
    %v243 = vld [vmem:[%s3 + $0x38] sm:$0xf]
    %v244 = vld [vmem:[%s3 + $0x3c] sm:$0xf]
    %v245 = vld [vmem:[%s4] sm:$0x1]
    %v247 = vlaneseq
    %v248 = vshrl.u32 %v247, 7
    %v249 = vsub.s32 0, %v248
    %v250 = vrot.slane %v245, %v249
    %v268 = vunpack.c.l.b16 %v229
    %v269 = vunpack.c.l.b16 %v230
    %v270 = vunpack.c.l.b16 %v231
    %v271 = vunpack.c.l.b16 %v232
    %v272 = vunpack.c.l.b16 %v233
    %v273 = vunpack.c.l.b16 %v234
    %v274 = vunpack.c.l.b16 %v235
    %v275 = vunpack.c.l.b16 %v236
    %v276 = vunpack.c.l.b16 %v237
    %v277 = vunpack.c.l.b16 %v238
    %v278 = vunpack.c.l.b16 %v239
    %v279 = vunpack.c.l.b16 %v240
    %v280 = vunpack.c.l.b16 %v241
    %v281 = vunpack.c.l.b16 %v242
    %v282 = vunpack.c.l.b16 %v243
    %v283 = vunpack.c.l.b16 %v244
    %v284 = vpack.c.b16 %v269, %v268
    %v285 = vpack.c.b16 %v271, %v270
    %v286 = vpack.c.b16 %v273, %v272
    %v287 = vpack.c.b16 %v275, %v274
    %v288 = vpack.c.b16 %v277, %v276
    %v289 = vpack.c.b16 %v279, %v278
    %v290 = vpack.c.b16 %v281, %v280
    %v291 = vpack.c.b16 %v283, %v282
    %300 = vmatprep.subr.bf16.mxu0 0
    %301 = vmatpush1.bf16.msra.mxu0 %v284
    %302 = vmatprep.subr.bf16.mxu0 0
    %303 = vmatpush1.bf16.msra.mxu0 %v285
    %304 = vmatprep.subr.bf16.mxu0 0
    %305 = vmatpush1.bf16.msra.mxu0 %v286
    %306 = vmatprep.subr.bf16.mxu0 0
    %307 = vmatpush1.bf16.msra.mxu0 %v287
    %308 = vmatprep.subr.bf16.mxu0 0
    %309 = vmatpush1.bf16.msra.mxu0 %v288
    %310 = vmatprep.subr.bf16.mxu0 0
    %311 = vmatpush1.bf16.msra.mxu0 %v289
    %312 = vmatprep.subr.bf16.mxu0 0
    %313 = vmatpush1.bf16.msra.mxu0 %v290
    %314 = vmatprep.subr.bf16.mxu0 0
    %315 = vmatpush1.bf16.msra.mxu0 %v291
    %316 = vmatprep.subr.bf16.mxu0 0
    %317 = vmatpush1.bf16.msra.mxu0 0
    %318 = vmatprep.subr.bf16.mxu0 0
    %319 = vmatpush1.bf16.msra.mxu0 0
    %320 = vmatprep.subr.bf16.mxu0 0
    %321 = vmatpush1.bf16.msra.mxu0 0
    %322 = vmatprep.subr.bf16.mxu0 0
    %323 = vmatpush1.bf16.msra.mxu0 0
    %324 = vmatprep.subr.bf16.mxu0 0
    %325 = vmatpush1.bf16.msra.mxu0 0
    %326 = vmatprep.subr.bf16.mxu0 0
    %327 = vmatpush1.bf16.msra.mxu0 0
    %328 = vmatprep.subr.bf16.mxu0 0
    %329 = vmatpush1.bf16.msra.mxu0 0
    %330 = vmatprep.subr.bf16.mxu0 0
    %331 = vmatpush1.bf16.msra.mxu0 0
    %332 = vmatprep.mubr.bf16.mxu0 0
    %333 = vmatmul.mubr.bf16.gmra.mrb[0].mxu0 %v225
    %v334 = vpop.f32.mrb[0].mxu0
    %v335 = vadd.f32 %v250, %v334
    %v336 = vpop.f32.mrb[0].mxu0
    %v337 = vpop.f32.mrb[0].mxu0
    %v338 = vadd.f32 %v250, %v337
    %v339 = vpop.f32.mrb[0].mxu0
    %340 = vmatprep.mubr.bf16.mxu0 0
    %341 = vmatmul.mubr.bf16.gmra.mrb[0].mxu0 %v226
    %v342 = vpop.f32.mrb[0].mxu0
    %v343 = vadd.f32 %v250, %v342
    %v344 = vpop.f32.mrb[0].mxu0
    %v345 = vpop.f32.mrb[0].mxu0
    %v346 = vadd.f32 %v250, %v345
    %v347 = vpop.f32.mrb[0].mxu0
    %348 = vmatprep.mubr.bf16.mxu0 0
    %349 = vmatmul.mubr.bf16.gmra.mrb[0].mxu0 %v227
    %v350 = vpop.f32.mrb[0].mxu0
    %v351 = vadd.f32 %v250, %v350
    %v352 = vpop.f32.mrb[0].mxu0
    %v353 = vpop.f32.mrb[0].mxu0
    %v354 = vadd.f32 %v250, %v353
    %v355 = vpop.f32.mrb[0].mxu0
    %356 = vmatprep.mubr.bf16.mxu0 0
    %357 = vmatmul.mubr.bf16.gmra.mrb[0].mxu0 %v228
    %v358 = vpop.f32.mrb[0].mxu0
    %v359 = vadd.f32 %v250, %v358
    %v360 = vpop.f32.mrb[0].mxu0
    %v361 = vpop.f32.mrb[0].mxu0
    %v362 = vadd.f32 %v250, %v361
    %v363 = vpop.f32.mrb[0].mxu0
    %364 = vdwg.mxu0
    %v365 = vmul.f32 %v335, %v335
    %v366 = vmul.f32 %v338, %v338
    %v367 = vmul.f32 %v343, %v343
    %v368 = vmul.f32 %v346, %v346
    %v369 = vmul.f32 %v351, %v351
    %v370 = vmul.f32 %v354, %v354
    %v371 = vmul.f32 %v359, %v359
    %v372 = vmul.f32 %v362, %v362
    %vm373 = vcmask 523264
    %v374 = vsel %vm373, %v365, 0.0
    %375 = vadd.xlane.f32.xlu0 %v374
    %v376 = vpop.xlane.xlu0 %375
    %v377 = vsel %vm373, %v366, 0.0
    %378 = vadd.xlane.f32.xlu0 %v377
    %v379 = vpop.xlane.xlu0 %378
    %v380 = vsel %vm373, %v367, 0.0
    %381 = vadd.xlane.f32.xlu0 %v380
    %v382 = vpop.xlane.xlu0 %381
    %v383 = vsel %vm373, %v368, 0.0
    %384 = vadd.xlane.f32.xlu0 %v383
    %v385 = vpop.xlane.xlu0 %384
    %v386 = vsel %vm373, %v369, 0.0
    %387 = vadd.xlane.f32.xlu0 %v386
    %v388 = vpop.xlane.xlu0 %387
    %v389 = vsel %vm373, %v370, 0.0
    %390 = vadd.xlane.f32.xlu0 %v389
    %v391 = vpop.xlane.xlu0 %390
    %v392 = vsel %vm373, %v371, 0.0
    %393 = vadd.xlane.f32.xlu0 %v392
    %v394 = vpop.xlane.xlu0 %393
    %v395 = vsel %vm373, %v372, 0.0
    %396 = vadd.xlane.f32.xlu0 %v395
    %v397 = vpop.xlane.xlu0 %396
    %v398 = vadd.f32 %v376, 1e-12
    %v399 = vadd.f32 %v379, 1e-12
    %v400 = vadd.f32 %v382, 1e-12
    %v401 = vadd.f32 %v385, 1e-12
    %v402 = vadd.f32 %v388, 1e-12
    %v403 = vadd.f32 %v391, 1e-12
    %v404 = vadd.f32 %v394, 1e-12
    %v405 = vadd.f32 %v397, 1e-12
    %v406 = vrsqrt.pop %v398
    %v407 = vrsqrt.pop %v399
    %v408 = vrsqrt.pop %v400
    %v409 = vrsqrt.pop %v401
    %v410 = vrsqrt.pop %v402
    %v411 = vrsqrt.pop %v403
    %v412 = vrsqrt.pop %v404
    %v413 = vrsqrt.pop %v405
    %422 = vrot.lane.b32.xlu0 %v365, 64
    %v423 = vpop.permute.xlu0 %422
    %424 = vrot.lane.b32.xlu0 %v366, 64
    %v425 = vpop.permute.xlu0 %424
    %426 = vrot.lane.b32.xlu0 %v367, 64
    %v427 = vpop.permute.xlu0 %426
    %428 = vrot.lane.b32.xlu0 %v368, 64
    %v429 = vpop.permute.xlu0 %428
    %430 = vrot.lane.b32.xlu0 %v369, 64
    %v431 = vpop.permute.xlu0 %430
    %432 = vrot.lane.b32.xlu0 %v370, 64
    %v433 = vpop.permute.xlu0 %432
    %434 = vrot.lane.b32.xlu0 %v371, 64
    %v435 = vpop.permute.xlu0 %434
    %436 = vrot.lane.b32.xlu0 %v372, 64
    %v437 = vpop.permute.xlu0 %436
    %v446 = vsel %vm373, %v423, 0.0
    %447 = vadd.xlane.f32.xlu0 %v446
    %v448 = vpop.xlane.xlu0 %447
    %v449 = vsel %vm373, %v425, 0.0
    %450 = vadd.xlane.f32.xlu0 %v449
    %v451 = vpop.xlane.xlu0 %450
    %v452 = vsel %vm373, %v427, 0.0
    %453 = vadd.xlane.f32.xlu0 %v452
    %v454 = vpop.xlane.xlu0 %453
    %v455 = vsel %vm373, %v429, 0.0
    %456 = vadd.xlane.f32.xlu0 %v455
    %v457 = vpop.xlane.xlu0 %456
    %v458 = vsel %vm373, %v431, 0.0
    %459 = vadd.xlane.f32.xlu0 %v458
    %v460 = vpop.xlane.xlu0 %459
    %v461 = vsel %vm373, %v433, 0.0
    %462 = vadd.xlane.f32.xlu0 %v461
    %v463 = vpop.xlane.xlu0 %462
    %v464 = vsel %vm373, %v435, 0.0
    %465 = vadd.xlane.f32.xlu0 %v464
    %v466 = vpop.xlane.xlu0 %465
    %v467 = vsel %vm373, %v437, 0.0
    %468 = vadd.xlane.f32.xlu0 %v467
    %v469 = vpop.xlane.xlu0 %468
    %v470 = vadd.f32 %v448, 1e-12
    %v471 = vadd.f32 %v451, 1e-12
    %v472 = vadd.f32 %v454, 1e-12
    %v473 = vadd.f32 %v457, 1e-12
    %v474 = vadd.f32 %v460, 1e-12
    %v475 = vadd.f32 %v463, 1e-12
    %v476 = vadd.f32 %v466, 1e-12
    %v477 = vadd.f32 %v469, 1e-12
    %v478 = vrsqrt.pop %v470
    %v479 = vrsqrt.pop %v471
    %v480 = vrsqrt.pop %v472
    %v481 = vrsqrt.pop %v473
    %v482 = vrsqrt.pop %v474
    %v483 = vrsqrt.pop %v475
    %v484 = vrsqrt.pop %v476
    %v485 = vrsqrt.pop %v477
    %v486 = vmul.f32 %v335, %v406
    %v487 = vmul.f32 %v338, %v407
    %v488 = vmul.f32 %v343, %v408
    %v489 = vmul.f32 %v346, %v409
    %v490 = vmul.f32 %v351, %v410
    %v491 = vmul.f32 %v354, %v411
    %v492 = vmul.f32 %v359, %v412
    %v493 = vmul.f32 %v362, %v413
    %v494 = vpack.c.bf16 %v487, %v486
    %v495 = vpack.c.bf16 %v489, %v488
    %v496 = vpack.c.bf16 %v491, %v490
    %v497 = vpack.c.bf16 %v493, %v492
    %v498 = vmul.f32 %v335, %v478
    %v499 = vmul.f32 %v338, %v479
    %v500 = vmul.f32 %v343, %v480
    %v501 = vmul.f32 %v346, %v481
    %v502 = vmul.f32 %v351, %v482
    %v503 = vmul.f32 %v354, %v483
    %v504 = vmul.f32 %v359, %v484
    %v505 = vmul.f32 %v362, %v485
    %v506 = vpack.c.bf16 %v499, %v498
    %v507 = vpack.c.bf16 %v501, %v500
    %v508 = vpack.c.bf16 %v503, %v502
    %v509 = vpack.c.bf16 %v505, %v504
    %514 = vrot.lane.b32.xlu0 %v506, 64
    %v515 = vpop.permute.xlu0 %514
    %516 = vrot.lane.b32.xlu0 %v507, 64
    %v517 = vpop.permute.xlu0 %516
    %518 = vrot.lane.b32.xlu0 %v508, 64
    %v519 = vpop.permute.xlu0 %518
    %520 = vrot.lane.b32.xlu0 %v509, 64
    %v521 = vpop.permute.xlu0 %520
    %v523 = vsel %vm373, %v494, 0
    %v526 = vsel %vm373, %v495, 0
    %v529 = vsel %vm373, %v496, 0
    %v532 = vsel %vm373, %v497, 0
    %v535 = vsel %vm373, %v515, 0
    %v538 = vsel %vm373, %v517, 0
    %v541 = vsel %vm373, %v519, 0
    %v544 = vsel %vm373, %v521, 0
    %546 = vmatprep.subr.bf16.mxu0 0
    %547 = vmatpush1.bf16.xpose.msra.mxu0 %v535
    %548 = vmatprep.subr.bf16.mxu0 0
    %549 = vmatpush1.bf16.xpose.msra.mxu0 %v538
    %550 = vmatprep.subr.bf16.mxu0 0
    %551 = vmatpush1.bf16.xpose.msra.mxu0 %v541
    %552 = vmatprep.subr.bf16.mxu0 0
    %553 = vmatpush1.bf16.xpose.msra.mxu0 %v544
    %554 = vmatprep.subr.bf16.mxu0 0
    %555 = vmatpush1.bf16.xpose.msra.mxu0 0
    %556 = vmatprep.subr.bf16.mxu0 0
    %557 = vmatpush1.bf16.xpose.msra.mxu0 0
    %558 = vmatprep.subr.bf16.mxu0 0
    %559 = vmatpush1.bf16.xpose.msra.mxu0 0
    %560 = vmatprep.subr.bf16.mxu0 0
    %561 = vmatpush1.bf16.xpose.msra.mxu0 0
    %562 = vmatprep.subr.bf16.mxu0 0
    %563 = vmatpush1.bf16.xpose.msra.mxu0 0
    %564 = vmatprep.subr.bf16.mxu0 0
    %565 = vmatpush1.bf16.xpose.msra.mxu0 0
    %566 = vmatprep.subr.bf16.mxu0 0
    %567 = vmatpush1.bf16.xpose.msra.mxu0 0
    %568 = vmatprep.subr.bf16.mxu0 0
    %569 = vmatpush1.bf16.xpose.msra.mxu0 0
    %570 = vmatprep.subr.bf16.mxu0 0
    %571 = vmatpush1.bf16.xpose.msra.mxu0 0
    %572 = vmatprep.subr.bf16.mxu0 0
    %573 = vmatpush1.bf16.xpose.msra.mxu0 0
    %574 = vmatprep.subr.bf16.mxu0 0
    %575 = vmatpush1.bf16.xpose.msra.mxu0 0
    %576 = vmatprep.subr.bf16.mxu0 0
    %577 = vmatpush1.bf16.xpose.msra.mxu0 0
    %578 = vmatprep.mubr.bf16.mxu0 0
    %579 = vmatmul.mubr.bf16.gmra.mrb[0].mxu0 %v523
    %v580 = vpop.f32.mrb[0].mxu0
    %v581 = vadd.f32 0.0, %v580
    %v582 = vpop.f32.mrb[0].mxu0
    %v583 = vpop.f32.mrb[0].mxu0
    %v584 = vadd.f32 0.0, %v583
    %v585 = vpop.f32.mrb[0].mxu0
    %586 = vmatprep.mubr.bf16.mxu0 0
    %587 = vmatmul.mubr.bf16.gmra.mrb[0].mxu0 %v526
    %v588 = vpop.f32.mrb[0].mxu0
    %v589 = vadd.f32 0.0, %v588
    %v590 = vpop.f32.mrb[0].mxu0
    %v591 = vpop.f32.mrb[0].mxu0
    %v592 = vadd.f32 0.0, %v591
    %v593 = vpop.f32.mrb[0].mxu0
    %594 = vmatprep.mubr.bf16.mxu0 0
    %595 = vmatmul.mubr.bf16.gmra.mrb[0].mxu0 %v529
    %v596 = vpop.f32.mrb[0].mxu0
    %v597 = vadd.f32 0.0, %v596
    %v598 = vpop.f32.mrb[0].mxu0
    %v599 = vpop.f32.mrb[0].mxu0
    %v600 = vadd.f32 0.0, %v599
    %v601 = vpop.f32.mrb[0].mxu0
    %602 = vmatprep.mubr.bf16.mxu0 0
    %603 = vmatmul.mubr.bf16.gmra.mrb[0].mxu0 %v532
    %v604 = vpop.f32.mrb[0].mxu0
    %v605 = vadd.f32 0.0, %v604
    %v606 = vpop.f32.mrb[0].mxu0
    %v607 = vpop.f32.mrb[0].mxu0
    %v608 = vadd.f32 0.0, %v607
    %v609 = vpop.f32.mrb[0].mxu0
    %610 = vdwg.mxu0
    %v611 = vmul.f32 %v581, 1.25
    %v612 = vmul.f32 %v584, 1.25
    %v613 = vmul.f32 %v589, 1.25
    %v614 = vmul.f32 %v592, 1.25
    %v615 = vmul.f32 %v597, 1.25
    %v616 = vmul.f32 %v600, 1.25
    %v617 = vmul.f32 %v605, 1.25
    %v618 = vmul.f32 %v608, 1.25
    %v619 = vmul.f32 %v611, 1.442695
    %v620 = vpow.pop %v619
    %v621 = vmul.f32 %v612, 1.442695
    %v622 = vpow.pop %v621
    %v623 = vmul.f32 %v613, 1.442695
    %v624 = vpow.pop %v623
    %v625 = vmul.f32 %v614, 1.442695
    %v626 = vpow.pop %v625
    %v627 = vmul.f32 %v615, 1.442695
    %v628 = vpow.pop %v627
    %v629 = vmul.f32 %v616, 1.442695
    %v630 = vpow.pop %v629
    %v631 = vmul.f32 %v617, 1.442695
    %v632 = vpow.pop %v631
    %v633 = vmul.f32 %v618, 1.442695
    %v634 = vpow.pop %v633
    %v635 = vld [vmem:[%s5] sm:$0xf]
    %v636 = vld [vmem:[%s5 + $0x4] sm:$0xf]
    %v637 = vld [vmem:[%s5 + $0x8] sm:$0xf]
    %v638 = vld [vmem:[%s5 + $0xc] sm:$0xf]
    %v639 = vld [vmem:[%s5 + $0x10] sm:$0xf]
    %v640 = vld [vmem:[%s5 + $0x14] sm:$0xf]
    %v641 = vld [vmem:[%s5 + $0x18] sm:$0xf]
    %v642 = vld [vmem:[%s5 + $0x1c] sm:$0xf]
    %v643 = vunpack.c.l.bf16 %v635
    %v644 = vunpack.c.l.bf16 %v636
    %v645 = vunpack.c.l.bf16 %v637
    %v646 = vunpack.c.l.bf16 %v638
    %v647 = vunpack.c.l.bf16 %v639
    %v648 = vunpack.c.l.bf16 %v640
    %v649 = vunpack.c.l.bf16 %v641
    %v650 = vunpack.c.l.bf16 %v642
    %v651 = vmul.f32 %v620, %v643
    %v652 = vmul.f32 %v622, %v644
    %v653 = vmul.f32 %v624, %v645
    %v654 = vmul.f32 %v626, %v646
    %v655 = vmul.f32 %v628, %v647
    %v656 = vmul.f32 %v630, %v648
    %v657 = vmul.f32 %v632, %v649
    %v658 = vmul.f32 %v634, %v650
    %v659 = vsel %vm373, %v651, 0.0
    %660 = vadd.xlane.f32.xlu0 %v659
    %v661 = vpop.xlane.xlu0 %660
    %v662 = vsel %vm373, %v652, 0.0
    %663 = vadd.xlane.f32.xlu0 %v662
    %v664 = vpop.xlane.xlu0 %663
    %v665 = vsel %vm373, %v653, 0.0
    %666 = vadd.xlane.f32.xlu0 %v665
    %v667 = vpop.xlane.xlu0 %666
    %v668 = vsel %vm373, %v654, 0.0
    %669 = vadd.xlane.f32.xlu0 %v668
    %v670 = vpop.xlane.xlu0 %669
    %v671 = vsel %vm373, %v655, 0.0
    %672 = vadd.xlane.f32.xlu0 %v671
    %v673 = vpop.xlane.xlu0 %672
    %v674 = vsel %vm373, %v656, 0.0
    %675 = vadd.xlane.f32.xlu0 %v674
    %v676 = vpop.xlane.xlu0 %675
    %v677 = vsel %vm373, %v657, 0.0
    %678 = vadd.xlane.f32.xlu0 %v677
    %v679 = vpop.xlane.xlu0 %678
    %v680 = vsel %vm373, %v658, 0.0
    %681 = vadd.xlane.f32.xlu0 %v680
    %v682 = vpop.xlane.xlu0 %681
    %v683 = vsel %vm373, %v620, 0.0
    %684 = vadd.xlane.f32.xlu0 %v683
    %v685 = vpop.xlane.xlu0 %684
    %v686 = vsel %vm373, %v622, 0.0
    %687 = vadd.xlane.f32.xlu0 %v686
    %v688 = vpop.xlane.xlu0 %687
    %v689 = vsel %vm373, %v624, 0.0
    %690 = vadd.xlane.f32.xlu0 %v689
    %v691 = vpop.xlane.xlu0 %690
    %v692 = vsel %vm373, %v626, 0.0
    %693 = vadd.xlane.f32.xlu0 %v692
    %v694 = vpop.xlane.xlu0 %693
    %v695 = vsel %vm373, %v628, 0.0
    %696 = vadd.xlane.f32.xlu0 %v695
    %v697 = vpop.xlane.xlu0 %696
    %v698 = vsel %vm373, %v630, 0.0
    %699 = vadd.xlane.f32.xlu0 %v698
    %v700 = vpop.xlane.xlu0 %699
    %v701 = vsel %vm373, %v632, 0.0
    %702 = vadd.xlane.f32.xlu0 %v701
    %v703 = vpop.xlane.xlu0 %702
    %v704 = vsel %vm373, %v634, 0.0
    %705 = vadd.xlane.f32.xlu0 %v704
    %v706 = vpop.xlane.xlu0 %705
    %v707 = vadd.f32 %v661, 1e-08
    %v708 = vadd.f32 %v664, 1e-08
    %v709 = vadd.f32 %v667, 1e-08
    %v710 = vadd.f32 %v670, 1e-08
    %v711 = vadd.f32 %v673, 1e-08
    %v712 = vadd.f32 %v676, 1e-08
    %v713 = vadd.f32 %v679, 1e-08
    %v714 = vadd.f32 %v682, 1e-08
    %v715 = vlog2.pop %v707
    %v716 = vmul.f32 %v715, 0.6931472
    %v717 = vlog2.pop %v708
    %v718 = vmul.f32 %v717, 0.6931472
    %v719 = vlog2.pop %v709
    %v720 = vmul.f32 %v719, 0.6931472
    %v721 = vlog2.pop %v710
    %v722 = vmul.f32 %v721, 0.6931472
    %v723 = vlog2.pop %v711
    %v724 = vmul.f32 %v723, 0.6931472
    %v725 = vlog2.pop %v712
    %v726 = vmul.f32 %v725, 0.6931472
    %v727 = vlog2.pop %v713
    %v728 = vmul.f32 %v727, 0.6931472
    %v729 = vlog2.pop %v714
    %v730 = vmul.f32 %v729, 0.6931472
    %vm731 = vcmask 7168
    %v732 = vsel %vm731, %v716, 0.0
    %v733 = vsel %vm731, %v718, 0.0
    %v734 = vadd.f32 %v732, %v733
    %v735 = vsel %vm731, %v720, 0.0
    %v736 = vadd.f32 %v734, %v735
    %v737 = vsel %vm731, %v722, 0.0
    %v738 = vadd.f32 %v736, %v737
    %v739 = vsel %vm731, %v724, 0.0
    %v740 = vadd.f32 %v738, %v739
    %v741 = vsel %vm731, %v726, 0.0
    %v742 = vadd.f32 %v740, %v741
    %v743 = vsel %vm731, %v728, 0.0
    %v744 = vadd.f32 %v742, %v743
    %v745 = vsel %vm731, %v730, 0.0
    %v746 = vadd.f32 %v744, %v745
    %747 = vadd.xlane.f32.xlu0 %v746
    %v748 = vpop.xlane.xlu0 %747
    %v749 = vrot.slane %v748, 4
    %v750 = vadd.f32 %v748, %v749
    %v751 = vrot.slane %v750, 2
    %v752 = vadd.f32 %v750, %v751
    %v753 = vrot.slane %v752, 1
    %v754 = vadd.f32 %v752, %v753
    %s755 = vtos %v754
    %v756 = vadd.f32 %v685, 1e-08
    %v757 = vadd.f32 %v688, 1e-08
    %v758 = vadd.f32 %v691, 1e-08
    %v759 = vadd.f32 %v694, 1e-08
    %v760 = vadd.f32 %v697, 1e-08
    %v761 = vadd.f32 %v700, 1e-08
    %v762 = vadd.f32 %v703, 1e-08
    %v763 = vadd.f32 %v706, 1e-08
    %v764 = vlog2.pop %v756
    %v765 = vmul.f32 %v764, 0.6931472
    %v766 = vlog2.pop %v757
    %v767 = vmul.f32 %v766, 0.6931472
    %v768 = vlog2.pop %v758
    %v769 = vmul.f32 %v768, 0.6931472
    %v770 = vlog2.pop %v759
    %v771 = vmul.f32 %v770, 0.6931472
    %v772 = vlog2.pop %v760
    %v773 = vmul.f32 %v772, 0.6931472
    %v774 = vlog2.pop %v761
    %v775 = vmul.f32 %v774, 0.6931472
    %v776 = vlog2.pop %v762
    %v777 = vmul.f32 %v776, 0.6931472
    %v778 = vlog2.pop %v763
    %v779 = vmul.f32 %v778, 0.6931472
    %v780 = vsel %vm731, %v765, 0.0
    %v781 = vsel %vm731, %v767, 0.0
    %v782 = vadd.f32 %v780, %v781
    %v783 = vsel %vm731, %v769, 0.0
    %v784 = vadd.f32 %v782, %v783
    %v785 = vsel %vm731, %v771, 0.0
    %v786 = vadd.f32 %v784, %v785
    %v787 = vsel %vm731, %v773, 0.0
    %v788 = vadd.f32 %v786, %v787
    %v789 = vsel %vm731, %v775, 0.0
    %v790 = vadd.f32 %v788, %v789
    %v791 = vsel %vm731, %v777, 0.0
    %v792 = vadd.f32 %v790, %v791
    %v793 = vsel %vm731, %v779, 0.0
    %v794 = vadd.f32 %v792, %v793
    %795 = vadd.xlane.f32.xlu0 %v794
    %v796 = vpop.xlane.xlu0 %795
    %v797 = vrot.slane %v796, 4
    %v798 = vadd.f32 %v796, %v797
    %v799 = vrot.slane %v798, 2
    %v800 = vadd.f32 %v798, %v799
    %v801 = vrot.slane %v800, 1
    %v802 = vadd.f32 %v800, %v801
    %s803 = vtos %v802
    %s804 = ssub.f32 %s755, %s803
    %s805 = ssub.f32 0.0, %s804
    %s806 = smul.f32 %s805, 0.015625
    %v807 = vpack.c.bf16 %v622, %v620
    %v808 = vpack.c.bf16 %v626, %v624
    %v809 = vpack.c.bf16 %v630, %v628
    %v810 = vpack.c.bf16 %v634, %v632
    %v811 = vld [vmem:[%s6] sm:$0xf]
    %v812 = vld [vmem:[%s6 + $0x4] sm:$0xf]
    %v813 = vld [vmem:[%s6 + $0x8] sm:$0xf]
    %v814 = vld [vmem:[%s6 + $0xc] sm:$0xf]
    %v815 = vld [vmem:[%s6 + $0x10] sm:$0xf]
    %v816 = vld [vmem:[%s6 + $0x14] sm:$0xf]
    %v817 = vld [vmem:[%s6 + $0x18] sm:$0xf]
    %v818 = vld [vmem:[%s6 + $0x1c] sm:$0xf]
    %v827 = vunpack.c.l.b16 %v811
    %v828 = vunpack.c.l.b16 %v812
    %v829 = vunpack.c.l.b16 %v813
    %v830 = vunpack.c.l.b16 %v814
    %v831 = vunpack.c.l.b16 %v815
    %v832 = vunpack.c.l.b16 %v816
    %v833 = vunpack.c.l.b16 %v817
    %v834 = vunpack.c.l.b16 %v818
    %v835 = vpack.c.b16 %v828, %v827
    %v836 = vpack.c.b16 %v830, %v829
    %v837 = vpack.c.b16 %v832, %v831
    %v838 = vpack.c.b16 %v834, %v833
    %v843 = vmul.bf16 %v807, %v835
    %v844 = vmul.bf16 %v808, %v836
    %v845 = vmul.bf16 %v809, %v837
    %v846 = vmul.bf16 %v810, %v838
    %v848 = vsel %vm373, 1065369472, 0
    %850 = vmatprep.subr.bf16.mxu0 0
    %851 = vmatpush1.bf16.msra.mxu0 %v843
    %852 = vmatprep.subr.bf16.mxu0 0
    %853 = vmatpush1.bf16.msra.mxu0 %v844
    %854 = vmatprep.subr.bf16.mxu0 0
    %855 = vmatpush1.bf16.msra.mxu0 %v845
    %856 = vmatprep.subr.bf16.mxu0 0
    %857 = vmatpush1.bf16.msra.mxu0 %v846
    %858 = vmatprep.subr.bf16.mxu0 0
    %859 = vmatpush1.bf16.msra.mxu0 0
    %860 = vmatprep.subr.bf16.mxu0 0
    %861 = vmatpush1.bf16.msra.mxu0 0
    %862 = vmatprep.subr.bf16.mxu0 0
    %863 = vmatpush1.bf16.msra.mxu0 0
    %864 = vmatprep.subr.bf16.mxu0 0
    %865 = vmatpush1.bf16.msra.mxu0 0
    %866 = vmatprep.subr.bf16.mxu0 0
    %867 = vmatpush1.bf16.msra.mxu0 0
    %868 = vmatprep.subr.bf16.mxu0 0
    %869 = vmatpush1.bf16.msra.mxu0 0
    %870 = vmatprep.subr.bf16.mxu0 0
    %871 = vmatpush1.bf16.msra.mxu0 0
    %872 = vmatprep.subr.bf16.mxu0 0
    %873 = vmatpush1.bf16.msra.mxu0 0
    %874 = vmatprep.subr.bf16.mxu0 0
    %875 = vmatpush1.bf16.msra.mxu0 0
    %876 = vmatprep.subr.bf16.mxu0 0
    %877 = vmatpush1.bf16.msra.mxu0 0
    %878 = vmatprep.subr.bf16.mxu0 0
    %879 = vmatpush1.bf16.msra.mxu0 0
    %880 = vmatprep.subr.bf16.mxu0 0
    %881 = vmatpush1.bf16.msra.mxu0 0
    %882 = vmatprep.mubr.bf16.mxu0 0
    %883 = vmatmul.mubr.bf16.gmra.mrb[0].mxu0 %v848
    %v884 = vpop.f32.mrb[0].mxu0
    %v885 = vadd.f32 1e-08, %v884
    %v886 = vpop.f32.mrb[0].mxu0
    %v887 = vpop.f32.mrb[0].mxu0
    %v888 = vpop.f32.mrb[0].mxu0
    %889 = vdwg.mxu0
    %v890 = vlog2.pop %v885
    %v891 = vmul.f32 %v890, 0.6931472
    %vm892 = vcmask 516096
    %v893 = vsel %vm892, %v891, 0.0
    %894 = vadd.xlane.f32.xlu0 %v893
    %v895 = vpop.xlane.xlu0 %894
    %v896 = vrot.slane %v895, 4
    %v897 = vadd.f32 %v895, %v896
    %v898 = vrot.slane %v897, 2
    %v899 = vadd.f32 %v897, %v898
    %v900 = vrot.slane %v899, 1
    %v901 = vadd.f32 %v899, %v900
    %s902 = vtos %v901
    %903 = vmatprep.subr.bf16.mxu0 0
    %904 = vmatpush1.bf16.msra.mxu0 %v807
    %905 = vmatprep.subr.bf16.mxu0 0
    %906 = vmatpush1.bf16.msra.mxu0 %v808
    %907 = vmatprep.subr.bf16.mxu0 0
    %908 = vmatpush1.bf16.msra.mxu0 %v809
    %909 = vmatprep.subr.bf16.mxu0 0
    %910 = vmatpush1.bf16.msra.mxu0 %v810
    %911 = vmatprep.subr.bf16.mxu0 0
    %912 = vmatpush1.bf16.msra.mxu0 0
    %913 = vmatprep.subr.bf16.mxu0 0
    %914 = vmatpush1.bf16.msra.mxu0 0
    %915 = vmatprep.subr.bf16.mxu0 0
    %916 = vmatpush1.bf16.msra.mxu0 0
    %917 = vmatprep.subr.bf16.mxu0 0
    %918 = vmatpush1.bf16.msra.mxu0 0
    %919 = vmatprep.subr.bf16.mxu0 0
    %920 = vmatpush1.bf16.msra.mxu0 0
    %921 = vmatprep.subr.bf16.mxu0 0
    %922 = vmatpush1.bf16.msra.mxu0 0
    %923 = vmatprep.subr.bf16.mxu0 0
    %924 = vmatpush1.bf16.msra.mxu0 0
    %925 = vmatprep.subr.bf16.mxu0 0
    %926 = vmatpush1.bf16.msra.mxu0 0
    %927 = vmatprep.subr.bf16.mxu0 0
    %928 = vmatpush1.bf16.msra.mxu0 0
    %929 = vmatprep.subr.bf16.mxu0 0
    %930 = vmatpush1.bf16.msra.mxu0 0
    %931 = vmatprep.subr.bf16.mxu0 0
    %932 = vmatpush1.bf16.msra.mxu0 0
    %933 = vmatprep.subr.bf16.mxu0 0
    %934 = vmatpush1.bf16.msra.mxu0 0
    %935 = vmatprep.mubr.bf16.mxu0 0
    %936 = vmatmul.mubr.bf16.gmra.mrb[0].mxu0 %v848
    %v937 = vpop.f32.mrb[0].mxu0
    %v938 = vadd.f32 1e-08, %v937
    %v939 = vpop.f32.mrb[0].mxu0
    %v940 = vpop.f32.mrb[0].mxu0
    %v941 = vpop.f32.mrb[0].mxu0
    %942 = vdwg.mxu0
    %v943 = vlog2.pop %v938
    %v944 = vmul.f32 %v943, 0.6931472
    %v945 = vsel %vm892, %v944, 0.0
    %946 = vadd.xlane.f32.xlu0 %v945
    %v947 = vpop.xlane.xlu0 %946
    %v948 = vrot.slane %v947, 4
    %v949 = vadd.f32 %v947, %v948
    %v950 = vrot.slane %v949, 2
    %v951 = vadd.f32 %v949, %v950
    %v952 = vrot.slane %v951, 1
    %v953 = vadd.f32 %v951, %v952
    %s954 = vtos %v953
    %s955 = ssub.f32 %s902, %s954
    %s956 = ssub.f32 0.0, %s955
    %s957 = smul.f32 %s956, 0.015625
    %s958 = smul.f32 %s806, 0.5
    %s959 = smul.f32 %s957, 0.5
    %s960 = sadd.f32 %s958, %s959
    %v961 = vstv %s960
    %vm962 = vcmask 0
    %963 = vst.msk [vmem:[#allocation2] sm:$0x1] %vm962, %v961
    // Predicated region
    $region30: #{heco_forward.3} parent=1 // pred_check
      _
    $region31: #{heco_forward.3} parent=1 // pred_check_branch
      %965 = sbr.rel (0) target = $region33
    $region32: #{heco_forward.3} parent=1 // pred_region
      %s967 = ssub.s32 16, 16
      %968 = vsyncadd [#allocation3], %s967
      %s970 = sshll.u32 [#allocation2], 4
      %s971 = int_to_ptr.vmem [resolvable:$true] %s970
      %973 = dma.vmem_to_hbm [thread:$0]  %s971, 16, %s7, [#allocation3]
    $region33: #{heco_forward.3} parent=1 // pred_fallthru
      _
    // Predicated region
    $region34: #{heco_forward.3} parent=1 // pred_check
      _
    $region35: #{heco_forward.3} parent=1 // pred_check_branch
      %975 = sbr.rel (0) target = $region37
    $region36: #{heco_forward.3} parent=1 // pred_region
      %976 = dma.done [#allocation3], 16
    $region37: #{heco_forward.3} parent=1 // pred_fallthru
      _
    %977 = vsyncpa [#allocation3], 1

// kernel: heco_forward.2
$region0: #{heco_forward.2}
  #allocation0 [shape = 'u32[]', space=smem, size = 0x4, offset = 0x4, fixed_abs, tag = 'smem constant byte address 0x4 - core index']
  #allocation1 [shape = 'u32[144,128]{1,0:T(1,128)}', space=vmem, size = 0x12000, scoped, tag = 'internal scratch']
  %s0 = inlined_call_operand.vmem [shape: bf16[64,48], index: 0, kind: input, shape index: {}]
  %s1 = inlined_call_operand.vmem [shape: bf16[32,40], index: 1, kind: input, shape index: {}]
  %s2 = inlined_call_operand.vmem [shape: bf16[16,24], index: 2, kind: input, shape index: {}]
  %s3 = inlined_call_operand.vmem [shape: bf16[48,64], index: 3, kind: input, shape index: {}]
  %s4 = inlined_call_operand.vmem [shape: bf16[40,64], index: 4, kind: input, shape index: {}]
  %s5 = inlined_call_operand.vmem [shape: bf16[24,64], index: 5, kind: input, shape index: {}]
  %s6 = inlined_call_operand.vmem [shape: f32[3,64], index: 6, kind: input, shape index: {}]
  %s7 = inlined_call_operand.vmem [shape: bf16[2,64,64], index: 7, kind: input, shape index: {}]
  %s8 = inlined_call_operand.vmem [shape: bf16[2,64,64], index: 8, kind: input, shape index: {}]
  %s9 = inlined_call_operand.vmem [shape: f32[2,64], index: 9, kind: input, shape index: {}]
  %s10 = inlined_call_operand.vmem [shape: bf16[64,64], index: 10, kind: input, shape index: {}]
  %s11 = inlined_call_operand.vmem [shape: f32[1,64], index: 11, kind: input, shape index: {}]
  %s12 = inlined_call_operand.vmem [shape: f32[1,64], index: 12, kind: input, shape index: {}]
  %s13 = inlined_call_operand.vmem [shape: bf16[64,32], index: 13, kind: input, shape index: {}]
  %s14 = inlined_call_operand.vmem [shape: bf16[64,16], index: 14, kind: input, shape index: {}]
  %s15 = inlined_call_operand.vmem [shape: bf16[64,64], index: 15, kind: input, shape index: {}]
  %s16 = inlined_call_operand.vmem [shape: f32[1,64], index: 16, kind: input, shape index: {}]
  %s17 = inlined_call_operand.vmem [shape: f32[1,64], index: 17, kind: input, shape index: {}]
  %s18 = inlined_call_operand.vmem [shape: f32[64,128], index: 18, kind: output, shape index: {}]
  %s19 = sld [smem:[#allocation0]]
  $region82: #{heco_forward.2} parent=0
    _
  %s21 = ssub.s32 1, %s19
  %s22 = scalar_select 0, %s21, %s19
  // Predicated region
  $region2: #{heco_forward.2} parent=0 // pred_check
    _
  $region3: #{heco_forward.2} parent=0 // pred_check_branch
    %24 = sbr.rel (0) target = $region5
  $region4: #{heco_forward.2} parent=0 // pred_region
    _
  $region5: #{heco_forward.2} parent=0 // pred_fallthru
    _
  // Predicated region
  $region6: #{heco_forward.2} parent=0 // pred_check
    _
  $region7: #{heco_forward.2} parent=0 // pred_check_branch
    %26 = sbr.rel (0) target = $region9
  $region8: #{heco_forward.2} parent=0 // pred_region
    _
  $region9: #{heco_forward.2} parent=0 // pred_fallthru
    _
  // Predicated region
  $region10: #{heco_forward.2} parent=0 // pred_check
    _
  $region11: #{heco_forward.2} parent=0 // pred_check_branch
    %28 = sbr.rel (0) target = $region13
  $region12: #{heco_forward.2} parent=0 // pred_region
    _
  $region13: #{heco_forward.2} parent=0 // pred_fallthru
    _
  // Predicated region
  $region14: #{heco_forward.2} parent=0 // pred_check
    _
  $region15: #{heco_forward.2} parent=0 // pred_check_branch
    %30 = sbr.rel (0) target = $region17
  $region16: #{heco_forward.2} parent=0 // pred_region
    _
  $region17: #{heco_forward.2} parent=0 // pred_fallthru
    _
  // Predicated region
  $region18: #{heco_forward.2} parent=0 // pred_check
    _
  $region19: #{heco_forward.2} parent=0 // pred_check_branch
    %32 = sbr.rel (0) target = $region21
  $region20: #{heco_forward.2} parent=0 // pred_region
    _
  $region21: #{heco_forward.2} parent=0 // pred_fallthru
    _
  // Predicated region
  $region22: #{heco_forward.2} parent=0 // pred_check
    _
  $region23: #{heco_forward.2} parent=0 // pred_check_branch
    %34 = sbr.rel (0) target = $region25
  $region24: #{heco_forward.2} parent=0 // pred_region
    _
  $region25: #{heco_forward.2} parent=0 // pred_fallthru
    _
  // Predicated region
  $region26: #{heco_forward.2} parent=0 // pred_check
    _
  $region27: #{heco_forward.2} parent=0 // pred_check_branch
    %36 = sbr.rel (0) target = $region29
  $region28: #{heco_forward.2} parent=0 // pred_region
    _
  $region29: #{heco_forward.2} parent=0 // pred_fallthru
    _
  // Predicated region
  $region30: #{heco_forward.2} parent=0 // pred_check
    _
  $region31: #{heco_forward.2} parent=0 // pred_check_branch
    %38 = sbr.rel (0) target = $region33
  $region32: #{heco_forward.2} parent=0 // pred_region
    _
  $region33: #{heco_forward.2} parent=0 // pred_fallthru
    _
  // Predicated region
  $region34: #{heco_forward.2} parent=0 // pred_check
    _
  $region35: #{heco_forward.2} parent=0 // pred_check_branch
    %40 = sbr.rel (0) target = $region37
  $region36: #{heco_forward.2} parent=0 // pred_region
    _
  $region37: #{heco_forward.2} parent=0 // pred_fallthru
    _
  // Predicated region
  $region38: #{heco_forward.2} parent=0 // pred_check
    _
  $region39: #{heco_forward.2} parent=0 // pred_check_branch
    %42 = sbr.rel (0) target = $region41
  $region40: #{heco_forward.2} parent=0 // pred_region
    _
  $region41: #{heco_forward.2} parent=0 // pred_fallthru
    _
  // Predicated region
  $region42: #{heco_forward.2} parent=0 // pred_check
    _
  $region43: #{heco_forward.2} parent=0 // pred_check_branch
    %44 = sbr.rel (0) target = $region45
  $region44: #{heco_forward.2} parent=0 // pred_region
    _
  $region45: #{heco_forward.2} parent=0 // pred_fallthru
    _
  // Predicated region
  $region46: #{heco_forward.2} parent=0 // pred_check
    _
  $region47: #{heco_forward.2} parent=0 // pred_check_branch
    %46 = sbr.rel (0) target = $region49
  $region48: #{heco_forward.2} parent=0 // pred_region
    _
  $region49: #{heco_forward.2} parent=0 // pred_fallthru
    _
  // Predicated region
  $region50: #{heco_forward.2} parent=0 // pred_check
    _
  $region51: #{heco_forward.2} parent=0 // pred_check_branch
    %48 = sbr.rel (0) target = $region53
  $region52: #{heco_forward.2} parent=0 // pred_region
    _
  $region53: #{heco_forward.2} parent=0 // pred_fallthru
    _
  // Predicated region
  $region54: #{heco_forward.2} parent=0 // pred_check
    _
  $region55: #{heco_forward.2} parent=0 // pred_check_branch
    %50 = sbr.rel (0) target = $region57
  $region56: #{heco_forward.2} parent=0 // pred_region
    _
  $region57: #{heco_forward.2} parent=0 // pred_fallthru
    _
  // Predicated region
  $region58: #{heco_forward.2} parent=0 // pred_check
    _
  $region59: #{heco_forward.2} parent=0 // pred_check_branch
    %52 = sbr.rel (0) target = $region61
  $region60: #{heco_forward.2} parent=0 // pred_region
    _
  $region61: #{heco_forward.2} parent=0 // pred_fallthru
    _
  // Predicated region
  $region62: #{heco_forward.2} parent=0 // pred_check
    _
  $region63: #{heco_forward.2} parent=0 // pred_check_branch
    %54 = sbr.rel (0) target = $region65
  $region64: #{heco_forward.2} parent=0 // pred_region
    _
  $region65: #{heco_forward.2} parent=0 // pred_fallthru
    _
  // Predicated region
  $region66: #{heco_forward.2} parent=0 // pred_check
    _
  $region67: #{heco_forward.2} parent=0 // pred_check_branch
    %56 = sbr.rel (0) target = $region69
  $region68: #{heco_forward.2} parent=0 // pred_region
    _
  $region69: #{heco_forward.2} parent=0 // pred_fallthru
    _
  // Predicated region
  $region70: #{heco_forward.2} parent=0 // pred_check
    _
  $region71: #{heco_forward.2} parent=0 // pred_check_branch
    %58 = sbr.rel (0) target = $region73
  $region72: #{heco_forward.2} parent=0 // pred_region
    _
  $region73: #{heco_forward.2} parent=0 // pred_fallthru
    _
  %v60 = vld [vmem:[%s0] sm:$0xf]
  %v61 = vld [vmem:[%s0 + $0x4] sm:$0xf]
  %v62 = vld [vmem:[%s0 + $0x8] sm:$0xf]
  %v63 = vld [vmem:[%s0 + $0xc] sm:$0xf]
  %v64 = vld [vmem:[%s0 + $0x10] sm:$0xf]
  %v65 = vld [vmem:[%s0 + $0x14] sm:$0xf]
  %v66 = vld [vmem:[%s0 + $0x18] sm:$0xf]
  %v67 = vld [vmem:[%s0 + $0x1c] sm:$0xf]
  %v68 = vld [vmem:[%s3] sm:$0xf]
  %v69 = vld [vmem:[%s3 + $0x4] sm:$0xf]
  %v70 = vld [vmem:[%s3 + $0x8] sm:$0xf]
  %v71 = vld [vmem:[%s3 + $0xc] sm:$0xf]
  %v72 = vld [vmem:[%s3 + $0x10] sm:$0xf]
  %v73 = vld [vmem:[%s3 + $0x14] sm:$0xf]
  %v74 = vld [vmem:[%s6] sm:$0x1]
  %v75 = vlaneseq
  %v76 = vshrl.u32 %v75, 7
  %v77 = vsub.s32 0, %v76
  %v78 = vrot.slane %v74, %v77
  %v87 = vunpack.c.l.b16 %v60
  %v88 = vunpack.c.l.b16 %v61
  %v89 = vunpack.c.l.b16 %v62
  %v90 = vunpack.c.l.b16 %v63
  %v91 = vunpack.c.l.b16 %v64
  %v92 = vunpack.c.l.b16 %v65
  %v93 = vunpack.c.l.b16 %v66
  %v94 = vunpack.c.l.b16 %v67
  %v95 = vpack.c.b16 %v88, %v87
  %v96 = vpack.c.b16 %v90, %v89
  %v97 = vpack.c.b16 %v92, %v91
  %v98 = vpack.c.b16 %v94, %v93
  %v105 = vunpack.c.l.b16 %v68
  %v106 = vunpack.c.l.b16 %v69
  %v107 = vunpack.c.l.b16 %v70
  %v108 = vunpack.c.l.b16 %v71
  %v109 = vunpack.c.l.b16 %v72
  %v110 = vunpack.c.l.b16 %v73
  %v111 = vpack.c.b16 %v106, %v105
  %v112 = vpack.c.b16 %v108, %v107
  %v113 = vpack.c.b16 %v110, %v109
  %vm117 = vcmask 392192
  %v119 = vsel %vm117, %v95, 0
  %v122 = vsel %vm117, %v96, 0
  %v125 = vsel %vm117, %v97, 0
  %v128 = vsel %vm117, %v98, 0
  %130 = vmatprep.subr.bf16.mxu0 0
  %131 = vmatpush1.bf16.msra.mxu0 %v111
  %132 = vmatprep.subr.bf16.mxu0 0
  %133 = vmatpush1.bf16.msra.mxu0 %v112
  %134 = vmatprep.subr.bf16.mxu0 0
  %135 = vmatpush1.bf16.msra.mxu0 %v113
  %136 = vmatprep.subr.bf16.mxu0 0
  %137 = vmatpush1.bf16.msra.mxu0 0
  %138 = vmatprep.subr.bf16.mxu0 0
  %139 = vmatpush1.bf16.msra.mxu0 0
  %140 = vmatprep.subr.bf16.mxu0 0
  %141 = vmatpush1.bf16.msra.mxu0 0
  %142 = vmatprep.subr.bf16.mxu0 0
  %143 = vmatpush1.bf16.msra.mxu0 0
  %144 = vmatprep.subr.bf16.mxu0 0
  %145 = vmatpush1.bf16.msra.mxu0 0
  %146 = vmatprep.subr.bf16.mxu0 0
  %147 = vmatpush1.bf16.msra.mxu0 0
  %148 = vmatprep.subr.bf16.mxu0 0
  %149 = vmatpush1.bf16.msra.mxu0 0
  %150 = vmatprep.subr.bf16.mxu0 0
  %151 = vmatpush1.bf16.msra.mxu0 0
  %152 = vmatprep.subr.bf16.mxu0 0
  %153 = vmatpush1.bf16.msra.mxu0 0
  %154 = vmatprep.subr.bf16.mxu0 0
  %155 = vmatpush1.bf16.msra.mxu0 0
  %156 = vmatprep.subr.bf16.mxu0 0
  %157 = vmatpush1.bf16.msra.mxu0 0
  %158 = vmatprep.subr.bf16.mxu0 0
  %159 = vmatpush1.bf16.msra.mxu0 0
  %160 = vmatprep.subr.bf16.mxu0 0
  %161 = vmatpush1.bf16.msra.mxu0 0
  %162 = vmatprep.mubr.bf16.mxu0 0
  %163 = vmatmul.mubr.bf16.gmra.mrb[0].mxu0 %v119
  %v164 = vpop.f32.mrb[0].mxu0
  %v165 = vadd.f32 %v78, %v164
  %v166 = vpop.f32.mrb[0].mxu0
  %v167 = vpop.f32.mrb[0].mxu0
  %v168 = vadd.f32 %v78, %v167
  %v169 = vpop.f32.mrb[0].mxu0
  %170 = vmatprep.mubr.bf16.mxu0 0
  %171 = vmatmul.mubr.bf16.gmra.mrb[0].mxu0 %v122
  %v172 = vpop.f32.mrb[0].mxu0
  %v173 = vadd.f32 %v78, %v172
  %v174 = vpop.f32.mrb[0].mxu0
  %v175 = vpop.f32.mrb[0].mxu0
  %v176 = vadd.f32 %v78, %v175
  %v177 = vpop.f32.mrb[0].mxu0
  %178 = vmatprep.mubr.bf16.mxu0 0
  %179 = vmatmul.mubr.bf16.gmra.mrb[0].mxu0 %v125
  %v180 = vpop.f32.mrb[0].mxu0
  %v181 = vadd.f32 %v78, %v180
  %v182 = vpop.f32.mrb[0].mxu0
  %v183 = vpop.f32.mrb[0].mxu0
  %v184 = vadd.f32 %v78, %v183
  %v185 = vpop.f32.mrb[0].mxu0
  %186 = vmatprep.mubr.bf16.mxu0 0
  %187 = vmatmul.mubr.bf16.gmra.mrb[0].mxu0 %v128
  %v188 = vpop.f32.mrb[0].mxu0
  %v189 = vadd.f32 %v78, %v188
  %v190 = vpop.f32.mrb[0].mxu0
  %v191 = vpop.f32.mrb[0].mxu0
  %v192 = vadd.f32 %v78, %v191
  %v193 = vpop.f32.mrb[0].mxu0
  %194 = vdwg.mxu0
  %vm195 = vcmp.gt.f32.partialorder %v165, 0.0
  %vm196 = vcmp.gt.f32.partialorder %v168, 0.0
  %vm197 = vcmp.gt.f32.partialorder %v173, 0.0
  %vm198 = vcmp.gt.f32.partialorder %v176, 0.0
  %vm199 = vcmp.gt.f32.partialorder %v181, 0.0
  %vm200 = vcmp.gt.f32.partialorder %v184, 0.0
  %vm201 = vcmp.gt.f32.partialorder %v189, 0.0
  %vm202 = vcmp.gt.f32.partialorder %v192, 0.0
  %v203 = vmin.f32 %v165, 0.0
  %v204 = vmin.f32 %v168, 0.0
  %v205 = vmin.f32 %v173, 0.0
  %v206 = vmin.f32 %v176, 0.0
  %v207 = vmin.f32 %v181, 0.0
  %v208 = vmin.f32 %v184, 0.0
  %v209 = vmin.f32 %v189, 0.0
  %v210 = vmin.f32 %v192, 0.0
  %v211 = vmul.f32 %v203, 1.442695
  %v212 = vpow.pop %v211
  %v213 = vmul.f32 %v204, 1.442695
  %v214 = vpow.pop %v213
  %v215 = vmul.f32 %v205, 1.442695
  %v216 = vpow.pop %v215
  %v217 = vmul.f32 %v206, 1.442695
  %v218 = vpow.pop %v217
  %v219 = vmul.f32 %v207, 1.442695
  %v220 = vpow.pop %v219
  %v221 = vmul.f32 %v208, 1.442695
  %v222 = vpow.pop %v221
  %v223 = vmul.f32 %v209, 1.442695
  %v224 = vpow.pop %v223
  %v225 = vmul.f32 %v210, 1.442695
  %v226 = vpow.pop %v225
  %v227 = vsub.f32 %v212, 1.0
  %v228 = vsub.f32 %v214, 1.0
  %v229 = vsub.f32 %v216, 1.0
  %v230 = vsub.f32 %v218, 1.0
  %v231 = vsub.f32 %v220, 1.0
  %v232 = vsub.f32 %v222, 1.0
  %v233 = vsub.f32 %v224, 1.0
  %v234 = vsub.f32 %v226, 1.0
  %v235 = vsel %vm195, %v165, %v227
  %v236 = vsel %vm196, %v168, %v228
  %v237 = vsel %vm197, %v173, %v229
  %v238 = vsel %vm198, %v176, %v230
  %v239 = vsel %vm199, %v181, %v231
  %v240 = vsel %vm200, %v184, %v232
  %v241 = vsel %vm201, %v189, %v233
  %v242 = vsel %vm202, %v192, %v234
  %v243 = vld [vmem:[%s1] sm:$0xf]
  %v244 = vld [vmem:[%s1 + $0x4] sm:$0xf]
  %v245 = vld [vmem:[%s1 + $0x8] sm:$0xf]
  %v246 = vld [vmem:[%s1 + $0xc] sm:$0xf]
  %v247 = vld [vmem:[%s4] sm:$0xf]
  %v248 = vld [vmem:[%s4 + $0x4] sm:$0xf]
  %v249 = vld [vmem:[%s4 + $0x8] sm:$0xf]
  %v250 = vld [vmem:[%s4 + $0xc] sm:$0xf]
  %v251 = vld [vmem:[%s4 + $0x10] sm:$0xf]
  %v252 = vld [vmem:[%s6 + $0x1] sm:$0x1]
  %v253 = vlaneseq
  %v254 = vshrl.u32 %v253, 7
  %v255 = vsub.s32 0, %v254
  %v256 = vrot.slane %v252, %v255
  %v261 = vunpack.c.l.b16 %v243
  %v262 = vunpack.c.l.b16 %v244
  %v263 = vunpack.c.l.b16 %v245
  %v264 = vunpack.c.l.b16 %v246
  %v265 = vpack.c.b16 %v262, %v261
  %v266 = vpack.c.b16 %v264, %v263
  %v272 = vunpack.c.l.b16 %v247
  %v273 = vunpack.c.l.b16 %v248
  %v274 = vunpack.c.l.b16 %v249
  %v275 = vunpack.c.l.b16 %v250
  %v276 = vunpack.c.l.b16 %v251
  %v277 = vpack.c.b16 %v273, %v272
  %v278 = vpack.c.b16 %v275, %v274
  %v279 = vpack.c.b16 %v276, %v276
  %vm282 = vcmask 326656
  %v284 = vsel %vm282, %v265, 0
  %v287 = vsel %vm282, %v266, 0
  %vm289 = vcmask 1043456
  %v291 = vsel %vm289, %v279, 0
  %293 = vmatprep.subr.bf16.mxu0 0
  %294 = vmatpush1.bf16.msra.mxu0 %v277
  %295 = vmatprep.subr.bf16.mxu0 0
  %296 = vmatpush1.bf16.msra.mxu0 %v278
  %297 = vmatprep.subr.bf16.mxu0 0
  %298 = vmatpush1.bf16.msra.mxu0 %v291
  %299 = vmatprep.subr.bf16.mxu0 0
  %300 = vmatpush1.bf16.msra.mxu0 0
  %301 = vmatprep.subr.bf16.mxu0 0
  %302 = vmatpush1.bf16.msra.mxu0 0
  %303 = vmatprep.subr.bf16.mxu0 0
  %304 = vmatpush1.bf16.msra.mxu0 0
  %305 = vmatprep.subr.bf16.mxu0 0
  %306 = vmatpush1.bf16.msra.mxu0 0
  %307 = vmatprep.subr.bf16.mxu0 0
  %308 = vmatpush1.bf16.msra.mxu0 0
  %309 = vmatprep.subr.bf16.mxu0 0
  %310 = vmatpush1.bf16.msra.mxu0 0
  %311 = vmatprep.subr.bf16.mxu0 0
  %312 = vmatpush1.bf16.msra.mxu0 0
  %313 = vmatprep.subr.bf16.mxu0 0
  %314 = vmatpush1.bf16.msra.mxu0 0
  %315 = vmatprep.subr.bf16.mxu0 0
  %316 = vmatpush1.bf16.msra.mxu0 0
  %317 = vmatprep.subr.bf16.mxu0 0
  %318 = vmatpush1.bf16.msra.mxu0 0
  %319 = vmatprep.subr.bf16.mxu0 0
  %320 = vmatpush1.bf16.msra.mxu0 0
  %321 = vmatprep.subr.bf16.mxu0 0
  %322 = vmatpush1.bf16.msra.mxu0 0
  %323 = vmatprep.subr.bf16.mxu0 0
  %324 = vmatpush1.bf16.msra.mxu0 0
  %325 = vmatprep.mubr.bf16.mxu0 0
  %326 = vmatmul.mubr.bf16.gmra.mrb[0].mxu0 %v284
  %v327 = vpop.f32.mrb[0].mxu0
  %v328 = vadd.f32 %v256, %v327
  %v329 = vpop.f32.mrb[0].mxu0
  %v330 = vpop.f32.mrb[0].mxu0
  %v331 = vadd.f32 %v256, %v330
  %v332 = vpop.f32.mrb[0].mxu0
  %333 = vmatprep.mubr.bf16.mxu0 0
  %334 = vmatmul.mubr.bf16.gmra.mrb[0].mxu0 %v287
  %v335 = vpop.f32.mrb[0].mxu0
  %v336 = vadd.f32 %v256, %v335
  %v337 = vpop.f32.mrb[0].mxu0
  %v338 = vpop.f32.mrb[0].mxu0
  %v339 = vadd.f32 %v256, %v338
  %v340 = vpop.f32.mrb[0].mxu0
  %341 = vdwg.mxu0
  %vm342 = vcmp.gt.f32.partialorder %v328, 0.0
  %vm343 = vcmp.gt.f32.partialorder %v331, 0.0
  %vm344 = vcmp.gt.f32.partialorder %v336, 0.0
  %vm345 = vcmp.gt.f32.partialorder %v339, 0.0
  %v346 = vmin.f32 %v328, 0.0
  %v347 = vmin.f32 %v331, 0.0
  %v348 = vmin.f32 %v336, 0.0
  %v349 = vmin.f32 %v339, 0.0
  %v350 = vmul.f32 %v346, 1.442695
  %v351 = vpow.pop %v350
  %v352 = vmul.f32 %v347, 1.442695
  %v353 = vpow.pop %v352
  %v354 = vmul.f32 %v348, 1.442695
  %v355 = vpow.pop %v354
  %v356 = vmul.f32 %v349, 1.442695
  %v357 = vpow.pop %v356
  %v358 = vsub.f32 %v351, 1.0
  %v359 = vsub.f32 %v353, 1.0
  %v360 = vsub.f32 %v355, 1.0
  %v361 = vsub.f32 %v357, 1.0
  %v362 = vsel %vm342, %v328, %v358
  %v363 = vsel %vm343, %v331, %v359
  %v364 = vsel %vm344, %v336, %v360
  %v365 = vsel %vm345, %v339, %v361
  %v366 = vld [vmem:[%s2] sm:$0xf]
  %v367 = vld [vmem:[%s2 + $0x4] sm:$0xf]
  %v368 = vld [vmem:[%s5] sm:$0xf]
  %v369 = vld [vmem:[%s5 + $0x4] sm:$0xf]
  %v370 = vld [vmem:[%s5 + $0x8] sm:$0xf]
  %v371 = vld [vmem:[%s6 + $0x2] sm:$0x1]
  %v372 = vlaneseq
  %v373 = vshrl.u32 %v372, 7
  %v374 = vsub.s32 0, %v373
  %v375 = vrot.slane %v371, %v374
  %v378 = vunpack.c.l.b16 %v366
  %v379 = vunpack.c.l.b16 %v367
  %v380 = vpack.c.b16 %v379, %v378
  %v384 = vunpack.c.l.b16 %v368
  %v385 = vunpack.c.l.b16 %v369
  %v386 = vunpack.c.l.b16 %v370
  %v387 = vpack.c.b16 %v385, %v384
  %v388 = vpack.c.b16 %v386, %v386
  %vm390 = vcmask 195584
  %v392 = vsel %vm390, %v380, 0
  %v395 = vsel %vm289, %v388, 0
  %397 = vmatprep.subr.bf16.mxu0 0
  %398 = vmatpush1.bf16.msra.mxu0 %v387
  %399 = vmatprep.subr.bf16.mxu0 0
  %400 = vmatpush1.bf16.msra.mxu0 %v395
  %401 = vmatprep.subr.bf16.mxu0 0
  %402 = vmatpush1.bf16.msra.mxu0 0
  %403 = vmatprep.subr.bf16.mxu0 0
  %404 = vmatpush1.bf16.msra.mxu0 0
  %405 = vmatprep.subr.bf16.mxu0 0
  %406 = vmatpush1.bf16.msra.mxu0 0
  %407 = vmatprep.subr.bf16.mxu0 0
  %408 = vmatpush1.bf16.msra.mxu0 0
  %409 = vmatprep.subr.bf16.mxu0 0
  %410 = vmatpush1.bf16.msra.mxu0 0
  %411 = vmatprep.subr.bf16.mxu0 0
  %412 = vmatpush1.bf16.msra.mxu0 0
  %413 = vmatprep.subr.bf16.mxu0 0
  %414 = vmatpush1.bf16.msra.mxu0 0
  %415 = vmatprep.subr.bf16.mxu0 0
  %416 = vmatpush1.bf16.msra.mxu0 0
  %417 = vmatprep.subr.bf16.mxu0 0
  %418 = vmatpush1.bf16.msra.mxu0 0
  %419 = vmatprep.subr.bf16.mxu0 0
  %420 = vmatpush1.bf16.msra.mxu0 0
  %421 = vmatprep.subr.bf16.mxu0 0
  %422 = vmatpush1.bf16.msra.mxu0 0
  %423 = vmatprep.subr.bf16.mxu0 0
  %424 = vmatpush1.bf16.msra.mxu0 0
  %425 = vmatprep.subr.bf16.mxu0 0
  %426 = vmatpush1.bf16.msra.mxu0 0
  %427 = vmatprep.subr.bf16.mxu0 0
  %428 = vmatpush1.bf16.msra.mxu0 0
  %429 = vmatprep.mubr.bf16.mxu0 0
  %430 = vmatmul.mubr.bf16.gmra.mrb[0].mxu0 %v392
  %v431 = vpop.f32.mrb[0].mxu0
  %v432 = vadd.f32 %v375, %v431
  %v433 = vpop.f32.mrb[0].mxu0
  %v434 = vpop.f32.mrb[0].mxu0
  %v435 = vadd.f32 %v375, %v434
  %v436 = vpop.f32.mrb[0].mxu0
  %437 = vdwg.mxu0
  %vm438 = vcmp.gt.f32.partialorder %v432, 0.0
  %vm439 = vcmp.gt.f32.partialorder %v435, 0.0
  %v440 = vmin.f32 %v432, 0.0
  %v441 = vmin.f32 %v435, 0.0
  %v442 = vmul.f32 %v440, 1.442695
  %v443 = vpow.pop %v442
  %v444 = vmul.f32 %v441, 1.442695
  %v445 = vpow.pop %v444
  %v446 = vsub.f32 %v443, 1.0
  %v447 = vsub.f32 %v445, 1.0
  %v448 = vsel %vm438, %v432, %v446
  %v449 = vsel %vm439, %v435, %v447
  %v450 = vpack.c.bf16 %v236, %v235
  %v451 = vpack.c.bf16 %v238, %v237
  %v452 = vpack.c.bf16 %v240, %v239
  %v453 = vpack.c.bf16 %v242, %v241
  %v454 = vld [vmem:[%s8] sm:$0xf]
  %v455 = vld [vmem:[%s8 + $0x4] sm:$0xf]
  %v456 = vld [vmem:[%s8 + $0x8] sm:$0xf]
  %v457 = vld [vmem:[%s8 + $0xc] sm:$0xf]
  %v458 = vld [vmem:[%s8 + $0x10] sm:$0xf]
  %v459 = vld [vmem:[%s8 + $0x14] sm:$0xf]
  %v460 = vld [vmem:[%s8 + $0x18] sm:$0xf]
  %v461 = vld [vmem:[%s8 + $0x1c] sm:$0xf]
  %v470 = vunpack.c.l.b16 %v454
  %v471 = vunpack.c.l.b16 %v455
  %v472 = vunpack.c.l.b16 %v456
  %v473 = vunpack.c.l.b16 %v457
  %v474 = vunpack.c.l.b16 %v458
  %v475 = vunpack.c.l.b16 %v459
  %v476 = vunpack.c.l.b16 %v460
  %v477 = vunpack.c.l.b16 %v461
  %v478 = vpack.c.b16 %v471, %v470
  %v479 = vpack.c.b16 %v473, %v472
  %v480 = vpack.c.b16 %v475, %v474
  %v481 = vpack.c.b16 %v477, %v476
  %vm486 = vcmask 523264
  %v488 = vsel %vm486, %v450, 0
  %v491 = vsel %vm486, %v451, 0
  %v494 = vsel %vm486, %v452, 0
  %v497 = vsel %vm486, %v453, 0
  %499 = vmatprep.subr.bf16.mxu0 0
  %500 = vmatpush1.bf16.msra.mxu0 %v478
  %501 = vmatprep.subr.bf16.mxu0 0
  %502 = vmatpush1.bf16.msra.mxu0 %v479
  %503 = vmatprep.subr.bf16.mxu0 0
  %504 = vmatpush1.bf16.msra.mxu0 %v480
  %505 = vmatprep.subr.bf16.mxu0 0
  %506 = vmatpush1.bf16.msra.mxu0 %v481
  %507 = vmatprep.subr.bf16.mxu0 0
  %508 = vmatpush1.bf16.msra.mxu0 0
  %509 = vmatprep.subr.bf16.mxu0 0
  %510 = vmatpush1.bf16.msra.mxu0 0
  %511 = vmatprep.subr.bf16.mxu0 0
  %512 = vmatpush1.bf16.msra.mxu0 0
  %513 = vmatprep.subr.bf16.mxu0 0
  %514 = vmatpush1.bf16.msra.mxu0 0
  %515 = vmatprep.subr.bf16.mxu0 0
  %516 = vmatpush1.bf16.msra.mxu0 0
  %517 = vmatprep.subr.bf16.mxu0 0
  %518 = vmatpush1.bf16.msra.mxu0 0
  %519 = vmatprep.subr.bf16.mxu0 0
  %520 = vmatpush1.bf16.msra.mxu0 0
  %521 = vmatprep.subr.bf16.mxu0 0
  %522 = vmatpush1.bf16.msra.mxu0 0
  %523 = vmatprep.subr.bf16.mxu0 0
  %524 = vmatpush1.bf16.msra.mxu0 0
  %525 = vmatprep.subr.bf16.mxu0 0
  %526 = vmatpush1.bf16.msra.mxu0 0
  %527 = vmatprep.subr.bf16.mxu0 0
  %528 = vmatpush1.bf16.msra.mxu0 0
  %529 = vmatprep.subr.bf16.mxu0 0
  %530 = vmatpush1.bf16.msra.mxu0 0
  %531 = vmatprep.mubr.bf16.mxu0 0
  %532 = vmatmul.mubr.bf16.gmra.mrb[0].mxu0 %v488
  %v533 = vpop.f32.mrb[0].mxu0
  %v534 = vadd.f32 0.0, %v533
  %v535 = vpop.f32.mrb[0].mxu0
  %v536 = vpop.f32.mrb[0].mxu0
  %v537 = vadd.f32 0.0, %v536
  %v538 = vpop.f32.mrb[0].mxu0
  %539 = vmatprep.mubr.bf16.mxu0 0
  %540 = vmatmul.mubr.bf16.gmra.mrb[0].mxu0 %v491
  %v541 = vpop.f32.mrb[0].mxu0
  %v542 = vadd.f32 0.0, %v541
  %v543 = vpop.f32.mrb[0].mxu0
  %v544 = vpop.f32.mrb[0].mxu0
  %v545 = vadd.f32 0.0, %v544
  %v546 = vpop.f32.mrb[0].mxu0
  %547 = vmatprep.mubr.bf16.mxu0 0
  %548 = vmatmul.mubr.bf16.gmra.mrb[0].mxu0 %v494
  %v549 = vpop.f32.mrb[0].mxu0
  %v550 = vadd.f32 0.0, %v549
  %v551 = vpop.f32.mrb[0].mxu0
  %v552 = vpop.f32.mrb[0].mxu0
  %v553 = vadd.f32 0.0, %v552
  %v554 = vpop.f32.mrb[0].mxu0
  %555 = vmatprep.mubr.bf16.mxu0 0
  %556 = vmatmul.mubr.bf16.gmra.mrb[0].mxu0 %v497
  %v557 = vpop.f32.mrb[0].mxu0
  %v558 = vadd.f32 0.0, %v557
  %v559 = vpop.f32.mrb[0].mxu0
  %v560 = vpop.f32.mrb[0].mxu0
  %v561 = vadd.f32 0.0, %v560
  %v562 = vpop.f32.mrb[0].mxu0
  %563 = vdwg.mxu0
  %v564 = vld [vmem:[%s7] sm:$0xf]
  %v565 = vld [vmem:[%s7 + $0x4] sm:$0xf]
  %v566 = vld [vmem:[%s7 + $0x8] sm:$0xf]
  %v567 = vld [vmem:[%s7 + $0xc] sm:$0xf]
  %v568 = vld [vmem:[%s7 + $0x10] sm:$0xf]
  %v569 = vld [vmem:[%s7 + $0x14] sm:$0xf]
  %v570 = vld [vmem:[%s7 + $0x18] sm:$0xf]
  %v571 = vld [vmem:[%s7 + $0x1c] sm:$0xf]
  %v572 = vpack.c.bf16 %v537, %v534
  %v573 = vpack.c.bf16 %v545, %v542
  %v574 = vpack.c.bf16 %v553, %v550
  %v575 = vpack.c.bf16 %v561, %v558
  %v576 = vld [vmem:[%s9] sm:$0x1]
  %v577 = vlaneseq
  %v578 = vshrl.u32 %v577, 7
  %v579 = vsub.s32 0, %v578
  %v580 = vrot.slane %v576, %v579
  %v589 = vunpack.c.l.b16 %v564
  %v590 = vunpack.c.l.b16 %v565
  %v591 = vunpack.c.l.b16 %v566
  %v592 = vunpack.c.l.b16 %v567
  %v593 = vunpack.c.l.b16 %v568
  %v594 = vunpack.c.l.b16 %v569
  %v595 = vunpack.c.l.b16 %v570
  %v596 = vunpack.c.l.b16 %v571
  %v597 = vpack.c.b16 %v590, %v589
  %v598 = vpack.c.b16 %v592, %v591
  %v599 = vpack.c.b16 %v594, %v593
  %v600 = vpack.c.b16 %v596, %v595
  %v602 = vsel %vm486, %v597, 0
  %v605 = vsel %vm486, %v598, 0
  %v608 = vsel %vm486, %v599, 0
  %v611 = vsel %vm486, %v600, 0
  %613 = vmatprep.subr.bf16.mxu0 0
  %614 = vmatpush1.bf16.msra.mxu0 %v572
  %615 = vmatprep.subr.bf16.mxu0 0
  %616 = vmatpush1.bf16.msra.mxu0 %v573
  %617 = vmatprep.subr.bf16.mxu0 0
  %618 = vmatpush1.bf16.msra.mxu0 %v574
  %619 = vmatprep.subr.bf16.mxu0 0
  %620 = vmatpush1.bf16.msra.mxu0 %v575
  %621 = vmatprep.subr.bf16.mxu0 0
  %622 = vmatpush1.bf16.msra.mxu0 0
  %623 = vmatprep.subr.bf16.mxu0 0
  %624 = vmatpush1.bf16.msra.mxu0 0
  %625 = vmatprep.subr.bf16.mxu0 0
  %626 = vmatpush1.bf16.msra.mxu0 0
  %627 = vmatprep.subr.bf16.mxu0 0
  %628 = vmatpush1.bf16.msra.mxu0 0
  %629 = vmatprep.subr.bf16.mxu0 0
  %630 = vmatpush1.bf16.msra.mxu0 0
  %631 = vmatprep.subr.bf16.mxu0 0
  %632 = vmatpush1.bf16.msra.mxu0 0
  %633 = vmatprep.subr.bf16.mxu0 0
  %634 = vmatpush1.bf16.msra.mxu0 0
  %635 = vmatprep.subr.bf16.mxu0 0
  %636 = vmatpush1.bf16.msra.mxu0 0
  %637 = vmatprep.subr.bf16.mxu0 0
  %638 = vmatpush1.bf16.msra.mxu0 0
  %639 = vmatprep.subr.bf16.mxu0 0
  %640 = vmatpush1.bf16.msra.mxu0 0
  %641 = vmatprep.subr.bf16.mxu0 0
  %642 = vmatpush1.bf16.msra.mxu0 0
  %643 = vmatprep.subr.bf16.mxu0 0
  %644 = vmatpush1.bf16.msra.mxu0 0
  %645 = vmatprep.mubr.bf16.mxu0 0
  %646 = vmatmul.mubr.bf16.gmra.mrb[0].mxu0 %v602
  %v647 = vpop.f32.mrb[0].mxu0
  %v648 = vadd.f32 %v580, %v647
  %v649 = vpop.f32.mrb[0].mxu0
  %v650 = vpop.f32.mrb[0].mxu0
  %v651 = vadd.f32 %v580, %v650
  %v652 = vpop.f32.mrb[0].mxu0
  %653 = vmatprep.mubr.bf16.mxu0 0
  %654 = vmatmul.mubr.bf16.gmra.mrb[0].mxu0 %v605
  %v655 = vpop.f32.mrb[0].mxu0
  %v656 = vadd.f32 %v580, %v655
  %v657 = vpop.f32.mrb[0].mxu0
  %v658 = vpop.f32.mrb[0].mxu0
  %v659 = vadd.f32 %v580, %v658
  %v660 = vpop.f32.mrb[0].mxu0
  %661 = vmatprep.mubr.bf16.mxu0 0
  %662 = vmatmul.mubr.bf16.gmra.mrb[0].mxu0 %v608
  %v663 = vpop.f32.mrb[0].mxu0
  %v664 = vadd.f32 %v580, %v663
  %v665 = vpop.f32.mrb[0].mxu0
  %v666 = vpop.f32.mrb[0].mxu0
  %v667 = vadd.f32 %v580, %v666
  %v668 = vpop.f32.mrb[0].mxu0
  %669 = vmatprep.mubr.bf16.mxu0 0
  %670 = vmatmul.mubr.bf16.gmra.mrb[0].mxu0 %v611
  %v671 = vpop.f32.mrb[0].mxu0
  %v672 = vadd.f32 %v580, %v671
  %v673 = vpop.f32.mrb[0].mxu0
  %v674 = vpop.f32.mrb[0].mxu0
  %v675 = vadd.f32 %v580, %v674
  %v676 = vpop.f32.mrb[0].mxu0
  %677 = vdwg.mxu0
  %vm678 = vcmp.gt.f32.partialorder %v648, 0.0
  %vm679 = vcmp.gt.f32.partialorder %v651, 0.0
  %vm680 = vcmp.gt.f32.partialorder %v656, 0.0
  %vm681 = vcmp.gt.f32.partialorder %v659, 0.0
  %vm682 = vcmp.gt.f32.partialorder %v664, 0.0
  %vm683 = vcmp.gt.f32.partialorder %v667, 0.0
  %vm684 = vcmp.gt.f32.partialorder %v672, 0.0
  %vm685 = vcmp.gt.f32.partialorder %v675, 0.0
  %v686 = vmul.f32 %v648, 0.25
  %v687 = vmul.f32 %v651, 0.25
  %v688 = vmul.f32 %v656, 0.25
  %v689 = vmul.f32 %v659, 0.25
  %v690 = vmul.f32 %v664, 0.25
  %v691 = vmul.f32 %v667, 0.25
  %v692 = vmul.f32 %v672, 0.25
  %v693 = vmul.f32 %v675, 0.25
  %v694 = vsel %vm678, %v648, %v686
  %v695 = vsel %vm679, %v651, %v687
  %v696 = vsel %vm680, %v656, %v688
  %v697 = vsel %vm681, %v659, %v689
  %v698 = vsel %vm682, %v664, %v690
  %v699 = vsel %vm683, %v667, %v691
  %v700 = vsel %vm684, %v672, %v692
  %v701 = vsel %vm685, %v675, %v693
  %s702 = scalar_lea.vmem %s8, 32
  %v703 = vld [vmem:[%s702] sm:$0xf]
  %v704 = vld [vmem:[%s702 + $0x4] sm:$0xf]
  %v705 = vld [vmem:[%s702 + $0x8] sm:$0xf]
  %v706 = vld [vmem:[%s702 + $0xc] sm:$0xf]
  %v707 = vld [vmem:[%s702 + $0x10] sm:$0xf]
  %v708 = vld [vmem:[%s702 + $0x14] sm:$0xf]
  %v709 = vld [vmem:[%s702 + $0x18] sm:$0xf]
  %v710 = vld [vmem:[%s702 + $0x1c] sm:$0xf]
  %v719 = vunpack.c.l.b16 %v703
  %v720 = vunpack.c.l.b16 %v704
  %v721 = vunpack.c.l.b16 %v705
  %v722 = vunpack.c.l.b16 %v706
  %v723 = vunpack.c.l.b16 %v707
  %v724 = vunpack.c.l.b16 %v708
  %v725 = vunpack.c.l.b16 %v709
  %v726 = vunpack.c.l.b16 %v710
  %v727 = vpack.c.b16 %v720, %v719
  %v728 = vpack.c.b16 %v722, %v721
  %v729 = vpack.c.b16 %v724, %v723
  %v730 = vpack.c.b16 %v726, %v725
  %735 = vmatprep.subr.bf16.mxu0 0
  %736 = vmatpush1.bf16.msra.mxu0 %v727
  %737 = vmatprep.subr.bf16.mxu0 0
  %738 = vmatpush1.bf16.msra.mxu0 %v728
  %739 = vmatprep.subr.bf16.mxu0 0
  %740 = vmatpush1.bf16.msra.mxu0 %v729
  %741 = vmatprep.subr.bf16.mxu0 0
  %742 = vmatpush1.bf16.msra.mxu0 %v730
  %743 = vmatprep.subr.bf16.mxu0 0
  %744 = vmatpush1.bf16.msra.mxu0 0
  %745 = vmatprep.subr.bf16.mxu0 0
  %746 = vmatpush1.bf16.msra.mxu0 0
  %747 = vmatprep.subr.bf16.mxu0 0
  %748 = vmatpush1.bf16.msra.mxu0 0
  %749 = vmatprep.subr.bf16.mxu0 0
  %750 = vmatpush1.bf16.msra.mxu0 0
  %751 = vmatprep.subr.bf16.mxu0 0
  %752 = vmatpush1.bf16.msra.mxu0 0
  %753 = vmatprep.subr.bf16.mxu0 0
  %754 = vmatpush1.bf16.msra.mxu0 0
  %755 = vmatprep.subr.bf16.mxu0 0
  %756 = vmatpush1.bf16.msra.mxu0 0
  %757 = vmatprep.subr.bf16.mxu0 0
  %758 = vmatpush1.bf16.msra.mxu0 0
  %759 = vmatprep.subr.bf16.mxu0 0
  %760 = vmatpush1.bf16.msra.mxu0 0
  %761 = vmatprep.subr.bf16.mxu0 0
  %762 = vmatpush1.bf16.msra.mxu0 0
  %763 = vmatprep.subr.bf16.mxu0 0
  %764 = vmatpush1.bf16.msra.mxu0 0
  %765 = vmatprep.subr.bf16.mxu0 0
  %766 = vmatpush1.bf16.msra.mxu0 0
  %767 = vmatprep.mubr.bf16.mxu0 0
  %768 = vmatmul.mubr.bf16.gmra.mrb[0].mxu0 %v488
  %v769 = vpop.f32.mrb[0].mxu0
  %v770 = vadd.f32 0.0, %v769
  %v771 = vpop.f32.mrb[0].mxu0
  %v772 = vpop.f32.mrb[0].mxu0
  %v773 = vadd.f32 0.0, %v772
  %v774 = vpop.f32.mrb[0].mxu0
  %775 = vmatprep.mubr.bf16.mxu0 0
  %776 = vmatmul.mubr.bf16.gmra.mrb[0].mxu0 %v491
  %v777 = vpop.f32.mrb[0].mxu0
  %v778 = vadd.f32 0.0, %v777
  %v779 = vpop.f32.mrb[0].mxu0
  %v780 = vpop.f32.mrb[0].mxu0
  %v781 = vadd.f32 0.0, %v780
  %v782 = vpop.f32.mrb[0].mxu0
  %783 = vmatprep.mubr.bf16.mxu0 0
  %784 = vmatmul.mubr.bf16.gmra.mrb[0].mxu0 %v494
  %v785 = vpop.f32.mrb[0].mxu0
  %v786 = vadd.f32 0.0, %v785
  %v787 = vpop.f32.mrb[0].mxu0
  %v788 = vpop.f32.mrb[0].mxu0
  %v789 = vadd.f32 0.0, %v788
  %v790 = vpop.f32.mrb[0].mxu0
  %791 = vmatprep.mubr.bf16.mxu0 0
  %792 = vmatmul.mubr.bf16.gmra.mrb[0].mxu0 %v497
  %v793 = vpop.f32.mrb[0].mxu0
  %v794 = vadd.f32 0.0, %v793
  %v795 = vpop.f32.mrb[0].mxu0
  %v796 = vpop.f32.mrb[0].mxu0
  %v797 = vadd.f32 0.0, %v796
  %v798 = vpop.f32.mrb[0].mxu0
  %799 = vdwg.mxu0
  %s800 = scalar_lea.vmem %s7, 32
  %v801 = vld [vmem:[%s800] sm:$0xf]
  %v802 = vld [vmem:[%s800 + $0x4] sm:$0xf]
  %v803 = vld [vmem:[%s800 + $0x8] sm:$0xf]
  %v804 = vld [vmem:[%s800 + $0xc] sm:$0xf]
  %v805 = vld [vmem:[%s800 + $0x10] sm:$0xf]
  %v806 = vld [vmem:[%s800 + $0x14] sm:$0xf]
  %v807 = vld [vmem:[%s800 + $0x18] sm:$0xf]
  %v808 = vld [vmem:[%s800 + $0x1c] sm:$0xf]
  %v809 = vpack.c.bf16 %v773, %v770
  %v810 = vpack.c.bf16 %v781, %v778
  %v811 = vpack.c.bf16 %v789, %v786
  %v812 = vpack.c.bf16 %v797, %v794
  %v813 = vld [vmem:[%s9 + $0x1] sm:$0x1]
  %v814 = vlaneseq
  %v815 = vshrl.u32 %v814, 7
  %v816 = vsub.s32 0, %v815
  %v817 = vrot.slane %v813, %v816
  %v826 = vunpack.c.l.b16 %v801
  %v827 = vunpack.c.l.b16 %v802
  %v828 = vunpack.c.l.b16 %v803
  %v829 = vunpack.c.l.b16 %v804
  %v830 = vunpack.c.l.b16 %v805
  %v831 = vunpack.c.l.b16 %v806
  %v832 = vunpack.c.l.b16 %v807
  %v833 = vunpack.c.l.b16 %v808
  %v834 = vpack.c.b16 %v827, %v826
  %v835 = vpack.c.b16 %v829, %v828
  %v836 = vpack.c.b16 %v831, %v830
  %v837 = vpack.c.b16 %v833, %v832
  %v839 = vsel %vm486, %v834, 0
  %v842 = vsel %vm486, %v835, 0
  %v845 = vsel %vm486, %v836, 0
  %v848 = vsel %vm486, %v837, 0
  %850 = vmatprep.subr.bf16.mxu0 0
  %851 = vmatpush1.bf16.msra.mxu0 %v809
  %852 = vmatprep.subr.bf16.mxu0 0
  %853 = vmatpush1.bf16.msra.mxu0 %v810
  %854 = vmatprep.subr.bf16.mxu0 0
  %855 = vmatpush1.bf16.msra.mxu0 %v811
  %856 = vmatprep.subr.bf16.mxu0 0
  %857 = vmatpush1.bf16.msra.mxu0 %v812
  %858 = vmatprep.subr.bf16.mxu0 0
  %859 = vmatpush1.bf16.msra.mxu0 0
  %860 = vmatprep.subr.bf16.mxu0 0
  %861 = vmatpush1.bf16.msra.mxu0 0
  %862 = vmatprep.subr.bf16.mxu0 0
  %863 = vmatpush1.bf16.msra.mxu0 0
  %864 = vmatprep.subr.bf16.mxu0 0
  %865 = vmatpush1.bf16.msra.mxu0 0
  %866 = vmatprep.subr.bf16.mxu0 0
  %867 = vmatpush1.bf16.msra.mxu0 0
  %868 = vmatprep.subr.bf16.mxu0 0
  %869 = vmatpush1.bf16.msra.mxu0 0
  %870 = vmatprep.subr.bf16.mxu0 0
  %871 = vmatpush1.bf16.msra.mxu0 0
  %872 = vmatprep.subr.bf16.mxu0 0
  %873 = vmatpush1.bf16.msra.mxu0 0
  %874 = vmatprep.subr.bf16.mxu0 0
  %875 = vmatpush1.bf16.msra.mxu0 0
  %876 = vmatprep.subr.bf16.mxu0 0
  %877 = vmatpush1.bf16.msra.mxu0 0
  %878 = vmatprep.subr.bf16.mxu0 0
  %879 = vmatpush1.bf16.msra.mxu0 0
  %880 = vmatprep.subr.bf16.mxu0 0
  %881 = vmatpush1.bf16.msra.mxu0 0
  %882 = vmatprep.mubr.bf16.mxu0 0
  %883 = vmatmul.mubr.bf16.gmra.mrb[0].mxu0 %v839
  %v884 = vpop.f32.mrb[0].mxu0
  %v885 = vadd.f32 %v817, %v884
  %v886 = vpop.f32.mrb[0].mxu0
  %v887 = vpop.f32.mrb[0].mxu0
  %v888 = vadd.f32 %v817, %v887
  %v889 = vpop.f32.mrb[0].mxu0
  %890 = vmatprep.mubr.bf16.mxu0 0
  %891 = vmatmul.mubr.bf16.gmra.mrb[0].mxu0 %v842
  %v892 = vpop.f32.mrb[0].mxu0
  %v893 = vadd.f32 %v817, %v892
  %v894 = vpop.f32.mrb[0].mxu0
  %v895 = vpop.f32.mrb[0].mxu0
  %v896 = vadd.f32 %v817, %v895
  %v897 = vpop.f32.mrb[0].mxu0
  %898 = vmatprep.mubr.bf16.mxu0 0
  %899 = vmatmul.mubr.bf16.gmra.mrb[0].mxu0 %v845
  %v900 = vpop.f32.mrb[0].mxu0
  %v901 = vadd.f32 %v817, %v900
  %v902 = vpop.f32.mrb[0].mxu0
  %v903 = vpop.f32.mrb[0].mxu0
  %v904 = vadd.f32 %v817, %v903
  %v905 = vpop.f32.mrb[0].mxu0
  %906 = vmatprep.mubr.bf16.mxu0 0
  %907 = vmatmul.mubr.bf16.gmra.mrb[0].mxu0 %v848
  %v908 = vpop.f32.mrb[0].mxu0
  %v909 = vadd.f32 %v817, %v908
  %v910 = vpop.f32.mrb[0].mxu0
  %v911 = vpop.f32.mrb[0].mxu0
  %v912 = vadd.f32 %v817, %v911
  %v913 = vpop.f32.mrb[0].mxu0
  %914 = vdwg.mxu0
  %vm915 = vcmp.gt.f32.partialorder %v885, 0.0
  %vm916 = vcmp.gt.f32.partialorder %v888, 0.0
  %vm917 = vcmp.gt.f32.partialorder %v893, 0.0
  %vm918 = vcmp.gt.f32.partialorder %v896, 0.0
  %vm919 = vcmp.gt.f32.partialorder %v901, 0.0
  %vm920 = vcmp.gt.f32.partialorder %v904, 0.0
  %vm921 = vcmp.gt.f32.partialorder %v909, 0.0
  %vm922 = vcmp.gt.f32.partialorder %v912, 0.0
  %v923 = vmul.f32 %v885, 0.25
  %v924 = vmul.f32 %v888, 0.25
  %v925 = vmul.f32 %v893, 0.25
  %v926 = vmul.f32 %v896, 0.25
  %v927 = vmul.f32 %v901, 0.25
  %v928 = vmul.f32 %v904, 0.25
  %v929 = vmul.f32 %v909, 0.25
  %v930 = vmul.f32 %v912, 0.25
  %v931 = vsel %vm915, %v885, %v923
  %v932 = vsel %vm916, %v888, %v924
  %v933 = vsel %vm917, %v893, %v925
  %v934 = vsel %vm918, %v896, %v926
  %v935 = vsel %vm919, %v901, %v927
  %v936 = vsel %vm920, %v904, %v928
  %v937 = vsel %vm921, %v909, %v929
  %v938 = vsel %vm922, %v912, %v930
  %v939 = vld [vmem:[%s13] sm:$0xf]
  %v940 = vld [vmem:[%s13 + $0x4] sm:$0xf]
  %v941 = vld [vmem:[%s13 + $0x8] sm:$0xf]
  %v942 = vld [vmem:[%s13 + $0xc] sm:$0xf]
  %v943 = vld [vmem:[%s13 + $0x10] sm:$0xf]
  %v944 = vld [vmem:[%s13 + $0x14] sm:$0xf]
  %v945 = vld [vmem:[%s13 + $0x18] sm:$0xf]
  %v946 = vld [vmem:[%s13 + $0x1c] sm:$0xf]
  %v947 = vpack.c.bf16 %v363, %v362
  %v948 = vpack.c.bf16 %v365, %v364
  %v957 = vunpack.c.l.b16 %v939
  %v958 = vunpack.c.l.b16 %v940
  %v959 = vunpack.c.l.b16 %v941
  %v960 = vunpack.c.l.b16 %v942
  %v961 = vunpack.c.l.b16 %v943
  %v962 = vunpack.c.l.b16 %v944
  %v963 = vunpack.c.l.b16 %v945
  %v964 = vunpack.c.l.b16 %v946
  %v965 = vpack.c.b16 %v958, %v957
  %v966 = vpack.c.b16 %v960, %v959
  %v967 = vpack.c.b16 %v962, %v961
  %v968 = vpack.c.b16 %v964, %v963
  %vm969 = vcmask 261120
  %v971 = vsel %vm969, %v965, 0
  %v974 = vsel %vm969, %v966, 0
  %v977 = vsel %vm969, %v967, 0
  %v980 = vsel %vm969, %v968, 0
  %982 = vmatprep.subr.bf16.mxu0 0
  %983 = vmatpush1.bf16.msra.mxu0 %v947
  %984 = vmatprep.subr.bf16.mxu0 0
  %985 = vmatpush1.bf16.msra.mxu0 %v948
  %986 = vmatprep.subr.bf16.mxu0 0
  %987 = vmatpush1.bf16.msra.mxu0 0
  %988 = vmatprep.subr.bf16.mxu0 0
  %989 = vmatpush1.bf16.msra.mxu0 0
  %990 = vmatprep.subr.bf16.mxu0 0
  %991 = vmatpush1.bf16.msra.mxu0 0
  %992 = vmatprep.subr.bf16.mxu0 0
  %993 = vmatpush1.bf16.msra.mxu0 0
  %994 = vmatprep.subr.bf16.mxu0 0
  %995 = vmatpush1.bf16.msra.mxu0 0
  %996 = vmatprep.subr.bf16.mxu0 0
  %997 = vmatpush1.bf16.msra.mxu0 0
  %998 = vmatprep.subr.bf16.mxu0 0
  %999 = vmatpush1.bf16.msra.mxu0 0
  %1000 = vmatprep.subr.bf16.mxu0 0
  %1001 = vmatpush1.bf16.msra.mxu0 0
  %1002 = vmatprep.subr.bf16.mxu0 0
  %1003 = vmatpush1.bf16.msra.mxu0 0
  %1004 = vmatprep.subr.bf16.mxu0 0
  %1005 = vmatpush1.bf16.msra.mxu0 0
  %1006 = vmatprep.subr.bf16.mxu0 0
  %1007 = vmatpush1.bf16.msra.mxu0 0
  %1008 = vmatprep.subr.bf16.mxu0 0
  %1009 = vmatpush1.bf16.msra.mxu0 0
  %1010 = vmatprep.subr.bf16.mxu0 0
  %1011 = vmatpush1.bf16.msra.mxu0 0
  %1012 = vmatprep.subr.bf16.mxu0 0
  %1013 = vmatpush1.bf16.msra.mxu0 0
  %1014 = vmatprep.mubr.bf16.mxu0 0
  %1015 = vmatmul.mubr.bf16.gmra.mrb[0].mxu0 %v971
  %v1016 = vpop.f32.mrb[0].mxu0
  %v1017 = vadd.f32 0.0, %v1016
  %v1018 = vpop.f32.mrb[0].mxu0
  %v1019 = vpop.f32.mrb[0].mxu0
  %v1020 = vadd.f32 0.0, %v1019
  %v1021 = vpop.f32.mrb[0].mxu0
  %1022 = vmatprep.mubr.bf16.mxu0 0
  %1023 = vmatmul.mubr.bf16.gmra.mrb[0].mxu0 %v974
  %v1024 = vpop.f32.mrb[0].mxu0
  %v1025 = vadd.f32 0.0, %v1024
  %v1026 = vpop.f32.mrb[0].mxu0
  %v1027 = vpop.f32.mrb[0].mxu0
  %v1028 = vadd.f32 0.0, %v1027
  %v1029 = vpop.f32.mrb[0].mxu0
  %1030 = vmatprep.mubr.bf16.mxu0 0
  %1031 = vmatmul.mubr.bf16.gmra.mrb[0].mxu0 %v977
  %v1032 = vpop.f32.mrb[0].mxu0
  %v1033 = vadd.f32 0.0, %v1032
  %v1034 = vpop.f32.mrb[0].mxu0
  %v1035 = vpop.f32.mrb[0].mxu0
  %v1036 = vadd.f32 0.0, %v1035
  %v1037 = vpop.f32.mrb[0].mxu0
  %1038 = vmatprep.mubr.bf16.mxu0 0
  %1039 = vmatmul.mubr.bf16.gmra.mrb[0].mxu0 %v980
  %v1040 = vpop.f32.mrb[0].mxu0
  %v1041 = vadd.f32 0.0, %v1040
  %v1042 = vpop.f32.mrb[0].mxu0
  %v1043 = vpop.f32.mrb[0].mxu0
  %v1044 = vadd.f32 0.0, %v1043
  %v1045 = vpop.f32.mrb[0].mxu0
  %1046 = vdwg.mxu0
  %v1047 = vld [vmem:[%s14] sm:$0xf]
  %v1048 = vld [vmem:[%s14 + $0x4] sm:$0xf]
  %v1049 = vld [vmem:[%s14 + $0x8] sm:$0xf]
  %v1050 = vld [vmem:[%s14 + $0xc] sm:$0xf]
  %v1051 = vld [vmem:[%s14 + $0x10] sm:$0xf]
  %v1052 = vld [vmem:[%s14 + $0x14] sm:$0xf]
  %v1053 = vld [vmem:[%s14 + $0x18] sm:$0xf]
  %v1054 = vld [vmem:[%s14 + $0x1c] sm:$0xf]
  %v1055 = vpack.c.bf16 %v449, %v448
  %v1064 = vunpack.c.l.b16 %v1047
  %v1065 = vunpack.c.l.b16 %v1048
  %v1066 = vunpack.c.l.b16 %v1049
  %v1067 = vunpack.c.l.b16 %v1050
  %v1068 = vunpack.c.l.b16 %v1051
  %v1069 = vunpack.c.l.b16 %v1052
  %v1070 = vunpack.c.l.b16 %v1053
  %v1071 = vunpack.c.l.b16 %v1054
  %v1072 = vpack.c.b16 %v1065, %v1064
  %v1073 = vpack.c.b16 %v1067, %v1066
  %v1074 = vpack.c.b16 %v1069, %v1068
  %v1075 = vpack.c.b16 %v1071, %v1070
  %vm1076 = vcmask 130048
  %v1078 = vsel %vm1076, %v1072, 0
  %v1081 = vsel %vm1076, %v1073, 0
  %v1084 = vsel %vm1076, %v1074, 0
  %v1087 = vsel %vm1076, %v1075, 0
  %1089 = vmatprep.subr.bf16.mxu0 0
  %1090 = vmatpush1.bf16.msra.mxu0 %v1055
  %1091 = vmatprep.subr.bf16.mxu0 0
  %1092 = vmatpush1.bf16.msra.mxu0 0
  %1093 = vmatprep.subr.bf16.mxu0 0
  %1094 = vmatpush1.bf16.msra.mxu0 0
  %1095 = vmatprep.subr.bf16.mxu0 0
  %1096 = vmatpush1.bf16.msra.mxu0 0
  %1097 = vmatprep.subr.bf16.mxu0 0
  %1098 = vmatpush1.bf16.msra.mxu0 0
  %1099 = vmatprep.subr.bf16.mxu0 0
  %1100 = vmatpush1.bf16.msra.mxu0 0
  %1101 = vmatprep.subr.bf16.mxu0 0
  %1102 = vmatpush1.bf16.msra.mxu0 0
  %1103 = vmatprep.subr.bf16.mxu0 0
  %1104 = vmatpush1.bf16.msra.mxu0 0
  %1105 = vmatprep.subr.bf16.mxu0 0
  %1106 = vmatpush1.bf16.msra.mxu0 0
  %1107 = vmatprep.subr.bf16.mxu0 0
  %1108 = vmatpush1.bf16.msra.mxu0 0
  %1109 = vmatprep.subr.bf16.mxu0 0
  %1110 = vmatpush1.bf16.msra.mxu0 0
  %1111 = vmatprep.subr.bf16.mxu0 0
  %1112 = vmatpush1.bf16.msra.mxu0 0
  %1113 = vmatprep.subr.bf16.mxu0 0
  %1114 = vmatpush1.bf16.msra.mxu0 0
  %1115 = vmatprep.subr.bf16.mxu0 0
  %1116 = vmatpush1.bf16.msra.mxu0 0
  %1117 = vmatprep.subr.bf16.mxu0 0
  %1118 = vmatpush1.bf16.msra.mxu0 0
  %1119 = vmatprep.subr.bf16.mxu0 0
  %1120 = vmatpush1.bf16.msra.mxu0 0
  %1121 = vmatprep.mubr.bf16.mxu0 0
  %1122 = vmatmul.mubr.bf16.gmra.mrb[0].mxu0 %v1078
  %v1123 = vpop.f32.mrb[0].mxu0
  %v1124 = vadd.f32 0.0, %v1123
  %v1125 = vpop.f32.mrb[0].mxu0
  %v1126 = vpop.f32.mrb[0].mxu0
  %v1127 = vadd.f32 0.0, %v1126
  %v1128 = vpop.f32.mrb[0].mxu0
  %1129 = vmatprep.mubr.bf16.mxu0 0
  %1130 = vmatmul.mubr.bf16.gmra.mrb[0].mxu0 %v1081
  %v1131 = vpop.f32.mrb[0].mxu0
  %v1132 = vadd.f32 0.0, %v1131
  %v1133 = vpop.f32.mrb[0].mxu0
  %v1134 = vpop.f32.mrb[0].mxu0
  %v1135 = vadd.f32 0.0, %v1134
  %v1136 = vpop.f32.mrb[0].mxu0
  %1137 = vmatprep.mubr.bf16.mxu0 0
  %1138 = vmatmul.mubr.bf16.gmra.mrb[0].mxu0 %v1084
  %v1139 = vpop.f32.mrb[0].mxu0
  %v1140 = vadd.f32 0.0, %v1139
  %v1141 = vpop.f32.mrb[0].mxu0
  %v1142 = vpop.f32.mrb[0].mxu0
  %v1143 = vadd.f32 0.0, %v1142
  %v1144 = vpop.f32.mrb[0].mxu0
  %1145 = vmatprep.mubr.bf16.mxu0 0
  %1146 = vmatmul.mubr.bf16.gmra.mrb[0].mxu0 %v1087
  %v1147 = vpop.f32.mrb[0].mxu0
  %v1148 = vadd.f32 0.0, %v1147
  %v1149 = vpop.f32.mrb[0].mxu0
  %v1150 = vpop.f32.mrb[0].mxu0
  %v1151 = vadd.f32 0.0, %v1150
  %v1152 = vpop.f32.mrb[0].mxu0
  %1153 = vdwg.mxu0
  %v1154 = vpack.c.bf16 %v695, %v694
  %v1155 = vpack.c.bf16 %v697, %v696
  %v1156 = vpack.c.bf16 %v699, %v698
  %v1157 = vpack.c.bf16 %v701, %v700
  %v1158 = vpack.c.bf16 %v932, %v931
  %v1159 = vpack.c.bf16 %v934, %v933
  %v1160 = vpack.c.bf16 %v936, %v935
  %v1161 = vpack.c.bf16 %v938, %v937
  %v1162 = vld [vmem:[%s10] sm:$0xf]
  %v1163 = vld [vmem:[%s10 + $0x4] sm:$0xf]
  %v1164 = vld [vmem:[%s10 + $0x8] sm:$0xf]
  %v1165 = vld [vmem:[%s10 + $0xc] sm:$0xf]
  %v1166 = vld [vmem:[%s10 + $0x10] sm:$0xf]
  %v1167 = vld [vmem:[%s10 + $0x14] sm:$0xf]
  %v1168 = vld [vmem:[%s10 + $0x18] sm:$0xf]
  %v1169 = vld [vmem:[%s10 + $0x1c] sm:$0xf]
  %v1170 = vld [vmem:[%s11] sm:$0x1]
  %v1172 = vlaneseq
  %v1173 = vshrl.u32 %v1172, 7
  %v1174 = vsub.s32 0, %v1173
  %v1175 = vrot.slane %v1170, %v1174
  %v1185 = vunpack.c.l.b16 %v1162
  %v1186 = vunpack.c.l.b16 %v1163
  %v1187 = vunpack.c.l.b16 %v1164
  %v1188 = vunpack.c.l.b16 %v1165
  %v1189 = vunpack.c.l.b16 %v1166
  %v1190 = vunpack.c.l.b16 %v1167
  %v1191 = vunpack.c.l.b16 %v1168
  %v1192 = vunpack.c.l.b16 %v1169
  %v1193 = vpack.c.b16 %v1186, %v1185
  %v1194 = vpack.c.b16 %v1188, %v1187
  %v1195 = vpack.c.b16 %v1190, %v1189
  %v1196 = vpack.c.b16 %v1192, %v1191
  %v1202 = vsel %vm486, %v1154, 0
  %v1205 = vsel %vm486, %v1155, 0
  %v1208 = vsel %vm486, %v1156, 0
  %v1211 = vsel %vm486, %v1157, 0
  %v1214 = vsel %vm486, %v1158, 0
  %v1217 = vsel %vm486, %v1159, 0
  %v1220 = vsel %vm486, %v1160, 0
  %v1223 = vsel %vm486, %v1161, 0
  %1225 = vmatprep.subr.bf16.mxu0 0
  %1226 = vmatpush1.bf16.msra.mxu0 %v1193
  %1227 = vmatprep.subr.bf16.mxu0 0
  %1228 = vmatpush1.bf16.msra.mxu0 %v1194
  %1229 = vmatprep.subr.bf16.mxu0 0
  %1230 = vmatpush1.bf16.msra.mxu0 %v1195
  %1231 = vmatprep.subr.bf16.mxu0 0
  %1232 = vmatpush1.bf16.msra.mxu0 %v1196
  %1233 = vmatprep.subr.bf16.mxu0 0
  %1234 = vmatpush1.bf16.msra.mxu0 0
  %1235 = vmatprep.subr.bf16.mxu0 0
  %1236 = vmatpush1.bf16.msra.mxu0 0
  %1237 = vmatprep.subr.bf16.mxu0 0
  %1238 = vmatpush1.bf16.msra.mxu0 0
  %1239 = vmatprep.subr.bf16.mxu0 0
  %1240 = vmatpush1.bf16.msra.mxu0 0
  %1241 = vmatprep.subr.bf16.mxu0 0
  %1242 = vmatpush1.bf16.msra.mxu0 0
  %1243 = vmatprep.subr.bf16.mxu0 0
  %1244 = vmatpush1.bf16.msra.mxu0 0
  %1245 = vmatprep.subr.bf16.mxu0 0
  %1246 = vmatpush1.bf16.msra.mxu0 0
  %1247 = vmatprep.subr.bf16.mxu0 0
  %1248 = vmatpush1.bf16.msra.mxu0 0
  %1249 = vmatprep.subr.bf16.mxu0 0
  %1250 = vmatpush1.bf16.msra.mxu0 0
  %1251 = vmatprep.subr.bf16.mxu0 0
  %1252 = vmatpush1.bf16.msra.mxu0 0
  %1253 = vmatprep.subr.bf16.mxu0 0
  %1254 = vmatpush1.bf16.msra.mxu0 0
  %1255 = vmatprep.subr.bf16.mxu0 0
  %1256 = vmatpush1.bf16.msra.mxu0 0
  %1257 = vmatprep.mubr.bf16.mxu0 0
  %1258 = vmatmul.mubr.bf16.gmra.mrb[0].mxu0 %v1202
  %v1259 = vpop.f32.mrb[0].mxu0
  %v1260 = vadd.f32 %v1175, %v1259
  %v1261 = vpop.f32.mrb[0].mxu0
  %v1262 = vpop.f32.mrb[0].mxu0
  %v1263 = vadd.f32 %v1175, %v1262
  %v1264 = vpop.f32.mrb[0].mxu0
  %1265 = vmatprep.mubr.bf16.mxu0 0
  %1266 = vmatmul.mubr.bf16.gmra.mrb[0].mxu0 %v1205
  %v1267 = vpop.f32.mrb[0].mxu0
  %v1268 = vadd.f32 %v1175, %v1267
  %v1269 = vpop.f32.mrb[0].mxu0
  %v1270 = vpop.f32.mrb[0].mxu0
  %v1271 = vadd.f32 %v1175, %v1270
  %v1272 = vpop.f32.mrb[0].mxu0
  %1273 = vmatprep.mubr.bf16.mxu0 0
  %1274 = vmatmul.mubr.bf16.gmra.mrb[0].mxu0 %v1208
  %v1275 = vpop.f32.mrb[0].mxu0
  %v1276 = vadd.f32 %v1175, %v1275
  %v1277 = vpop.f32.mrb[0].mxu0
  %v1278 = vpop.f32.mrb[0].mxu0
  %v1279 = vadd.f32 %v1175, %v1278
  %v1280 = vpop.f32.mrb[0].mxu0
  %1281 = vmatprep.mubr.bf16.mxu0 0
  %1282 = vmatmul.mubr.bf16.gmra.mrb[0].mxu0 %v1211
  %v1283 = vpop.f32.mrb[0].mxu0
  %v1284 = vadd.f32 %v1175, %v1283
  %v1285 = vpop.f32.mrb[0].mxu0
  %v1286 = vpop.f32.mrb[0].mxu0
  %v1287 = vadd.f32 %v1175, %v1286
  %v1288 = vpop.f32.mrb[0].mxu0
  %1289 = vmatprep.mubr.bf16.mxu0 0
  %1290 = vmatmul.mubr.bf16.gmra.mrb[0].mxu0 %v1214
  %v1291 = vpop.f32.mrb[0].mxu0
  %v1292 = vadd.f32 %v1175, %v1291
  %v1293 = vpop.f32.mrb[0].mxu0
  %v1294 = vpop.f32.mrb[0].mxu0
  %v1295 = vadd.f32 %v1175, %v1294
  %v1296 = vpop.f32.mrb[0].mxu0
  %1297 = vmatprep.mubr.bf16.mxu0 0
  %1298 = vmatmul.mubr.bf16.gmra.mrb[0].mxu0 %v1217
  %v1299 = vpop.f32.mrb[0].mxu0
  %v1300 = vadd.f32 %v1175, %v1299
  %v1301 = vpop.f32.mrb[0].mxu0
  %v1302 = vpop.f32.mrb[0].mxu0
  %v1303 = vadd.f32 %v1175, %v1302
  %v1304 = vpop.f32.mrb[0].mxu0
  %1305 = vmatprep.mubr.bf16.mxu0 0
  %1306 = vmatmul.mubr.bf16.gmra.mrb[0].mxu0 %v1220
  %v1307 = vpop.f32.mrb[0].mxu0
  %v1308 = vadd.f32 %v1175, %v1307
  %v1309 = vpop.f32.mrb[0].mxu0
  %v1310 = vpop.f32.mrb[0].mxu0
  %v1311 = vadd.f32 %v1175, %v1310
  %v1312 = vpop.f32.mrb[0].mxu0
  %1313 = vmatprep.mubr.bf16.mxu0 0
  %1314 = vmatmul.mubr.bf16.gmra.mrb[0].mxu0 %v1223
  %v1315 = vpop.f32.mrb[0].mxu0
  %v1316 = vadd.f32 %v1175, %v1315
  %v1317 = vpop.f32.mrb[0].mxu0
  %v1318 = vpop.f32.mrb[0].mxu0
  %v1319 = vadd.f32 %v1175, %v1318
  %v1320 = vpop.f32.mrb[0].mxu0
  %1321 = vdwg.mxu0
  %v1322 = vtanh.pop %v1260
  %v1323 = vtanh.pop %v1263
  %v1324 = vtanh.pop %v1268
  %v1325 = vtanh.pop %v1271
  %v1326 = vtanh.pop %v1276
  %v1327 = vtanh.pop %v1279
  %v1328 = vtanh.pop %v1284
  %v1329 = vtanh.pop %v1287
  %v1330 = vtanh.pop %v1292
  %v1331 = vtanh.pop %v1295
  %v1332 = vtanh.pop %v1300
  %v1333 = vtanh.pop %v1303
  %v1334 = vtanh.pop %v1308
  %v1335 = vtanh.pop %v1311
  %v1336 = vtanh.pop %v1316
  %v1337 = vtanh.pop %v1319
  %v1338 = vld [vmem:[%s12] sm:$0x1]
  %v1339 = vsel %vm486, %v1322, 0.0
  %v1340 = vsel %vm486, %v1323, 0.0
  %v1341 = vadd.f32 %v1339, %v1340
  %v1342 = vsel %vm486, %v1324, 0.0
  %v1343 = vadd.f32 %v1341, %v1342
  %v1344 = vsel %vm486, %v1325, 0.0
  %v1345 = vadd.f32 %v1343, %v1344
  %v1346 = vsel %vm486, %v1326, 0.0
  %v1347 = vadd.f32 %v1345, %v1346
  %v1348 = vsel %vm486, %v1327, 0.0
  %v1349 = vadd.f32 %v1347, %v1348
  %v1350 = vsel %vm486, %v1328, 0.0
  %v1351 = vadd.f32 %v1349, %v1350
  %v1352 = vsel %vm486, %v1329, 0.0
  %v1353 = vadd.f32 %v1351, %v1352
  %v1354 = vrot.slane %v1353, 4
  %v1355 = vadd.f32 %v1353, %v1354
  %v1356 = vrot.slane %v1355, 2
  %v1357 = vadd.f32 %v1355, %v1356
  %v1358 = vrot.slane %v1357, 1
  %v1359 = vadd.f32 %v1357, %v1358
  %v1360 = vmul.f32 %v1359, 0.015625
  %v1361 = vmul.f32 %v1360, %v1338
  %vm1362 = vcmask 516096
  %v1363 = vsel %vm1362, %v1361, 0.0
  %1364 = vadd.xlane.f32.xlu0 %v1363
  %v1365 = vpop.xlane.xlu0 %1364
  %v1366 = vsel %vm486, %v1330, 0.0
  %v1367 = vsel %vm486, %v1331, 0.0
  %v1368 = vadd.f32 %v1366, %v1367
  %v1369 = vsel %vm486, %v1332, 0.0
  %v1370 = vadd.f32 %v1368, %v1369
  %v1371 = vsel %vm486, %v1333, 0.0
  %v1372 = vadd.f32 %v1370, %v1371
  %v1373 = vsel %vm486, %v1334, 0.0
  %v1374 = vadd.f32 %v1372, %v1373
  %v1375 = vsel %vm486, %v1335, 0.0
  %v1376 = vadd.f32 %v1374, %v1375
  %v1377 = vsel %vm486, %v1336, 0.0
  %v1378 = vadd.f32 %v1376, %v1377
  %v1379 = vsel %vm486, %v1337, 0.0
  %v1380 = vadd.f32 %v1378, %v1379
  %v1381 = vrot.slane %v1380, 4
  %v1382 = vadd.f32 %v1380, %v1381
  %v1383 = vrot.slane %v1382, 2
  %v1384 = vadd.f32 %v1382, %v1383
  %v1385 = vrot.slane %v1384, 1
  %v1386 = vadd.f32 %v1384, %v1385
  %v1387 = vmul.f32 %v1386, 0.015625
  %v1388 = vmul.f32 %v1387, %v1338
  %v1389 = vsel %vm1362, %v1388, 0.0
  %1390 = vadd.xlane.f32.xlu0 %v1389
  %v1391 = vpop.xlane.xlu0 %1390
  %v1392 = vmax.f32 %v1365, %v1391
  %v1393 = vsub.f32 %v1365, %v1392
  %v1394 = vmul.f32 %v1393, 1.442695
  %v1395 = vpow.pop %v1394
  %v1396 = vsub.f32 %v1391, %v1392
  %v1397 = vmul.f32 %v1396, 1.442695
  %v1398 = vpow.pop %v1397
  %v1399 = vadd.f32 %v1395, %v1398
  %v1400 = vrcp.pop %v1399
  %v1401 = vmul.f32 %v1395, %v1400
  %v1402 = vlaneseq
  %v1403 = vshrl.u32 %v1402, 7
  %v1404 = vsub.s32 0, %v1403
  %v1405 = vrot.slane %v1401, %v1404
  %v1406 = vmul.f32 %v1405, %v694
  %v1407 = vmul.f32 %v1405, %v695
  %v1408 = vmul.f32 %v1405, %v696
  %v1409 = vmul.f32 %v1405, %v697
  %v1410 = vmul.f32 %v1405, %v698
  %v1411 = vmul.f32 %v1405, %v699
  %v1412 = vmul.f32 %v1405, %v700
  %v1413 = vmul.f32 %v1405, %v701
  %v1414 = vmul.f32 %v1398, %v1400
  %v1415 = vlaneseq
  %v1416 = vshrl.u32 %v1415, 7
  %v1417 = vsub.s32 0, %v1416
  %v1418 = vrot.slane %v1414, %v1417
  %v1419 = vmul.f32 %v1418, %v931
  %v1420 = vmul.f32 %v1418, %v932
  %v1421 = vmul.f32 %v1418, %v933
  %v1422 = vmul.f32 %v1418, %v934
  %v1423 = vmul.f32 %v1418, %v935
  %v1424 = vmul.f32 %v1418, %v936
  %v1425 = vmul.f32 %v1418, %v937
  %v1426 = vmul.f32 %v1418, %v938
  %v1427 = vadd.f32 %v1406, %v1419
  %v1428 = vadd.f32 %v1407, %v1420
  %v1429 = vadd.f32 %v1408, %v1421
  %v1430 = vadd.f32 %v1409, %v1422
  %v1431 = vadd.f32 %v1410, %v1423
  %v1432 = vadd.f32 %v1411, %v1424
  %v1433 = vadd.f32 %v1412, %v1425
  %v1434 = vadd.f32 %v1413, %v1426
  %v1435 = vpack.c.bf16 %v1020, %v1017
  %v1436 = vpack.c.bf16 %v1028, %v1025
  %v1437 = vpack.c.bf16 %v1036, %v1033
  %v1438 = vpack.c.bf16 %v1044, %v1041
  %v1439 = vpack.c.bf16 %v1127, %v1124
  %v1440 = vpack.c.bf16 %v1135, %v1132
  %v1441 = vpack.c.bf16 %v1143, %v1140
  %v1442 = vpack.c.bf16 %v1151, %v1148
  %v1443 = vld [vmem:[%s15] sm:$0xf]
  %v1444 = vld [vmem:[%s15 + $0x4] sm:$0xf]
  %v1445 = vld [vmem:[%s15 + $0x8] sm:$0xf]
  %v1446 = vld [vmem:[%s15 + $0xc] sm:$0xf]
  %v1447 = vld [vmem:[%s15 + $0x10] sm:$0xf]
  %v1448 = vld [vmem:[%s15 + $0x14] sm:$0xf]
  %v1449 = vld [vmem:[%s15 + $0x18] sm:$0xf]
  %v1450 = vld [vmem:[%s15 + $0x1c] sm:$0xf]
  %v1451 = vld [vmem:[%s16] sm:$0x1]
  %v1453 = vlaneseq
  %v1454 = vshrl.u32 %v1453, 7
  %v1455 = vsub.s32 0, %v1454
  %v1456 = vrot.slane %v1451, %v1455
  %v1466 = vunpack.c.l.b16 %v1443
  %v1467 = vunpack.c.l.b16 %v1444
  %v1468 = vunpack.c.l.b16 %v1445
  %v1469 = vunpack.c.l.b16 %v1446
  %v1470 = vunpack.c.l.b16 %v1447
  %v1471 = vunpack.c.l.b16 %v1448
  %v1472 = vunpack.c.l.b16 %v1449
  %v1473 = vunpack.c.l.b16 %v1450
  %v1474 = vpack.c.b16 %v1467, %v1466
  %v1475 = vpack.c.b16 %v1469, %v1468
  %v1476 = vpack.c.b16 %v1471, %v1470
  %v1477 = vpack.c.b16 %v1473, %v1472
  %v1483 = vsel %vm486, %v1435, 0
  %v1486 = vsel %vm486, %v1436, 0
  %v1489 = vsel %vm486, %v1437, 0
  %v1492 = vsel %vm486, %v1438, 0
  %v1495 = vsel %vm486, %v1439, 0
  %v1498 = vsel %vm486, %v1440, 0
  %v1501 = vsel %vm486, %v1441, 0
  %v1504 = vsel %vm486, %v1442, 0
  %1506 = vmatprep.subr.bf16.mxu0 0
  %1507 = vmatpush1.bf16.msra.mxu0 %v1474
  %1508 = vmatprep.subr.bf16.mxu0 0
  %1509 = vmatpush1.bf16.msra.mxu0 %v1475
  %1510 = vmatprep.subr.bf16.mxu0 0
  %1511 = vmatpush1.bf16.msra.mxu0 %v1476
  %1512 = vmatprep.subr.bf16.mxu0 0
  %1513 = vmatpush1.bf16.msra.mxu0 %v1477
  %1514 = vmatprep.subr.bf16.mxu0 0
  %1515 = vmatpush1.bf16.msra.mxu0 0
  %1516 = vmatprep.subr.bf16.mxu0 0
  %1517 = vmatpush1.bf16.msra.mxu0 0
  %1518 = vmatprep.subr.bf16.mxu0 0
  %1519 = vmatpush1.bf16.msra.mxu0 0
  %1520 = vmatprep.subr.bf16.mxu0 0
  %1521 = vmatpush1.bf16.msra.mxu0 0
  %1522 = vmatprep.subr.bf16.mxu0 0
  %1523 = vmatpush1.bf16.msra.mxu0 0
  %1524 = vmatprep.subr.bf16.mxu0 0
  %1525 = vmatpush1.bf16.msra.mxu0 0
  %1526 = vmatprep.subr.bf16.mxu0 0
  %1527 = vmatpush1.bf16.msra.mxu0 0
  %1528 = vmatprep.subr.bf16.mxu0 0
  %1529 = vmatpush1.bf16.msra.mxu0 0
  %1530 = vmatprep.subr.bf16.mxu0 0
  %1531 = vmatpush1.bf16.msra.mxu0 0
  %1532 = vmatprep.subr.bf16.mxu0 0
  %1533 = vmatpush1.bf16.msra.mxu0 0
  %1534 = vmatprep.subr.bf16.mxu0 0
  %1535 = vmatpush1.bf16.msra.mxu0 0
  %1536 = vmatprep.subr.bf16.mxu0 0
  %1537 = vmatpush1.bf16.msra.mxu0 0
  %1538 = vmatprep.mubr.bf16.mxu0 0
  %1539 = vmatmul.mubr.bf16.gmra.mrb[0].mxu0 %v1483
  %v1540 = vpop.f32.mrb[0].mxu0
  %v1541 = vadd.f32 %v1456, %v1540
  %v1542 = vpop.f32.mrb[0].mxu0
  %v1543 = vpop.f32.mrb[0].mxu0
  %v1544 = vadd.f32 %v1456, %v1543
  %v1545 = vpop.f32.mrb[0].mxu0
  %1546 = vmatprep.mubr.bf16.mxu0 0
  %1547 = vmatmul.mubr.bf16.gmra.mrb[0].mxu0 %v1486
  %v1548 = vpop.f32.mrb[0].mxu0
  %v1549 = vadd.f32 %v1456, %v1548
  %v1550 = vpop.f32.mrb[0].mxu0
  %v1551 = vpop.f32.mrb[0].mxu0
  %v1552 = vadd.f32 %v1456, %v1551
  %v1553 = vpop.f32.mrb[0].mxu0
  %1554 = vmatprep.mubr.bf16.mxu0 0
  %1555 = vmatmul.mubr.bf16.gmra.mrb[0].mxu0 %v1489
  %v1556 = vpop.f32.mrb[0].mxu0
  %v1557 = vadd.f32 %v1456, %v1556
  %v1558 = vpop.f32.mrb[0].mxu0
  %v1559 = vpop.f32.mrb[0].mxu0
  %v1560 = vadd.f32 %v1456, %v1559
  %v1561 = vpop.f32.mrb[0].mxu0
  %1562 = vmatprep.mubr.bf16.mxu0 0
  %1563 = vmatmul.mubr.bf16.gmra.mrb[0].mxu0 %v1492
  %v1564 = vpop.f32.mrb[0].mxu0
  %v1565 = vadd.f32 %v1456, %v1564
  %v1566 = vpop.f32.mrb[0].mxu0
  %v1567 = vpop.f32.mrb[0].mxu0
  %v1568 = vadd.f32 %v1456, %v1567
  %v1569 = vpop.f32.mrb[0].mxu0
  %1570 = vmatprep.mubr.bf16.mxu0 0
  %1571 = vmatmul.mubr.bf16.gmra.mrb[0].mxu0 %v1495
  %v1572 = vpop.f32.mrb[0].mxu0
  %v1573 = vadd.f32 %v1456, %v1572
  %v1574 = vpop.f32.mrb[0].mxu0
  %v1575 = vpop.f32.mrb[0].mxu0
  %v1576 = vadd.f32 %v1456, %v1575
  %v1577 = vpop.f32.mrb[0].mxu0
  %1578 = vmatprep.mubr.bf16.mxu0 0
  %1579 = vmatmul.mubr.bf16.gmra.mrb[0].mxu0 %v1498
  %v1580 = vpop.f32.mrb[0].mxu0
  %v1581 = vadd.f32 %v1456, %v1580
  %v1582 = vpop.f32.mrb[0].mxu0
  %v1583 = vpop.f32.mrb[0].mxu0
  %v1584 = vadd.f32 %v1456, %v1583
  %v1585 = vpop.f32.mrb[0].mxu0
  %1586 = vmatprep.mubr.bf16.mxu0 0
  %1587 = vmatmul.mubr.bf16.gmra.mrb[0].mxu0 %v1501
  %v1588 = vpop.f32.mrb[0].mxu0
  %v1589 = vadd.f32 %v1456, %v1588
  %v1590 = vpop.f32.mrb[0].mxu0
  %v1591 = vpop.f32.mrb[0].mxu0
  %v1592 = vadd.f32 %v1456, %v1591
  %v1593 = vpop.f32.mrb[0].mxu0
  %1594 = vmatprep.mubr.bf16.mxu0 0
  %1595 = vmatmul.mubr.bf16.gmra.mrb[0].mxu0 %v1504
  %v1596 = vpop.f32.mrb[0].mxu0
  %v1597 = vadd.f32 %v1456, %v1596
  %v1598 = vpop.f32.mrb[0].mxu0
  %v1599 = vpop.f32.mrb[0].mxu0
  %v1600 = vadd.f32 %v1456, %v1599
  %v1601 = vpop.f32.mrb[0].mxu0
  %1602 = vdwg.mxu0
  %v1603 = vtanh.pop %v1541
  %v1604 = vtanh.pop %v1544
  %v1605 = vtanh.pop %v1549
  %v1606 = vtanh.pop %v1552
  %v1607 = vtanh.pop %v1557
  %v1608 = vtanh.pop %v1560
  %v1609 = vtanh.pop %v1565
  %v1610 = vtanh.pop %v1568
  %v1611 = vtanh.pop %v1573
  %v1612 = vtanh.pop %v1576
  %v1613 = vtanh.pop %v1581
  %v1614 = vtanh.pop %v1584
  %v1615 = vtanh.pop %v1589
  %v1616 = vtanh.pop %v1592
  %v1617 = vtanh.pop %v1597
  %v1618 = vtanh.pop %v1600
  %v1619 = vld [vmem:[%s17] sm:$0x1]
  %v1620 = vsel %vm486, %v1603, 0.0
  %v1621 = vsel %vm486, %v1604, 0.0
  %v1622 = vadd.f32 %v1620, %v1621
  %v1623 = vsel %vm486, %v1605, 0.0
  %v1624 = vadd.f32 %v1622, %v1623
  %v1625 = vsel %vm486, %v1606, 0.0
  %v1626 = vadd.f32 %v1624, %v1625
  %v1627 = vsel %vm486, %v1607, 0.0
  %v1628 = vadd.f32 %v1626, %v1627
  %v1629 = vsel %vm486, %v1608, 0.0
  %v1630 = vadd.f32 %v1628, %v1629
  %v1631 = vsel %vm486, %v1609, 0.0
  %v1632 = vadd.f32 %v1630, %v1631
  %v1633 = vsel %vm486, %v1610, 0.0
  %v1634 = vadd.f32 %v1632, %v1633
  %v1635 = vrot.slane %v1634, 4
  %v1636 = vadd.f32 %v1634, %v1635
  %v1637 = vrot.slane %v1636, 2
  %v1638 = vadd.f32 %v1636, %v1637
  %v1639 = vrot.slane %v1638, 1
  %v1640 = vadd.f32 %v1638, %v1639
  %v1641 = vmul.f32 %v1640, 0.015625
  %v1642 = vmul.f32 %v1641, %v1619
  %v1643 = vsel %vm1362, %v1642, 0.0
  %1644 = vadd.xlane.f32.xlu0 %v1643
  %v1645 = vpop.xlane.xlu0 %1644
  %v1646 = vsel %vm486, %v1611, 0.0
  %v1647 = vsel %vm486, %v1612, 0.0
  %v1648 = vadd.f32 %v1646, %v1647
  %v1649 = vsel %vm486, %v1613, 0.0
  %v1650 = vadd.f32 %v1648, %v1649
  %v1651 = vsel %vm486, %v1614, 0.0
  %v1652 = vadd.f32 %v1650, %v1651
  %v1653 = vsel %vm486, %v1615, 0.0
  %v1654 = vadd.f32 %v1652, %v1653
  %v1655 = vsel %vm486, %v1616, 0.0
  %v1656 = vadd.f32 %v1654, %v1655
  %v1657 = vsel %vm486, %v1617, 0.0
  %v1658 = vadd.f32 %v1656, %v1657
  %v1659 = vsel %vm486, %v1618, 0.0
  %v1660 = vadd.f32 %v1658, %v1659
  %v1661 = vrot.slane %v1660, 4
  %v1662 = vadd.f32 %v1660, %v1661
  %v1663 = vrot.slane %v1662, 2
  %v1664 = vadd.f32 %v1662, %v1663
  %v1665 = vrot.slane %v1664, 1
  %v1666 = vadd.f32 %v1664, %v1665
  %v1667 = vmul.f32 %v1666, 0.015625
  %v1668 = vmul.f32 %v1667, %v1619
  %v1669 = vsel %vm1362, %v1668, 0.0
  %1670 = vadd.xlane.f32.xlu0 %v1669
  %v1671 = vpop.xlane.xlu0 %1670
  %v1672 = vmax.f32 %v1645, %v1671
  %v1673 = vsub.f32 %v1645, %v1672
  %v1674 = vmul.f32 %v1673, 1.442695
  %v1675 = vpow.pop %v1674
  %v1676 = vsub.f32 %v1671, %v1672
  %v1677 = vmul.f32 %v1676, 1.442695
  %v1678 = vpow.pop %v1677
  %v1679 = vadd.f32 %v1675, %v1678
  %v1680 = vrcp.pop %v1679
  %v1681 = vmul.f32 %v1675, %v1680
  %v1682 = vlaneseq
  %v1683 = vshrl.u32 %v1682, 7
  %v1684 = vsub.s32 0, %v1683
  %v1685 = vrot.slane %v1681, %v1684
  %v1686 = vmul.f32 %v1685, %v1017
  %v1687 = vmul.f32 %v1685, %v1020
  %v1688 = vmul.f32 %v1685, %v1025
  %v1689 = vmul.f32 %v1685, %v1028
  %v1690 = vmul.f32 %v1685, %v1033
  %v1691 = vmul.f32 %v1685, %v1036
  %v1692 = vmul.f32 %v1685, %v1041
  %v1693 = vmul.f32 %v1685, %v1044
  %v1694 = vmul.f32 %v1678, %v1680
  %v1695 = vlaneseq
  %v1696 = vshrl.u32 %v1695, 7
  %v1697 = vsub.s32 0, %v1696
  %v1698 = vrot.slane %v1694, %v1697
  %v1699 = vmul.f32 %v1698, %v1124
  %v1700 = vmul.f32 %v1698, %v1127
  %v1701 = vmul.f32 %v1698, %v1132
  %v1702 = vmul.f32 %v1698, %v1135
  %v1703 = vmul.f32 %v1698, %v1140
  %v1704 = vmul.f32 %v1698, %v1143
  %v1705 = vmul.f32 %v1698, %v1148
  %v1706 = vmul.f32 %v1698, %v1151
  %v1707 = vadd.f32 %v1686, %v1699
  %v1708 = vadd.f32 %v1687, %v1700
  %v1709 = vadd.f32 %v1688, %v1701
  %v1710 = vadd.f32 %v1689, %v1702
  %v1711 = vadd.f32 %v1690, %v1703
  %v1712 = vadd.f32 %v1691, %v1704
  %v1713 = vadd.f32 %v1692, %v1705
  %v1714 = vadd.f32 %v1693, %v1706
  %1723 = vrot.lane.b32.xlu0 %v1707, 64
  %v1724 = vpop.permute.xlu0 %1723
  %1725 = vrot.lane.b32.xlu0 %v1708, 64
  %v1726 = vpop.permute.xlu0 %1725
  %1727 = vrot.lane.b32.xlu0 %v1709, 64
  %v1728 = vpop.permute.xlu0 %1727
  %1729 = vrot.lane.b32.xlu0 %v1710, 64
  %v1730 = vpop.permute.xlu0 %1729
  %1731 = vrot.lane.b32.xlu0 %v1711, 64
  %v1732 = vpop.permute.xlu0 %1731
  %1733 = vrot.lane.b32.xlu0 %v1712, 64
  %v1734 = vpop.permute.xlu0 %1733
  %1735 = vrot.lane.b32.xlu0 %v1713, 64
  %v1736 = vpop.permute.xlu0 %1735
  %1737 = vrot.lane.b32.xlu0 %v1714, 64
  %v1738 = vpop.permute.xlu0 %1737
  %v1747 = vsel %vm486, %v1427, %v1724
  %v1748 = vsel %vm486, %v1428, %v1726
  %v1749 = vsel %vm486, %v1429, %v1728
  %v1750 = vsel %vm486, %v1430, %v1730
  %v1751 = vsel %vm486, %v1431, %v1732
  %v1752 = vsel %vm486, %v1432, %v1734
  %v1753 = vsel %vm486, %v1433, %v1736
  %v1754 = vsel %vm486, %v1434, %v1738
  %1755 = vst [vmem:[%s18] sm:$0xff] %v1747
  %1756 = vst [vmem:[%s18 + $0x8] sm:$0xff] %v1748
  %1757 = vst [vmem:[%s18 + $0x10] sm:$0xff] %v1749
  %1758 = vst [vmem:[%s18 + $0x18] sm:$0xff] %v1750
  %1759 = vst [vmem:[%s18 + $0x20] sm:$0xff] %v1751
  %1760 = vst [vmem:[%s18 + $0x28] sm:$0xff] %v1752
  %1761 = vst [vmem:[%s18 + $0x30] sm:$0xff] %v1753
  %1762 = vst [vmem:[%s18 + $0x38] sm:$0xff] %v1754
  // Predicated region
  $region74: #{heco_forward.2} parent=0 // pred_check
    _
  $region75: #{heco_forward.2} parent=0 // pred_check_branch
    %1764 = sbr.rel (0) target = $region77
  $region76: #{heco_forward.2} parent=0 // pred_region
    _
  $region77: #{heco_forward.2} parent=0 // pred_fallthru
    _
  // Predicated region
  $region78: #{heco_forward.2} parent=0 // pred_check
    _
  $region79: #{heco_forward.2} parent=0 // pred_check_branch
    %1766 = sbr.rel (0) target = $region81
  $region80: #{heco_forward.2} parent=0 // pred_region
    _
  $region81: #{heco_forward.2} parent=0 // pred_fallthru
    _

</llo_original>
